<compile_context>
chip_gen: v7x
topology: tpu7x:2x2x1
jax: 0.10.0
libtpu: 0.0.40
codegen_flags: <defaults>
</compile_context>

<pallas_src>
import functools

import jax
import jax.numpy as jnp
from jax.experimental import pallas as pl
from jax.experimental.pallas import tpu as pltpu


# ---------------------------------------------------------------------------
# Helpers
# ---------------------------------------------------------------------------
def _round_up(x, m):
    return ((x + m - 1) // m) * m


def _pad2(x, rows, cols):
    r, c = x.shape
    if r == rows and c == cols:
        return x
    return jnp.pad(x, ((0, rows - r), (0, cols - c)))


def _tiles(M, K, N):
    """Pick (tm, tn, tk). Modest caps keep double-buffered working set well
    under the v7x 64 MiB VMEM while still amortizing grid-step overhead."""
    tm = 256 if M > 256 else _round_up(M, 16)
    n128 = _round_up(N, 128)
    tn = 256 if n128 > 256 else n128
    k128 = _round_up(K, 128)
    tk = 512 if k128 > 512 else k128
    return tm, tn, tk


# ---------------------------------------------------------------------------
# Pallas kernels: tiled GEMM with fused activation epilogue
# ---------------------------------------------------------------------------
def _accumulate(a_ref, w_ref, acc_ref):
    @pl.when(pl.program_id(2) == 0)
    def _():
        acc_ref[...] = jnp.zeros_like(acc_ref)

    acc_ref[...] += jnp.dot(a_ref[...], w_ref[...],
                            preferred_element_type=jnp.float32)


def _matmul_act_kernel(a_ref, w_ref, o_ref, acc_ref, *, act):
    _accumulate(a_ref, w_ref, acc_ref)

    @pl.when(pl.program_id(2) == pl.num_programs(2) - 1)
    def _():
        acc = acc_ref[...]
        if act == "leaky":
            acc = jnp.where(acc >= 0.0, acc, 0.2 * acc)   # LeakyReLU(0.2)
        elif act == "sigmoid":
            acc = 1.0 / (1.0 + jnp.exp(-acc))
        o_ref[...] = acc.astype(o_ref.dtype)


def _matmul_pre_sigmoid_kernel(a_ref, w_ref, pre_ref, sig_ref, acc_ref):
    """Final layer: emit both the pre-activation (conv5) and sigmoid(conv5)."""
    _accumulate(a_ref, w_ref, acc_ref)

    @pl.when(pl.program_id(2) == pl.num_programs(2) - 1)
    def _():
        acc = acc_ref[...]
        pre_ref[...] = acc.astype(pre_ref.dtype)
        sig_ref[...] = (1.0 / (1.0 + jnp.exp(-acc))).astype(sig_ref.dtype)


def matmul_act(a, w, act="none", *, fused_sigmoid_pair=False):
    """(M,K) @ (K,N) -> f32, tiled/pipelined, bf16 MXU inputs, fused epilogue."""
    M, K = a.shape
    K2, N = w.shape
    assert K == K2, (a.shape, w.shape)

    tm, tn, tk = _tiles(M, K, N)
    Mp, Kp, Np = _round_up(M, tm), _round_up(K, tk), _round_up(N, tn)

    a_p = _pad2(a.astype(jnp.bfloat16), Mp, Kp)
    w_p = _pad2(w.astype(jnp.bfloat16), Kp, Np)

    grid = (Mp // tm, Np // tn, Kp // tk)
    in_specs = [
        pl.BlockSpec((tm, tk), lambda i, j, k: (i, k)),
        pl.BlockSpec((tk, tn), lambda i, j, k: (k, j)),
    ]
    out_spec = pl.BlockSpec((tm, tn), lambda i, j, k: (i, j))
    scratch = [pltpu.VMEM((tm, tn), jnp.float32)]
    cparams = pltpu.CompilerParams(
        dimension_semantics=("parallel", "parallel", "arbitrary"))

    if fused_sigmoid_pair:
        pre, sig = pl.pallas_call(
            _matmul_pre_sigmoid_kernel,
            out_shape=(jax.ShapeDtypeStruct((Mp, Np), jnp.float32),
                       jax.ShapeDtypeStruct((Mp, Np), jnp.float32)),
            grid=grid,
            in_specs=in_specs,
            out_specs=(out_spec, out_spec),
            scratch_shapes=scratch,
            compiler_params=cparams,
        )(a_p, w_p)
        return pre[:M, :N], sig[:M, :N]

    out = pl.pallas_call(
        functools.partial(_matmul_act_kernel, act=act),
        out_shape=jax.ShapeDtypeStruct((Mp, Np), jnp.float32),
        grid=grid,
        in_specs=in_specs,
        out_specs=out_spec,
        scratch_shapes=scratch,
        compiler_params=cparams,
    )(a_p, w_p)
    return out[:M, :N]


# ---------------------------------------------------------------------------
# Glue: im2col, conv wrappers, spectral norm, parameter init (plain JAX)
# ---------------------------------------------------------------------------
def _im2col(x, ksize, stride, pad):
    """x: (N,H,W,C) -> patches (N,Ho,Wo,K*K*C) with element order (kh,kw,cin)."""
    N, H, W, C = x.shape
    xp = jnp.pad(x, ((0, 0), (pad, pad), (pad, pad), (0, 0)))
    Ho = (H + 2 * pad - ksize) // stride + 1
    Wo = (W + 2 * pad - ksize) // stride + 1
    cols = []
    for kh in range(ksize):
        for kw in range(ksize):
            cols.append(
                xp[:, kh:kh + stride * (Ho - 1) + 1:stride,
                       kw:kw + stride * (Wo - 1) + 1:stride, :]
            )
    patches = jnp.stack(cols, axis=3)               # (N,Ho,Wo,K*K,C)
    return patches.reshape(N, Ho, Wo, ksize * ksize * C), Ho, Wo


def conv2d_pallas(x_nhwc, w_mat, stride, act):
    """w_mat: pre-laid-out (16*Cin, Cout) bf16 weight matrix."""
    K, Cout = w_mat.shape
    Cin = K // 16
    assert x_nhwc.shape[-1] == Cin
    patches, Ho, Wo = _im2col(x_nhwc.astype(jnp.bfloat16), 4, stride, 1)
    B = x_nhwc.shape[0]
    a = patches.reshape(B * Ho * Wo, K)
    out = matmul_act(a, w_mat, act)                 # f32 (B*Ho*Wo, Cout)
    return out.reshape(B, Ho, Wo, Cout)


def conv2d_final_sigmoid(x_nhwc, w_mat, stride):
    """Final conv: returns (conv5, sigmoid(conv5)) from a single fused GEMM."""
    K, Cout = w_mat.shape
    Cin = K // 16
    assert x_nhwc.shape[-1] == Cin
    patches, Ho, Wo = _im2col(x_nhwc.astype(jnp.bfloat16), 4, stride, 1)
    B = x_nhwc.shape[0]
    a = patches.reshape(B * Ho * Wo, K)
    pre, sig = matmul_act(a, w_mat, fused_sigmoid_pair=True)
    return pre.reshape(B, Ho, Wo, Cout), sig.reshape(B, Ho, Wo, Cout)


def spectral_normalize(w_oihw, key, n_iter=1, eps=1e-12):
    """One-power-iteration spectral norm (deterministic u), like torch SN."""
    cout = w_oihw.shape[0]
    wm = w_oihw.reshape(cout, -1)
    u = jax.random.normal(key, (cout,), dtype=jnp.float32)
    u = u / (jnp.linalg.norm(u) + eps)
    v = None
    for _ in range(n_iter):
        v = wm.T @ u
        v = v / (jnp.linalg.norm(v) + eps)
        u = wm @ v
        u = u / (jnp.linalg.norm(u) + eps)
    sigma = u @ (wm @ v)
    return w_oihw / sigma


def init_discriminator_params(key, in_channels, gain=0.001):
    """normal(0, gain) init then spectral norm. Returns:
       - params: dict of pre-laid-out (16*Cin, Cout) bf16 GEMM weights,
       - params_oihw: dict of the f32 OIHW weights (for the reference check)."""
    shapes = [
        (64, in_channels, 4, 4),
        (128, 64, 4, 4),
        (256, 128, 4, 4),
        (512, 256, 4, 4),
        (1, 512, 4, 4),
    ]
    params, params_oihw = {}, {}
    keys = jax.random.split(key, 2 * len(shapes))
    for i, shp in enumerate(shapes):
        cout, cin, kh, kw = shp
        w = gain * jax.random.normal(keys[2 * i], shp, dtype=jnp.float32)
        w = spectral_normalize(w, keys[2 * i + 1])
        params_oihw[f"w{i + 1}"] = w
        # OIHW -> (kh, kw, cin, cout) -> (kh*kw*cin, cout), pre-cast to bf16.
        wm = jnp.transpose(w, (2, 3, 1, 0)).reshape(kh * kw * cin, cout)
        params[f"w{i + 1}"] = wm.astype(jnp.bfloat16)
    return params, params_oihw


# ---------------------------------------------------------------------------
# Discriminator forward (matches PyTorch module semantics)
# ---------------------------------------------------------------------------
def discriminator_forward(x_nchw, params, use_sigmoid=True):
    x = jnp.transpose(x_nchw, (0, 2, 3, 1))              # NCHW -> NHWC
    c1 = conv2d_pallas(x,  params["w1"], stride=2, act="leaky")
    c2 = conv2d_pallas(c1, params["w2"], stride=2, act="leaky")
    c3 = conv2d_pallas(c2, params["w3"], stride=2, act="leaky")
    c4 = conv2d_pallas(c3, params["w4"], stride=1, act="leaky")
    if use_sigmoid:
        c5, out = conv2d_final_sigmoid(c4, params["w5"], stride=1)
    else:
        c5 = conv2d_pallas(c4, params["w5"], stride=1, act="none")
        out = c5
    nchw = lambda t: jnp.transpose(t, (0, 3, 1, 2))       # NHWC -> NCHW
    return nchw(out), [nchw(c1), nchw(c2), nchw(c3), nchw(c4), nchw(c5)]


# ---------------------------------------------------------------------------
# Pure-JAX reference (lax.conv with the same bf16 operand precision)
# ---------------------------------------------------------------------------
def _ref_conv(x, w, stride, pad):
    return jax.lax.conv_general_dilated(
        x.astype(jnp.bfloat16), w.astype(jnp.bfloat16),
        (stride, stride), ((pad, pad), (pad, pad)),
        dimension_numbers=("NCHW", "OIHW", "NCHW"),
        preferred_element_type=jnp.float32)


def reference_forward(x, params_oihw, use_sigmoid=True):
    lrelu = lambda t: jnp.where(t >= 0.0, t, 0.2 * t)
    c1 = lrelu(_ref_conv(x,  params_oihw["w1"], 2, 1))
    c2 = lrelu(_ref_conv(c1, params_oihw["w2"], 2, 1))
    c3 = lrelu(_ref_conv(c2, params_oihw["w3"], 2, 1))
    c4 = lrelu(_ref_conv(c3, params_oihw["w4"], 1, 1))
    c5 = _ref_conv(c4, params_oihw["w5"], 1, 1)
    out = jax.nn.sigmoid(c5) if use_sigmoid else c5
    return out, [c1, c2, c3, c4, c5]


# ---------------------------------------------------------------------------
if __name__ == "__main__":
    key = jax.random.PRNGKey(0)
    k_param, k_x = jax.random.split(key)

    in_channels = 4
    # spatial must be >= 24 so conv5 still has a valid output; use 32.
    x = jax.random.normal(k_x, (2, in_channels, 32, 32), dtype=jnp.float32)
    params, params_oihw = init_discriminator_params(k_param, in_channels)

    fwd = jax.jit(functools.partial(discriminator_forward, use_sigmoid=True))
    out, feats = fwd(x, params)
    jax.block_until_ready(out)
    jax.block_until_ready(feats)

    # sanity check against a pure-JAX reference (same bf16 operand precision)
    ref_out, ref_feats = reference_forward(x, params_oihw, use_sigmoid=True)
    assert out.shape == ref_out.shape == (2, 1, 2, 2)
    ok = bool(jnp.allclose(out, ref_out, atol=2e-2, rtol=2e-2))
    for a, b in zip(feats, ref_feats):
        assert a.shape == b.shape
        ok &= bool(jnp.allclose(a, b, atol=2e-2, rtol=2e-2))
    assert ok, "Pallas output mismatch vs lax.conv reference"

    print("KERNEL_OK")
</pallas_src>

<mosaic_0001>
module attributes {stable_mosaic.version = 11 : i64} {
  func.func @_matmul_act_kernel(%arg0: i32, %arg1: i32, %arg2: i32, %arg3: memref<256x128xbf16, #tpu.memory_space<vmem>>, %arg4: memref<128x128xbf16, #tpu.memory_space<vmem>>, %arg5: memref<256x128xf32, #tpu.memory_space<vmem>>, %arg6: memref<256x128xf32, #tpu.memory_space<vmem>>) attributes {dimension_semantics = [#tpu.dimension_semantics<parallel>, #tpu.dimension_semantics<parallel>, #tpu.dimension_semantics<arbitrary>], iteration_bounds = array<i64: 2, 1, 1>, scalar_prefetch = 0 : i64, scratch_operands = 1 : i64, tpu.core_type = #tpu.core_type<tc>, window_params = [{transform_indices = @transform_0, window_bounds = array<i64: 256, 128>}, {transform_indices = @transform_1, window_bounds = array<i64: 128, 128>}, {transform_indices = @transform_2, window_bounds = array<i64: 256, 128>}]} {
    %c0_i32 = arith.constant 0 : i32
    %0 = arith.cmpi eq, %arg2, %c0_i32 : i32
    %1 = arith.extui %0 : i1 to i32
    %c0_i32_0 = arith.constant 0 : i32
    %2 = arith.cmpi ne, %1, %c0_i32_0 : i32
    scf.if %2 {
      %cst_10 = arith.constant 0.000000e+00 : f32
      %12 = vector.broadcast %cst_10 : f32 to vector<256x128xf32>
      %c0_11 = arith.constant 0 : index
      %c0_12 = arith.constant 0 : index
      %13 = vector.load %arg6[%c0_11, %c0_12] : memref<256x128xf32, #tpu.memory_space<vmem>>, vector<256x128xf32>
      tpu.vector_store %arg6[%c0_11, %c0_12], %12 {strides = array<i32>} : memref<256x128xf32, #tpu.memory_space<vmem>>, vector<256x128xf32>,
    } else {
    }
    %c0 = arith.constant 0 : index
    %c0_1 = arith.constant 0 : index
    %3 = vector.load %arg6[%c0, %c0_1] : memref<256x128xf32, #tpu.memory_space<vmem>>, vector<256x128xf32>
    %c0_2 = arith.constant 0 : index
    %c0_3 = arith.constant 0 : index
    %4 = vector.load %arg3[%c0_2, %c0_3] : memref<256x128xbf16, #tpu.memory_space<vmem>>, vector<256x128xbf16>
    %c0_4 = arith.constant 0 : index
    %c0_5 = arith.constant 0 : index
    %5 = vector.load %arg4[%c0_4, %c0_5] : memref<128x128xbf16, #tpu.memory_space<vmem>>, vector<128x128xbf16>
    %cst = arith.constant dense<0.000000e+00> : vector<256x128xf32>
    %6 = tpu.matmul %4, %5, %cst {dimension_numbers = #tpu.dot_dimension_numbers<[1], [0], [0], [1], [0, 0, 1, 1], [], []>} : vector<256x128xbf16>, vector<128x128xbf16>, vector<256x128xf32> -> vector<256x128xf32>
    %7 = arith.addf %3, %6 : vector<256x128xf32>
    %c0_6 = arith.constant 0 : index
    %c0_7 = arith.constant 0 : index
    %8 = vector.load %arg6[%c0_6, %c0_7] : memref<256x128xf32, #tpu.memory_space<vmem>>, vector<256x128xf32>
    tpu.vector_store %arg6[%c0_6, %c0_7], %7 {strides = array<i32>} : memref<256x128xf32, #tpu.memory_space<vmem>>, vector<256x128xf32>,
    %c0_i32_8 = arith.constant 0 : i32
    %9 = arith.cmpi eq, %arg2, %c0_i32_8 : i32
    %10 = arith.extui %9 : i1 to i32
    %c0_i32_9 = arith.constant 0 : i32
    %11 = arith.cmpi ne, %10, %c0_i32_9 : i32
    scf.if %11 {
      %c0_10 = arith.constant 0 : index
      %c0_11 = arith.constant 0 : index
      %12 = vector.load %arg6[%c0_10, %c0_11] : memref<256x128xf32, #tpu.memory_space<vmem>>, vector<256x128xf32>
      %cst_12 = arith.constant 0.000000e+00 : f32
      %13 = vector.broadcast %cst_12 : f32 to vector<256x128xf32>
      %14 = arith.cmpf oge, %12, %13 : vector<256x128xf32>
      %cst_13 = arith.constant 2.000000e-01 : f32
      %15 = vector.broadcast %cst_13 : f32 to vector<256x128xf32>
      %16 = arith.mulf %15, %12 : vector<256x128xf32>
      %17 = arith.select %14, %12, %16 : vector<256x128xi1>, vector<256x128xf32>
      %c0_14 = arith.constant 0 : index
      %c0_15 = arith.constant 0 : index
      %18 = vector.load %arg5[%c0_14, %c0_15] : memref<256x128xf32, #tpu.memory_space<vmem>>, vector<256x128xf32>
      tpu.vector_store %arg5[%c0_14, %c0_15], %17 {strides = array<i32>} : memref<256x128xf32, #tpu.memory_space<vmem>>, vector<256x128xf32>,
    } else {
    }
    return
  }
  func.func @transform_0(%arg0: i32, %arg1: i32, %arg2: i32) -> (i32, i32) {
    %c0_i32 = arith.constant 0 : i32
    return %arg0, %arg2 : i32, i32
  }
  func.func @transform_1(%arg0: i32, %arg1: i32, %arg2: i32) -> (i32, i32) {
    %c0_i32 = arith.constant 0 : i32
    return %arg2, %arg1 : i32, i32
  }
  func.func @transform_2(%arg0: i32, %arg1: i32, %arg2: i32) -> (i32, i32) {
    %c0_i32 = arith.constant 0 : i32
    return %arg0, %arg1 : i32, i32
  }
}

module attributes {stable_mosaic.version = 11 : i64} {
  func.func @_matmul_act_kernel(%arg0: i32, %arg1: i32, %arg2: i32, %arg3: memref<128x512xbf16, #tpu.memory_space<vmem>>, %arg4: memref<512x128xbf16, #tpu.memory_space<vmem>>, %arg5: memref<128x128xf32, #tpu.memory_space<vmem>>, %arg6: memref<128x128xf32, #tpu.memory_space<vmem>>) attributes {dimension_semantics = [#tpu.dimension_semantics<parallel>, #tpu.dimension_semantics<parallel>, #tpu.dimension_semantics<arbitrary>], iteration_bounds = array<i64: 1, 1, 2>, scalar_prefetch = 0 : i64, scratch_operands = 1 : i64, tpu.core_type = #tpu.core_type<tc>, window_params = [{transform_indices = @transform_0, window_bounds = array<i64: 128, 512>}, {transform_indices = @transform_1, window_bounds = array<i64: 512, 128>}, {transform_indices = @transform_2, window_bounds = array<i64: 128, 128>}]} {
    %c0_i32 = arith.constant 0 : i32
    %0 = arith.cmpi eq, %arg2, %c0_i32 : i32
    %1 = arith.extui %0 : i1 to i32
    %c0_i32_0 = arith.constant 0 : i32
    %2 = arith.cmpi ne, %1, %c0_i32_0 : i32
    scf.if %2 {
      %cst_9 = arith.constant 0.000000e+00 : f32
      %12 = vector.broadcast %cst_9 : f32 to vector<128x128xf32>
      %c0_10 = arith.constant 0 : index
      %c0_11 = arith.constant 0 : index
      %13 = vector.load %arg6[%c0_10, %c0_11] : memref<128x128xf32, #tpu.memory_space<vmem>>, vector<128x128xf32>
      tpu.vector_store %arg6[%c0_10, %c0_11], %12 {strides = array<i32>} : memref<128x128xf32, #tpu.memory_space<vmem>>, vector<128x128xf32>,
    } else {
    }
    %c0 = arith.constant 0 : index
    %c0_1 = arith.constant 0 : index
    %3 = vector.load %arg6[%c0, %c0_1] : memref<128x128xf32, #tpu.memory_space<vmem>>, vector<128x128xf32>
    %c0_2 = arith.constant 0 : index
    %c0_3 = arith.constant 0 : index
    %4 = vector.load %arg3[%c0_2, %c0_3] : memref<128x512xbf16, #tpu.memory_space<vmem>>, vector<128x512xbf16>
    %c0_4 = arith.constant 0 : index
    %c0_5 = arith.constant 0 : index
    %5 = vector.load %arg4[%c0_4, %c0_5] : memref<512x128xbf16, #tpu.memory_space<vmem>>, vector<512x128xbf16>
    %cst = arith.constant dense<0.000000e+00> : vector<128x128xf32>
    %6 = tpu.matmul %4, %5, %cst {dimension_numbers = #tpu.dot_dimension_numbers<[1], [0], [0], [1], [0, 0, 1, 1], [], []>} : vector<128x512xbf16>, vector<512x128xbf16>, vector<128x128xf32> -> vector<128x128xf32>
    %7 = arith.addf %3, %6 : vector<128x128xf32>
    %c0_6 = arith.constant 0 : index
    %c0_7 = arith.constant 0 : index
    %8 = vector.load %arg6[%c0_6, %c0_7] : memref<128x128xf32, #tpu.memory_space<vmem>>, vector<128x128xf32>
    tpu.vector_store %arg6[%c0_6, %c0_7], %7 {strides = array<i32>} : memref<128x128xf32, #tpu.memory_space<vmem>>, vector<128x128xf32>,
    %c1_i32 = arith.constant 1 : i32
    %9 = arith.cmpi eq, %arg2, %c1_i32 : i32
    %10 = arith.extui %9 : i1 to i32
    %c0_i32_8 = arith.constant 0 : i32
    %11 = arith.cmpi ne, %10, %c0_i32_8 : i32
    scf.if %11 {
      %c0_9 = arith.constant 0 : index
      %c0_10 = arith.constant 0 : index
      %12 = vector.load %arg6[%c0_9, %c0_10] : memref<128x128xf32, #tpu.memory_space<vmem>>, vector<128x128xf32>
      %cst_11 = arith.constant 0.000000e+00 : f32
      %13 = vector.broadcast %cst_11 : f32 to vector<128x128xf32>
      %14 = arith.cmpf oge, %12, %13 : vector<128x128xf32>
      %cst_12 = arith.constant 2.000000e-01 : f32
      %15 = vector.broadcast %cst_12 : f32 to vector<128x128xf32>
      %16 = arith.mulf %15, %12 : vector<128x128xf32>
      %17 = arith.select %14, %12, %16 : vector<128x128xi1>, vector<128x128xf32>
      %c0_13 = arith.constant 0 : index
      %c0_14 = arith.constant 0 : index
      %18 = vector.load %arg5[%c0_13, %c0_14] : memref<128x128xf32, #tpu.memory_space<vmem>>, vector<128x128xf32>
      tpu.vector_store %arg5[%c0_13, %c0_14], %17 {strides = array<i32>} : memref<128x128xf32, #tpu.memory_space<vmem>>, vector<128x128xf32>,
    } else {
    }
    return
  }
  func.func @transform_0(%arg0: i32, %arg1: i32, %arg2: i32) -> (i32, i32) {
    %c0_i32 = arith.constant 0 : i32
    return %arg0, %arg2 : i32, i32
  }
  func.func @transform_1(%arg0: i32, %arg1: i32, %arg2: i32) -> (i32, i32) {
    %c0_i32 = arith.constant 0 : i32
    return %arg2, %arg1 : i32, i32
  }
  func.func @transform_2(%arg0: i32, %arg1: i32, %arg2: i32) -> (i32, i32) {
    %c0_i32 = arith.constant 0 : i32
    return %arg0, %arg1 : i32, i32
  }
}

module attributes {stable_mosaic.version = 11 : i64} {
  func.func @_matmul_act_kernel(%arg0: i32, %arg1: i32, %arg2: i32, %arg3: memref<32x512xbf16, #tpu.memory_space<vmem>>, %arg4: memref<512x256xbf16, #tpu.memory_space<vmem>>, %arg5: memref<32x256xf32, #tpu.memory_space<vmem>>, %arg6: memref<32x256xf32, #tpu.memory_space<vmem>>) attributes {dimension_semantics = [#tpu.dimension_semantics<parallel>, #tpu.dimension_semantics<parallel>, #tpu.dimension_semantics<arbitrary>], iteration_bounds = array<i64: 1, 1, 4>, scalar_prefetch = 0 : i64, scratch_operands = 1 : i64, tpu.core_type = #tpu.core_type<tc>, window_params = [{transform_indices = @transform_0, window_bounds = array<i64: 32, 512>}, {transform_indices = @transform_1, window_bounds = array<i64: 512, 256>}, {transform_indices = @transform_2, window_bounds = array<i64: 32, 256>}]} {
    %c0_i32 = arith.constant 0 : i32
    %0 = arith.cmpi eq, %arg2, %c0_i32 : i32
    %1 = arith.extui %0 : i1 to i32
    %c0_i32_0 = arith.constant 0 : i32
    %2 = arith.cmpi ne, %1, %c0_i32_0 : i32
    scf.if %2 {
      %cst_9 = arith.constant 0.000000e+00 : f32
      %12 = vector.broadcast %cst_9 : f32 to vector<32x256xf32>
      %c0_10 = arith.constant 0 : index
      %c0_11 = arith.constant 0 : index
      %13 = vector.load %arg6[%c0_10, %c0_11] : memref<32x256xf32, #tpu.memory_space<vmem>>, vector<32x256xf32>
      tpu.vector_store %arg6[%c0_10, %c0_11], %12 {strides = array<i32>} : memref<32x256xf32, #tpu.memory_space<vmem>>, vector<32x256xf32>,
    } else {
    }
    %c0 = arith.constant 0 : index
    %c0_1 = arith.constant 0 : index
    %3 = vector.load %arg6[%c0, %c0_1] : memref<32x256xf32, #tpu.memory_space<vmem>>, vector<32x256xf32>
    %c0_2 = arith.constant 0 : index
    %c0_3 = arith.constant 0 : index
    %4 = vector.load %arg3[%c0_2, %c0_3] : memref<32x512xbf16, #tpu.memory_space<vmem>>, vector<32x512xbf16>
    %c0_4 = arith.constant 0 : index
    %c0_5 = arith.constant 0 : index
    %5 = vector.load %arg4[%c0_4, %c0_5] : memref<512x256xbf16, #tpu.memory_space<vmem>>, vector<512x256xbf16>
    %cst = arith.constant dense<0.000000e+00> : vector<32x256xf32>
    %6 = tpu.matmul %4, %5, %cst {dimension_numbers = #tpu.dot_dimension_numbers<[1], [0], [0], [1], [0, 0, 1, 1], [], []>} : vector<32x512xbf16>, vector<512x256xbf16>, vector<32x256xf32> -> vector<32x256xf32>
    %7 = arith.addf %3, %6 : vector<32x256xf32>
    %c0_6 = arith.constant 0 : index
    %c0_7 = arith.constant 0 : index
    %8 = vector.load %arg6[%c0_6, %c0_7] : memref<32x256xf32, #tpu.memory_space<vmem>>, vector<32x256xf32>
    tpu.vector_store %arg6[%c0_6, %c0_7], %7 {strides = array<i32>} : memref<32x256xf32, #tpu.memory_space<vmem>>, vector<32x256xf32>,
    %c3_i32 = arith.constant 3 : i32
    %9 = arith.cmpi eq, %arg2, %c3_i32 : i32
    %10 = arith.extui %9 : i1 to i32
    %c0_i32_8 = arith.constant 0 : i32
    %11 = arith.cmpi ne, %10, %c0_i32_8 : i32
    scf.if %11 {
      %c0_9 = arith.constant 0 : index
      %c0_10 = arith.constant 0 : index
      %12 = vector.load %arg6[%c0_9, %c0_10] : memref<32x256xf32, #tpu.memory_space<vmem>>, vector<32x256xf32>
      %cst_11 = arith.constant 0.000000e+00 : f32
      %13 = vector.broadcast %cst_11 : f32 to vector<32x256xf32>
      %14 = arith.cmpf oge, %12, %13 : vector<32x256xf32>
      %cst_12 = arith.constant 2.000000e-01 : f32
      %15 = vector.broadcast %cst_12 : f32 to vector<32x256xf32>
      %16 = arith.mulf %15, %12 : vector<32x256xf32>
      %17 = arith.select %14, %12, %16 : vector<32x256xi1>, vector<32x256xf32>
      %c0_13 = arith.constant 0 : index
      %c0_14 = arith.constant 0 : index
      %18 = vector.load %arg5[%c0_13, %c0_14] : memref<32x256xf32, #tpu.memory_space<vmem>>, vector<32x256xf32>
      tpu.vector_store %arg5[%c0_13, %c0_14], %17 {strides = array<i32>} : memref<32x256xf32, #tpu.memory_space<vmem>>, vector<32x256xf32>,
    } else {
    }
    return
  }
  func.func @transform_0(%arg0: i32, %arg1: i32, %arg2: i32) -> (i32, i32) {
    %c0_i32 = arith.constant 0 : i32
    return %arg0, %arg2 : i32, i32
  }
  func.func @transform_1(%arg0: i32, %arg1: i32, %arg2: i32) -> (i32, i32) {
    %c0_i32 = arith.constant 0 : i32
    return %arg2, %arg1 : i32, i32
  }
  func.func @transform_2(%arg0: i32, %arg1: i32, %arg2: i32) -> (i32, i32) {
    %c0_i32 = arith.constant 0 : i32
    return %arg0, %arg1 : i32, i32
  }
}

module attributes {stable_mosaic.version = 11 : i64} {
  func.func @_matmul_act_kernel(%arg0: i32, %arg1: i32, %arg2: i32, %arg3: memref<32x512xbf16, #tpu.memory_space<vmem>>, %arg4: memref<512x256xbf16, #tpu.memory_space<vmem>>, %arg5: memref<32x256xf32, #tpu.memory_space<vmem>>, %arg6: memref<32x256xf32, #tpu.memory_space<vmem>>) attributes {dimension_semantics = [#tpu.dimension_semantics<parallel>, #tpu.dimension_semantics<parallel>, #tpu.dimension_semantics<arbitrary>], iteration_bounds = array<i64: 1, 2, 8>, scalar_prefetch = 0 : i64, scratch_operands = 1 : i64, tpu.core_type = #tpu.core_type<tc>, window_params = [{transform_indices = @transform_0, window_bounds = array<i64: 32, 512>}, {transform_indices = @transform_1, window_bounds = array<i64: 512, 256>}, {transform_indices = @transform_2, window_bounds = array<i64: 32, 256>}]} {
    %c0_i32 = arith.constant 0 : i32
    %0 = arith.cmpi eq, %arg2, %c0_i32 : i32
    %1 = arith.extui %0 : i1 to i32
    %c0_i32_0 = arith.constant 0 : i32
    %2 = arith.cmpi ne, %1, %c0_i32_0 : i32
    scf.if %2 {
      %cst_9 = arith.constant 0.000000e+00 : f32
      %12 = vector.broadcast %cst_9 : f32 to vector<32x256xf32>
      %c0_10 = arith.constant 0 : index
      %c0_11 = arith.constant 0 : index
      %13 = vector.load %arg6[%c0_10, %c0_11] : memref<32x256xf32, #tpu.memory_space<vmem>>, vector<32x256xf32>
      tpu.vector_store %arg6[%c0_10, %c0_11], %12 {strides = array<i32>} : memref<32x256xf32, #tpu.memory_space<vmem>>, vector<32x256xf32>,
    } else {
    }
    %c0 = arith.constant 0 : index
    %c0_1 = arith.constant 0 : index
    %3 = vector.load %arg6[%c0, %c0_1] : memref<32x256xf32, #tpu.memory_space<vmem>>, vector<32x256xf32>
    %c0_2 = arith.constant 0 : index
    %c0_3 = arith.constant 0 : index
    %4 = vector.load %arg3[%c0_2, %c0_3] : memref<32x512xbf16, #tpu.memory_space<vmem>>, vector<32x512xbf16>
    %c0_4 = arith.constant 0 : index
    %c0_5 = arith.constant 0 : index
    %5 = vector.load %arg4[%c0_4, %c0_5] : memref<512x256xbf16, #tpu.memory_space<vmem>>, vector<512x256xbf16>
    %cst = arith.constant dense<0.000000e+00> : vector<32x256xf32>
    %6 = tpu.matmul %4, %5, %cst {dimension_numbers = #tpu.dot_dimension_numbers<[1], [0], [0], [1], [0, 0, 1, 1], [], []>} : vector<32x512xbf16>, vector<512x256xbf16>, vector<32x256xf32> -> vector<32x256xf32>
    %7 = arith.addf %3, %6 : vector<32x256xf32>
    %c0_6 = arith.constant 0 : index
    %c0_7 = arith.constant 0 : index
    %8 = vector.load %arg6[%c0_6, %c0_7] : memref<32x256xf32, #tpu.memory_space<vmem>>, vector<32x256xf32>
    tpu.vector_store %arg6[%c0_6, %c0_7], %7 {strides = array<i32>} : memref<32x256xf32, #tpu.memory_space<vmem>>, vector<32x256xf32>,
    %c7_i32 = arith.constant 7 : i32
    %9 = arith.cmpi eq, %arg2, %c7_i32 : i32
    %10 = arith.extui %9 : i1 to i32
    %c0_i32_8 = arith.constant 0 : i32
    %11 = arith.cmpi ne, %10, %c0_i32_8 : i32
    scf.if %11 {
      %c0_9 = arith.constant 0 : index
      %c0_10 = arith.constant 0 : index
      %12 = vector.load %arg6[%c0_9, %c0_10] : memref<32x256xf32, #tpu.memory_space<vmem>>, vector<32x256xf32>
      %cst_11 = arith.constant 0.000000e+00 : f32
      %13 = vector.broadcast %cst_11 : f32 to vector<32x256xf32>
      %14 = arith.cmpf oge, %12, %13 : vector<32x256xf32>
      %cst_12 = arith.constant 2.000000e-01 : f32
      %15 = vector.broadcast %cst_12 : f32 to vector<32x256xf32>
      %16 = arith.mulf %15, %12 : vector<32x256xf32>
      %17 = arith.select %14, %12, %16 : vector<32x256xi1>, vector<32x256xf32>
      %c0_13 = arith.constant 0 : index
      %c0_14 = arith.constant 0 : index
      %18 = vector.load %arg5[%c0_13, %c0_14] : memref<32x256xf32, #tpu.memory_space<vmem>>, vector<32x256xf32>
      tpu.vector_store %arg5[%c0_13, %c0_14], %17 {strides = array<i32>} : memref<32x256xf32, #tpu.memory_space<vmem>>, vector<32x256xf32>,
    } else {
    }
    return
  }
  func.func @transform_0(%arg0: i32, %arg1: i32, %arg2: i32) -> (i32, i32) {
    %c0_i32 = arith.constant 0 : i32
    return %arg0, %arg2 : i32, i32
  }
  func.func @transform_1(%arg0: i32, %arg1: i32, %arg2: i32) -> (i32, i32) {
    %c0_i32 = arith.constant 0 : i32
    return %arg2, %arg1 : i32, i32
  }
  func.func @transform_2(%arg0: i32, %arg1: i32, %arg2: i32) -> (i32, i32) {
    %c0_i32 = arith.constant 0 : i32
    return %arg0, %arg1 : i32, i32
  }
}

module attributes {stable_mosaic.version = 11 : i64} {
  func.func @_matmul_pre_sigmoid_kernel(%arg0: i32, %arg1: i32, %arg2: i32, %arg3: memref<16x512xbf16, #tpu.memory_space<vmem>>, %arg4: memref<512x128xbf16, #tpu.memory_space<vmem>>, %arg5: memref<16x128xf32, #tpu.memory_space<vmem>>, %arg6: memref<16x128xf32, #tpu.memory_space<vmem>>, %arg7: memref<16x128xf32, #tpu.memory_space<vmem>>) attributes {dimension_semantics = [#tpu.dimension_semantics<parallel>, #tpu.dimension_semantics<parallel>, #tpu.dimension_semantics<arbitrary>], iteration_bounds = array<i64: 1, 1, 16>, scalar_prefetch = 0 : i64, scratch_operands = 1 : i64, tpu.core_type = #tpu.core_type<tc>, window_params = [{transform_indices = @transform_0, window_bounds = array<i64: 16, 512>}, {transform_indices = @transform_1, window_bounds = array<i64: 512, 128>}, {transform_indices = @transform_2, window_bounds = array<i64: 16, 128>}, {transform_indices = @transform_3, window_bounds = array<i64: 16, 128>}]} {
    %c0_i32 = arith.constant 0 : i32
    %0 = arith.cmpi eq, %arg2, %c0_i32 : i32
    %1 = arith.extui %0 : i1 to i32
    %c0_i32_0 = arith.constant 0 : i32
    %2 = arith.cmpi ne, %1, %c0_i32_0 : i32
    scf.if %2 {
      %cst_9 = arith.constant 0.000000e+00 : f32
      %12 = vector.broadcast %cst_9 : f32 to vector<16x128xf32>
      %c0_10 = arith.constant 0 : index
      %c0_11 = arith.constant 0 : index
      %13 = vector.load %arg7[%c0_10, %c0_11] : memref<16x128xf32, #tpu.memory_space<vmem>>, vector<16x128xf32>
      tpu.vector_store %arg7[%c0_10, %c0_11], %12 {strides = array<i32>} : memref<16x128xf32, #tpu.memory_space<vmem>>, vector<16x128xf32>,
    } else {
    }
    %c0 = arith.constant 0 : index
    %c0_1 = arith.constant 0 : index
    %3 = vector.load %arg7[%c0, %c0_1] : memref<16x128xf32, #tpu.memory_space<vmem>>, vector<16x128xf32>
    %c0_2 = arith.constant 0 : index
    %c0_3 = arith.constant 0 : index
    %4 = vector.load %arg3[%c0_2, %c0_3] : memref<16x512xbf16, #tpu.memory_space<vmem>>, vector<16x512xbf16>
    %c0_4 = arith.constant 0 : index
    %c0_5 = arith.constant 0 : index
    %5 = vector.load %arg4[%c0_4, %c0_5] : memref<512x128xbf16, #tpu.memory_space<vmem>>, vector<512x128xbf16>
    %cst = arith.constant dense<0.000000e+00> : vector<16x128xf32>
    %6 = tpu.matmul %4, %5, %cst {dimension_numbers = #tpu.dot_dimension_numbers<[1], [0], [0], [1], [0, 0, 1, 1], [], []>} : vector<16x512xbf16>, vector<512x128xbf16>, vector<16x128xf32> -> vector<16x128xf32>
    %7 = arith.addf %3, %6 : vector<16x128xf32>
    %c0_6 = arith.constant 0 : index
    %c0_7 = arith.constant 0 : index
    %8 = vector.load %arg7[%c0_6, %c0_7] : memref<16x128xf32, #tpu.memory_space<vmem>>, vector<16x128xf32>
    tpu.vector_store %arg7[%c0_6, %c0_7], %7 {strides = array<i32>} : memref<16x128xf32, #tpu.memory_space<vmem>>, vector<16x128xf32>,
    %c15_i32 = arith.constant 15 : i32
    %9 = arith.cmpi eq, %arg2, %c15_i32 : i32
    %10 = arith.extui %9 : i1 to i32
    %c0_i32_8 = arith.constant 0 : i32
    %11 = arith.cmpi ne, %10, %c0_i32_8 : i32
    scf.if %11 {
      %c0_9 = arith.constant 0 : index
      %c0_10 = arith.constant 0 : index
      %12 = vector.load %arg7[%c0_9, %c0_10] : memref<16x128xf32, #tpu.memory_space<vmem>>, vector<16x128xf32>
      %c0_11 = arith.constant 0 : index
      %c0_12 = arith.constant 0 : index
      %13 = vector.load %arg5[%c0_11, %c0_12] : memref<16x128xf32, #tpu.memory_space<vmem>>, vector<16x128xf32>
      tpu.vector_store %arg5[%c0_11, %c0_12], %12 {strides = array<i32>} : memref<16x128xf32, #tpu.memory_space<vmem>>, vector<16x128xf32>,
      %cst_13 = arith.constant 0.000000e+00 : f32
      %14 = vector.broadcast %cst_13 : f32 to vector<16x128xf32>
      %15 = arith.subf %14, %12 : vector<16x128xf32>
      %16 = math.exp %15 : vector<16x128xf32>
      %cst_14 = arith.constant 1.000000e+00 : f32
      %17 = vector.broadcast %cst_14 : f32 to vector<16x128xf32>
      %18 = arith.addf %17, %16 : vector<16x128xf32>
      %cst_15 = arith.constant 1.000000e+00 : f32
      %19 = vector.broadcast %cst_15 : f32 to vector<16x128xf32>
      %20 = arith.divf %19, %18 : vector<16x128xf32>
      %c0_16 = arith.constant 0 : index
      %c0_17 = arith.constant 0 : index
      %21 = vector.load %arg6[%c0_16, %c0_17] : memref<16x128xf32, #tpu.memory_space<vmem>>, vector<16x128xf32>
      tpu.vector_store %arg6[%c0_16, %c0_17], %20 {strides = array<i32>} : memref<16x128xf32, #tpu.memory_space<vmem>>, vector<16x128xf32>,
    } else {
    }
    return
  }
  func.func @transform_0(%arg0: i32, %arg1: i32, %arg2: i32) -> (i32, i32) {
    %c0_i32 = arith.constant 0 : i32
    return %arg0, %arg2 : i32, i32
  }
  func.func @transform_1(%arg0: i32, %arg1: i32, %arg2: i32) -> (i32, i32) {
    %c0_i32 = arith.constant 0 : i32
    return %arg2, %arg1 : i32, i32
  }
  func.func @transform_2(%arg0: i32, %arg1: i32, %arg2: i32) -> (i32, i32) {
    %c0_i32 = arith.constant 0 : i32
    return %arg0, %arg1 : i32, i32
  }
  func.func @transform_3(%arg0: i32, %arg1: i32, %arg2: i32) -> (i32, i32) {
    %c0_i32 = arith.constant 0 : i32
    return %arg0, %arg1 : i32, i32
  }
}

</mosaic_0001>

<llo_original>
// kernel: discriminator_forward.5
$region0: #{discriminator_forward.5}
  #allocation0 [shape = 'u32[]', space=smem, size = 0x4, offset = 0x4, fixed_abs, tag = 'smem constant byte address 0x4 - core index']
  #allocation1 [shape = 'u32[144,128]{1,0:T(1,128)}', space=vmem, size = 0x12000, scoped, tag = 'internal scratch']
  #allocation2 [shape = 'f32[256,128]{1,0:T(8,128)}', space=vmem, size = 0x20000, scoped, tag = 'scratch operand']
  %s0 = inlined_call_operand.vmem [shape: bf16[512,128], index: 0, kind: input, shape index: {}]
  %s1 = inlined_call_operand.vmem [shape: bf16[128,128], index: 1, kind: input, shape index: {}]
  %s2 = inlined_call_operand.vmem [shape: f32[512,128], index: 2, kind: output, shape index: {}]
  %s3 = sld [smem:[#allocation0]]
  $region49: #{discriminator_forward.5} parent=0
    _
  %s5 = ssub.s32 1, %s3
  %s6 = scalar_select 0, %s5, %s3
  loop: start=0, step=1, limit=4
  $region2: #{discriminator_forward.5} parent=0 // loop_pre_header
    _
  $region3: #{discriminator_forward.5} parent=0 // loop_header
    %s8 = sphi 0, %s12
    %p9 = scmp.ge.s32.totalorder %s8, 4
    %s15 = sphi 0, %s34
    %s16 = sphi 0, %s30
    %s17 = sphi 0, %s26
    %s18 = sphi 0, %s15
    %s19 = sphi 0, %s16
    %s20 = sphi 0, %s17
    %s21 = sphi 0, %s18
    %s22 = sphi 0, %s19
    %s23 = sphi 0, %s20
    %s39 = sphi 0, %s41
    %s42 = sphi 0, %s39
    %s43 = sphi 0, %s42
    %s59 = sphi 0, %s43
    %s67 = sphi 0, %s69
    %s70 = sphi 0, %s67
    %s71 = sphi 0, %s70
    %s87 = sphi 0, %s71
    %s95 = sphi 0, %s97
    %s98 = sphi 0, %s95
    %s99 = sphi 0, %s98
    %s115 = sphi 0, %s99
  $region4: #{discriminator_forward.5} parent=0 // loop_header_branch
    %11 = sbr.rel (%p9) target = $region8
  $region5: #{discriminator_forward.5} parent=0 // loop_body
    %s13 = ssub.s32 %s8, 1
    %s14 = ssub.s32 %s8, 2
    %s24 = sadd.s32 1, %s17
    %p25 = scmp.ge.s32.totalorder %s24, 1
    %s26 = scalar_select %p25, 0, %s24
    %s27 = sadd.s32 1, %s16
    %s28 = scalar_select %p25, %s27, %s16
    %p29 = scmp.ge.s32.totalorder %s28, 1
    %s30 = scalar_select %p29, 0, %s28
    %s31 = sadd.s32 1, %s15
    %s32 = scalar_select %p29, %s31, %s15
    %p33 = scmp.ge.s32.totalorder %s32, 2
    %s34 = scalar_select %p33, 0, %s32
    %s35 = ssub.s32 %s15, %s34
    %s36 = ssub.s32 %s17, %s26
    %s37 = sor.u32 %s35, %s36
    %p38 = scmp.eq.s32.totalorder %s37, 0
    %s40 = sadd.s32 %s39, 1
    %s41 = scalar_select %p38, %s39, %s40
    %p44 = pneg %p38
    %p45 = scmp.eq.s32.totalorder %s8, 1
    %p46 = por %p44, %p45
    %p47 = scmp.ne.s32.totalorder %s39, %s42
    %p48 = scmp.eq.s32.totalorder %s8, 0
    %p49 = por %p47, %p48
    %p50 = scmp.ne.s32.totalorder %s39, %s42
    %p51 = scmp.eq.s32.totalorder %s13, 1
    %p52 = por %p50, %p51
    %p53 = scmp.ne.s32.totalorder %s42, %s43
    %p54 = scmp.eq.s32.totalorder %s13, 0
    %p55 = por %p53, %p54
    %p56 = scmp.ne.s32.totalorder %s42, %s43
    %p57 = scmp.eq.s32.totalorder %s14, 1
    %p58 = por %p56, %p57
    %p60 = scmp.ne.s32.totalorder %s43, %s59
    %p61 = scmp.eq.s32.totalorder %s14, 0
    %p62 = por %p60, %p61
    %s63 = ssub.s32 %s17, %s26
    %s64 = ssub.s32 %s16, %s30
    %s65 = sor.u32 %s63, %s64
    %p66 = scmp.eq.s32.totalorder %s65, 0
    %s68 = sadd.s32 %s67, 1
    %s69 = scalar_select %p66, %s67, %s68
    %p72 = pneg %p66
    %p73 = scmp.eq.s32.totalorder %s8, 1
    %p74 = por %p72, %p73
    %p75 = scmp.ne.s32.totalorder %s67, %s70
    %p76 = scmp.eq.s32.totalorder %s8, 0
    %p77 = por %p75, %p76
    %p78 = scmp.ne.s32.totalorder %s67, %s70
    %p79 = scmp.eq.s32.totalorder %s13, 1
    %p80 = por %p78, %p79
    %p81 = scmp.ne.s32.totalorder %s70, %s71
    %p82 = scmp.eq.s32.totalorder %s13, 0
    %p83 = por %p81, %p82
    %p84 = scmp.ne.s32.totalorder %s70, %s71
    %p85 = scmp.eq.s32.totalorder %s14, 1
    %p86 = por %p84, %p85
    %p88 = scmp.ne.s32.totalorder %s71, %s87
    %p89 = scmp.eq.s32.totalorder %s14, 0
    %p90 = por %p88, %p89
    %s91 = ssub.s32 %s15, %s34
    %s92 = ssub.s32 %s16, %s30
    %s93 = sor.u32 %s91, %s92
    %p94 = scmp.eq.s32.totalorder %s93, 0
    %s96 = sadd.s32 %s95, 1
    %s97 = scalar_select %p94, %s95, %s96
    %p100 = pneg %p94
    %p101 = scmp.eq.s32.totalorder %s8, 1
    %p102 = por %p100, %p101
    %p103 = scmp.ne.s32.totalorder %s95, %s98
    %p104 = scmp.eq.s32.totalorder %s8, 0
    %p105 = por %p103, %p104
    %p106 = scmp.ne.s32.totalorder %s95, %s98
    %p107 = scmp.eq.s32.totalorder %s13, 1
    %p108 = por %p106, %p107
    %p109 = scmp.ne.s32.totalorder %s98, %s99
    %p110 = scmp.eq.s32.totalorder %s13, 0
    %p111 = por %p109, %p110
    %p112 = scmp.ne.s32.totalorder %s98, %s99
    %p113 = scmp.eq.s32.totalorder %s14, 1
    %p114 = por %p112, %p113
    %p116 = scmp.ne.s32.totalorder %s99, %s115
    %p117 = scmp.eq.s32.totalorder %s14, 0
    %p118 = por %p116, %p117
    %p119 = scmp.le.s32.totalorder 1, %s8
    %p120 = scmp.lt.s32.totalorder %s8, 3
    %p121 = pnand %p119, %p120
    %p122 = pneg %p121
    // Predicated region
    $region9: #{discriminator_forward.5} parent=5 // pred_check
      _
    $region10: #{discriminator_forward.5} parent=5 // pred_check_branch
      %124 = sbr.rel (%p121) target = $region12
    $region11: #{discriminator_forward.5} parent=5 // pred_region
      %s125 = ssub.s32 %s8, 1
      // Predicated region
      $region13: #{discriminator_forward.5} parent=11 // pred_check
        %p126 = pneg %p83
      $region14: #{discriminator_forward.5} parent=11 // pred_check_branch
        %128 = sbr.rel (%p126) target = $region16
      $region15: #{discriminator_forward.5} parent=11 // pred_region
        %s129 = smul.u32 16, %s20
        %p130 = scmp.lt.s32.totalorder %s129, 15
        %s131 = scalar_select %p130, %s129, 15
        %p132 = scmp.lt.s32.totalorder %s19, 0
        %s133 = scalar_select %p132, %s19, 0
        %s134 = sadd.s32 %s133, %s131
        %s135 = smul.addr %s134, 4
        %s136 = scalar_lea.vmem %s1, %s135
        %s137 = smul.u32 16, %s20
      $region16: #{discriminator_forward.5} parent=11 // pred_fallthru
        _
    $region12: #{discriminator_forward.5} parent=5 // pred_fallthru
      _
    %p138 = scmp.lt.s32.totalorder %s8, 2
    // Predicated region
    $region17: #{discriminator_forward.5} parent=5 // pred_check
      %p139 = pneg %p138
    $region18: #{discriminator_forward.5} parent=5 // pred_check_branch
      %141 = sbr.rel (%p139) target = $region20
    $region19: #{discriminator_forward.5} parent=5 // pred_region
      // Predicated region
      $region21: #{discriminator_forward.5} parent=19 // pred_check
        %p142 = pneg %p49
      $region22: #{discriminator_forward.5} parent=19 // pred_check_branch
        %144 = sbr.rel (%p142) target = $region24
      $region23: #{discriminator_forward.5} parent=19 // pred_region
        %s145 = smul.u32 32, %s15
        %p146 = scmp.lt.s32.totalorder %s145, 63
        %s147 = scalar_select %p146, %s145, 63
        %p148 = scmp.lt.s32.totalorder %s17, 0
        %s149 = scalar_select %p148, %s17, 0
        %s150 = sadd.s32 %s149, %s147
        %s151 = smul.addr %s150, 4
        %s152 = scalar_lea.vmem %s0, %s151
        %s153 = smul.u32 32, %s15
      $region24: #{discriminator_forward.5} parent=19 // pred_fallthru
        _
    $region20: #{discriminator_forward.5} parent=5 // pred_fallthru
      _
    %p154 = scmp.le.s32.totalorder 1, %s8
    %p155 = scmp.lt.s32.totalorder %s8, 3
    %p156 = pnand %p154, %p155
    %p157 = pneg %p156
    // Predicated region
    $region25: #{discriminator_forward.5} parent=5 // pred_check
      _
    $region26: #{discriminator_forward.5} parent=5 // pred_check_branch
      %159 = sbr.rel (%p156) target = $region28
    $region27: #{discriminator_forward.5} parent=5 // pred_region
      %s160 = ssub.s32 %s8, 1
      %s161 = smul.u32 32, %s18
      %p162 = scmp.lt.s32.totalorder %s161, 63
      %s163 = scalar_select %p162, %s161, 63
      %p164 = scmp.lt.s32.totalorder %s20, 0
      %s165 = scalar_select %p164, %s20, 0
      %s166 = sadd.s32 %s165, %s163
      %s167 = smul.addr %s166, 4
      %s168 = scalar_lea.vmem %s0, %s167
      %p169 = pneg %p55
      %p170 = pneg %p52
      %s171 = smul.u32 16, %s20
      %p172 = scmp.lt.s32.totalorder %s171, 15
      %s173 = scalar_select %p172, %s171, 15
      %p174 = scmp.lt.s32.totalorder %s19, 0
      %s175 = scalar_select %p174, %s19, 0
      %s176 = sadd.s32 %s175, %s173
      %s177 = smul.addr %s176, 4
      %s178 = scalar_lea.vmem %s1, %s177
      %p179 = pneg %p83
      %p180 = pneg %p80
      %p181 = pneg %p111
      %p182 = pneg %p108
      %s183 = smul.u32 32, %s18
      %p184 = scmp.lt.s32.totalorder %s183, 63
      %s185 = scalar_select %p184, %s183, 63
      %p186 = scmp.lt.s32.totalorder %s19, 0
      %s187 = scalar_select %p186, %s19, 0
      %s188 = sadd.s32 %s187, %s185
      %s189 = smul.addr %s188, 8
      %s190 = scalar_lea.vmem %s2, %s189
      %s191 = smul.u32 32, %s18
      %p192 = scmp.lt.s32.totalorder %s191, 63
      %s193 = scalar_select %p192, %s191, 63
      %p194 = scmp.lt.s32.totalorder %s20, 0
      %s195 = scalar_select %p194, %s20, 0
      %s196 = sadd.s32 %s195, %s193
      %s197 = smul.addr %s196, 4
      %s198 = scalar_lea.vmem %s0, %s197
      %s199 = smul.u32 32, %s18
      %s200 = smul.u32 16, %s20
      %p201 = scmp.lt.s32.totalorder %s200, 15
      %s202 = scalar_select %p201, %s200, 15
      %p203 = scmp.lt.s32.totalorder %s19, 0
      %s204 = scalar_select %p203, %s19, 0
      %s205 = sadd.s32 %s204, %s202
      %s206 = smul.addr %s205, 4
      %s207 = scalar_lea.vmem %s1, %s206
      %s208 = smul.u32 16, %s20
      %s209 = smul.u32 32, %s18
      %p210 = scmp.lt.s32.totalorder %s209, 63
      %s211 = scalar_select %p210, %s209, 63
      %p212 = scmp.lt.s32.totalorder %s19, 0
      %s213 = scalar_select %p212, %s19, 0
      %s214 = sadd.s32 %s213, %s211
      %s215 = smul.addr %s214, 8
      %s216 = scalar_lea.vmem %s2, %s215
      %s217 = smul.u32 32, %s18
      %p219 = scmp.eq.s32.totalorder %s20, 0
      // Predicated region
      $region29: #{discriminator_forward.5} parent=27 // pred_check
        %p220 = pneg %p219
      $region30: #{discriminator_forward.5} parent=27 // pred_check_branch
        %222 = sbr.rel (%p220) target = $region32
      $region31: #{discriminator_forward.5} parent=27 // pred_region
        %223 = vst [vmem:[#allocation2] sm:$0xff] 0.0
        %224 = vst [vmem:[#allocation2 + $0x8] sm:$0xff] 0.0
        %225 = vst [vmem:[#allocation2 + $0x10] sm:$0xff] 0.0
        %226 = vst [vmem:[#allocation2 + $0x18] sm:$0xff] 0.0
        %227 = vst [vmem:[#allocation2 + $0x20] sm:$0xff] 0.0
        %228 = vst [vmem:[#allocation2 + $0x28] sm:$0xff] 0.0
        %229 = vst [vmem:[#allocation2 + $0x30] sm:$0xff] 0.0
        %230 = vst [vmem:[#allocation2 + $0x38] sm:$0xff] 0.0
        %231 = vst [vmem:[#allocation2 + $0x40] sm:$0xff] 0.0
        %232 = vst [vmem:[#allocation2 + $0x48] sm:$0xff] 0.0
        %233 = vst [vmem:[#allocation2 + $0x50] sm:$0xff] 0.0
        %234 = vst [vmem:[#allocation2 + $0x58] sm:$0xff] 0.0
        %235 = vst [vmem:[#allocation2 + $0x60] sm:$0xff] 0.0
        %236 = vst [vmem:[#allocation2 + $0x68] sm:$0xff] 0.0
        %237 = vst [vmem:[#allocation2 + $0x70] sm:$0xff] 0.0
        %238 = vst [vmem:[#allocation2 + $0x78] sm:$0xff] 0.0
        %239 = vst [vmem:[#allocation2 + $0x80] sm:$0xff] 0.0
        %240 = vst [vmem:[#allocation2 + $0x88] sm:$0xff] 0.0
        %241 = vst [vmem:[#allocation2 + $0x90] sm:$0xff] 0.0
        %242 = vst [vmem:[#allocation2 + $0x98] sm:$0xff] 0.0
        %243 = vst [vmem:[#allocation2 + $0xa0] sm:$0xff] 0.0
        %244 = vst [vmem:[#allocation2 + $0xa8] sm:$0xff] 0.0
        %245 = vst [vmem:[#allocation2 + $0xb0] sm:$0xff] 0.0
        %246 = vst [vmem:[#allocation2 + $0xb8] sm:$0xff] 0.0
        %247 = vst [vmem:[#allocation2 + $0xc0] sm:$0xff] 0.0
        %248 = vst [vmem:[#allocation2 + $0xc8] sm:$0xff] 0.0
        %249 = vst [vmem:[#allocation2 + $0xd0] sm:$0xff] 0.0
        %250 = vst [vmem:[#allocation2 + $0xd8] sm:$0xff] 0.0
        %251 = vst [vmem:[#allocation2 + $0xe0] sm:$0xff] 0.0
        %252 = vst [vmem:[#allocation2 + $0xe8] sm:$0xff] 0.0
        %253 = vst [vmem:[#allocation2 + $0xf0] sm:$0xff] 0.0
        %254 = vst [vmem:[#allocation2 + $0xf8] sm:$0xff] 0.0
      $region32: #{discriminator_forward.5} parent=27 // pred_fallthru
        _
      %v255 = vld [vmem:[#allocation2] sm:$0xff]
      %v256 = vld [vmem:[#allocation2 + $0x8] sm:$0xff]
      %v257 = vld [vmem:[#allocation2 + $0x10] sm:$0xff]
      %v258 = vld [vmem:[#allocation2 + $0x18] sm:$0xff]
      %v259 = vld [vmem:[#allocation2 + $0x20] sm:$0xff]
      %v260 = vld [vmem:[#allocation2 + $0x28] sm:$0xff]
      %v261 = vld [vmem:[#allocation2 + $0x30] sm:$0xff]
      %v262 = vld [vmem:[#allocation2 + $0x38] sm:$0xff]
      %v263 = vld [vmem:[#allocation2 + $0x40] sm:$0xff]
      %v264 = vld [vmem:[#allocation2 + $0x48] sm:$0xff]
      %v265 = vld [vmem:[#allocation2 + $0x50] sm:$0xff]
      %v266 = vld [vmem:[#allocation2 + $0x58] sm:$0xff]
      %v267 = vld [vmem:[#allocation2 + $0x60] sm:$0xff]
      %v268 = vld [vmem:[#allocation2 + $0x68] sm:$0xff]
      %v269 = vld [vmem:[#allocation2 + $0x70] sm:$0xff]
      %v270 = vld [vmem:[#allocation2 + $0x78] sm:$0xff]
      %v271 = vld [vmem:[#allocation2 + $0x80] sm:$0xff]
      %v272 = vld [vmem:[#allocation2 + $0x88] sm:$0xff]
      %v273 = vld [vmem:[#allocation2 + $0x90] sm:$0xff]
      %v274 = vld [vmem:[#allocation2 + $0x98] sm:$0xff]
      %v275 = vld [vmem:[#allocation2 + $0xa0] sm:$0xff]
      %v276 = vld [vmem:[#allocation2 + $0xa8] sm:$0xff]
      %v277 = vld [vmem:[#allocation2 + $0xb0] sm:$0xff]
      %v278 = vld [vmem:[#allocation2 + $0xb8] sm:$0xff]
      %v279 = vld [vmem:[#allocation2 + $0xc0] sm:$0xff]
      %v280 = vld [vmem:[#allocation2 + $0xc8] sm:$0xff]
      %v281 = vld [vmem:[#allocation2 + $0xd0] sm:$0xff]
      %v282 = vld [vmem:[#allocation2 + $0xd8] sm:$0xff]
      %v283 = vld [vmem:[#allocation2 + $0xe0] sm:$0xff]
      %v284 = vld [vmem:[#allocation2 + $0xe8] sm:$0xff]
      %v285 = vld [vmem:[#allocation2 + $0xf0] sm:$0xff]
      %v286 = vld [vmem:[#allocation2 + $0xf8] sm:$0xff]
      %v287 = vld [vmem:[%s198] sm:$0xf]
      %v288 = vld [vmem:[%s198 + $0x4] sm:$0xf]
      %v289 = vld [vmem:[%s198 + $0x8] sm:$0xf]
      %v290 = vld [vmem:[%s198 + $0xc] sm:$0xf]
      %v291 = vld [vmem:[%s198 + $0x10] sm:$0xf]
      %v292 = vld [vmem:[%s198 + $0x14] sm:$0xf]
      %v293 = vld [vmem:[%s198 + $0x18] sm:$0xf]
      %v294 = vld [vmem:[%s198 + $0x1c] sm:$0xf]
      %v295 = vld [vmem:[%s198 + $0x20] sm:$0xf]
      %v296 = vld [vmem:[%s198 + $0x24] sm:$0xf]
      %v297 = vld [vmem:[%s198 + $0x28] sm:$0xf]
      %v298 = vld [vmem:[%s198 + $0x2c] sm:$0xf]
      %v299 = vld [vmem:[%s198 + $0x30] sm:$0xf]
      %v300 = vld [vmem:[%s198 + $0x34] sm:$0xf]
      %v301 = vld [vmem:[%s198 + $0x38] sm:$0xf]
      %v302 = vld [vmem:[%s198 + $0x3c] sm:$0xf]
      %v303 = vld [vmem:[%s198 + $0x40] sm:$0xf]
      %v304 = vld [vmem:[%s198 + $0x44] sm:$0xf]
      %v305 = vld [vmem:[%s198 + $0x48] sm:$0xf]
      %v306 = vld [vmem:[%s198 + $0x4c] sm:$0xf]
      %v307 = vld [vmem:[%s198 + $0x50] sm:$0xf]
      %v308 = vld [vmem:[%s198 + $0x54] sm:$0xf]
      %v309 = vld [vmem:[%s198 + $0x58] sm:$0xf]
      %v310 = vld [vmem:[%s198 + $0x5c] sm:$0xf]
      %v311 = vld [vmem:[%s198 + $0x60] sm:$0xf]
      %v312 = vld [vmem:[%s198 + $0x64] sm:$0xf]
      %v313 = vld [vmem:[%s198 + $0x68] sm:$0xf]
      %v314 = vld [vmem:[%s198 + $0x6c] sm:$0xf]
      %v315 = vld [vmem:[%s198 + $0x70] sm:$0xf]
      %v316 = vld [vmem:[%s198 + $0x74] sm:$0xf]
      %v317 = vld [vmem:[%s198 + $0x78] sm:$0xf]
      %v318 = vld [vmem:[%s198 + $0x7c] sm:$0xf]
      %v319 = vld [vmem:[%s207] sm:$0xf]
      %v320 = vld [vmem:[%s207 + $0x4] sm:$0xf]
      %v321 = vld [vmem:[%s207 + $0x8] sm:$0xf]
      %v322 = vld [vmem:[%s207 + $0xc] sm:$0xf]
      %v323 = vld [vmem:[%s207 + $0x10] sm:$0xf]
      %v324 = vld [vmem:[%s207 + $0x14] sm:$0xf]
      %v325 = vld [vmem:[%s207 + $0x18] sm:$0xf]
      %v326 = vld [vmem:[%s207 + $0x1c] sm:$0xf]
      %v327 = vld [vmem:[%s207 + $0x20] sm:$0xf]
      %v328 = vld [vmem:[%s207 + $0x24] sm:$0xf]
      %v329 = vld [vmem:[%s207 + $0x28] sm:$0xf]
      %v330 = vld [vmem:[%s207 + $0x2c] sm:$0xf]
      %v331 = vld [vmem:[%s207 + $0x30] sm:$0xf]
      %v332 = vld [vmem:[%s207 + $0x34] sm:$0xf]
      %v333 = vld [vmem:[%s207 + $0x38] sm:$0xf]
      %v334 = vld [vmem:[%s207 + $0x3c] sm:$0xf]
      %v367 = vunpack.c.l.b16 %v287
      %v368 = vunpack.c.l.b16 %v288
      %v369 = vunpack.c.l.b16 %v289
      %v370 = vunpack.c.l.b16 %v290
      %v371 = vunpack.c.l.b16 %v291
      %v372 = vunpack.c.l.b16 %v292
      %v373 = vunpack.c.l.b16 %v293
      %v374 = vunpack.c.l.b16 %v294
      %v375 = vunpack.c.l.b16 %v295
      %v376 = vunpack.c.l.b16 %v296
      %v377 = vunpack.c.l.b16 %v297
      %v378 = vunpack.c.l.b16 %v298
      %v379 = vunpack.c.l.b16 %v299
      %v380 = vunpack.c.l.b16 %v300
      %v381 = vunpack.c.l.b16 %v301
      %v382 = vunpack.c.l.b16 %v302
      %v383 = vunpack.c.l.b16 %v303
      %v384 = vunpack.c.l.b16 %v304
      %v385 = vunpack.c.l.b16 %v305
      %v386 = vunpack.c.l.b16 %v306
      %v387 = vunpack.c.l.b16 %v307
      %v388 = vunpack.c.l.b16 %v308
      %v389 = vunpack.c.l.b16 %v309
      %v390 = vunpack.c.l.b16 %v310
      %v391 = vunpack.c.l.b16 %v311
      %v392 = vunpack.c.l.b16 %v312
      %v393 = vunpack.c.l.b16 %v313
      %v394 = vunpack.c.l.b16 %v314
      %v395 = vunpack.c.l.b16 %v315
      %v396 = vunpack.c.l.b16 %v316
      %v397 = vunpack.c.l.b16 %v317
      %v398 = vunpack.c.l.b16 %v318
      %v399 = vpack.c.b16 %v368, %v367
      %v400 = vpack.c.b16 %v370, %v369
      %v401 = vpack.c.b16 %v372, %v371
      %v402 = vpack.c.b16 %v374, %v373
      %v403 = vpack.c.b16 %v376, %v375
      %v404 = vpack.c.b16 %v378, %v377
      %v405 = vpack.c.b16 %v380, %v379
      %v406 = vpack.c.b16 %v382, %v381
      %v407 = vpack.c.b16 %v384, %v383
      %v408 = vpack.c.b16 %v386, %v385
      %v409 = vpack.c.b16 %v388, %v387
      %v410 = vpack.c.b16 %v390, %v389
      %v411 = vpack.c.b16 %v392, %v391
      %v412 = vpack.c.b16 %v394, %v393
      %v413 = vpack.c.b16 %v396, %v395
      %v414 = vpack.c.b16 %v398, %v397
      %v447 = vunpack.c.l.b16 %v319
      %v448 = vunpack.c.l.b16 %v320
      %v449 = vunpack.c.l.b16 %v321
      %v450 = vunpack.c.l.b16 %v322
      %v451 = vunpack.c.l.b16 %v323
      %v452 = vunpack.c.l.b16 %v324
      %v453 = vunpack.c.l.b16 %v325
      %v454 = vunpack.c.l.b16 %v326
      %v455 = vunpack.c.l.b16 %v327
      %v456 = vunpack.c.l.b16 %v328
      %v457 = vunpack.c.l.b16 %v329
      %v458 = vunpack.c.l.b16 %v330
      %v459 = vunpack.c.l.b16 %v331
      %v460 = vunpack.c.l.b16 %v332
      %v461 = vunpack.c.l.b16 %v333
      %v462 = vunpack.c.l.b16 %v334
      %v463 = vpack.c.b16 %v448, %v447
      %v464 = vpack.c.b16 %v450, %v449
      %v465 = vpack.c.b16 %v452, %v451
      %v466 = vpack.c.b16 %v454, %v453
      %v467 = vpack.c.b16 %v456, %v455
      %v468 = vpack.c.b16 %v458, %v457
      %v469 = vpack.c.b16 %v460, %v459
      %v470 = vpack.c.b16 %v462, %v461
      %479 = vmatprep.subr.bf16.mxu0 0
      %480 = vmatpush1.bf16.msra.mxu0 %v463
      %481 = vmatprep.subr.bf16.mxu0 0
      %482 = vmatpush1.bf16.msra.mxu0 %v464
      %483 = vmatprep.subr.bf16.mxu0 0
      %484 = vmatpush1.bf16.msra.mxu0 %v465
      %485 = vmatprep.subr.bf16.mxu0 0
      %486 = vmatpush1.bf16.msra.mxu0 %v466
      %487 = vmatprep.subr.bf16.mxu0 0
      %488 = vmatpush1.bf16.msra.mxu0 %v467
      %489 = vmatprep.subr.bf16.mxu0 0
      %490 = vmatpush1.bf16.msra.mxu0 %v468
      %491 = vmatprep.subr.bf16.mxu0 0
      %492 = vmatpush1.bf16.msra.mxu0 %v469
      %493 = vmatprep.subr.bf16.mxu0 0
      %494 = vmatpush1.bf16.msra.mxu0 %v470
      %495 = vmatprep.subr.bf16.mxu0 0
      %496 = vmatpush1.bf16.msra.mxu0 0
      %497 = vmatprep.subr.bf16.mxu0 0
      %498 = vmatpush1.bf16.msra.mxu0 0
      %499 = vmatprep.subr.bf16.mxu0 0
      %500 = vmatpush1.bf16.msra.mxu0 0
      %501 = vmatprep.subr.bf16.mxu0 0
      %502 = vmatpush1.bf16.msra.mxu0 0
      %503 = vmatprep.subr.bf16.mxu0 0
      %504 = vmatpush1.bf16.msra.mxu0 0
      %505 = vmatprep.subr.bf16.mxu0 0
      %506 = vmatpush1.bf16.msra.mxu0 0
      %507 = vmatprep.subr.bf16.mxu0 0
      %508 = vmatpush1.bf16.msra.mxu0 0
      %509 = vmatprep.subr.bf16.mxu0 0
      %510 = vmatpush1.bf16.msra.mxu0 0
      %511 = vmatprep.mubr.bf16.mxu0 0
      %512 = vmatmul.mubr.bf16.gmra.mrb[0].mxu0 %v399
      %v513 = vpop.f32.mrb[0].mxu0
      %v514 = vadd.f32 0.0, %v513
      %v515 = vpop.f32.mrb[0].mxu0
      %v516 = vpop.f32.mrb[0].mxu0
      %v517 = vadd.f32 0.0, %v516
      %v518 = vpop.f32.mrb[0].mxu0
      %519 = vmatprep.mubr.bf16.mxu0 0
      %520 = vmatmul.mubr.bf16.gmra.mrb[0].mxu0 %v400
      %v521 = vpop.f32.mrb[0].mxu0
      %v522 = vadd.f32 0.0, %v521
      %v523 = vpop.f32.mrb[0].mxu0
      %v524 = vpop.f32.mrb[0].mxu0
      %v525 = vadd.f32 0.0, %v524
      %v526 = vpop.f32.mrb[0].mxu0
      %527 = vmatprep.mubr.bf16.mxu0 0
      %528 = vmatmul.mubr.bf16.gmra.mrb[0].mxu0 %v401
      %v529 = vpop.f32.mrb[0].mxu0
      %v530 = vadd.f32 0.0, %v529
      %v531 = vpop.f32.mrb[0].mxu0
      %v532 = vpop.f32.mrb[0].mxu0
      %v533 = vadd.f32 0.0, %v532
      %v534 = vpop.f32.mrb[0].mxu0
      %535 = vmatprep.mubr.bf16.mxu0 0
      %536 = vmatmul.mubr.bf16.gmra.mrb[0].mxu0 %v402
      %v537 = vpop.f32.mrb[0].mxu0
      %v538 = vadd.f32 0.0, %v537
      %v539 = vpop.f32.mrb[0].mxu0
      %v540 = vpop.f32.mrb[0].mxu0
      %v541 = vadd.f32 0.0, %v540
      %v542 = vpop.f32.mrb[0].mxu0
      %543 = vmatprep.mubr.bf16.mxu0 0
      %544 = vmatmul.mubr.bf16.gmra.mrb[0].mxu0 %v403
      %v545 = vpop.f32.mrb[0].mxu0
      %v546 = vadd.f32 0.0, %v545
      %v547 = vpop.f32.mrb[0].mxu0
      %v548 = vpop.f32.mrb[0].mxu0
      %v549 = vadd.f32 0.0, %v548
      %v550 = vpop.f32.mrb[0].mxu0
      %551 = vmatprep.mubr.bf16.mxu0 0
      %552 = vmatmul.mubr.bf16.gmra.mrb[0].mxu0 %v404
      %v553 = vpop.f32.mrb[0].mxu0
      %v554 = vadd.f32 0.0, %v553
      %v555 = vpop.f32.mrb[0].mxu0
      %v556 = vpop.f32.mrb[0].mxu0
      %v557 = vadd.f32 0.0, %v556
      %v558 = vpop.f32.mrb[0].mxu0
      %559 = vmatprep.mubr.bf16.mxu0 0
      %560 = vmatmul.mubr.bf16.gmra.mrb[0].mxu0 %v405
      %v561 = vpop.f32.mrb[0].mxu0
      %v562 = vadd.f32 0.0, %v561
      %v563 = vpop.f32.mrb[0].mxu0
      %v564 = vpop.f32.mrb[0].mxu0
      %v565 = vadd.f32 0.0, %v564
      %v566 = vpop.f32.mrb[0].mxu0
      %567 = vmatprep.mubr.bf16.mxu0 0
      %568 = vmatmul.mubr.bf16.gmra.mrb[0].mxu0 %v406
      %v569 = vpop.f32.mrb[0].mxu0
      %v570 = vadd.f32 0.0, %v569
      %v571 = vpop.f32.mrb[0].mxu0
      %v572 = vpop.f32.mrb[0].mxu0
      %v573 = vadd.f32 0.0, %v572
      %v574 = vpop.f32.mrb[0].mxu0
      %575 = vmatprep.mubr.bf16.mxu0 0
      %576 = vmatmul.mubr.bf16.gmra.mrb[0].mxu0 %v407
      %v577 = vpop.f32.mrb[0].mxu0
      %v578 = vadd.f32 0.0, %v577
      %v579 = vpop.f32.mrb[0].mxu0
      %v580 = vpop.f32.mrb[0].mxu0
      %v581 = vadd.f32 0.0, %v580
      %v582 = vpop.f32.mrb[0].mxu0
      %583 = vmatprep.mubr.bf16.mxu0 0
      %584 = vmatmul.mubr.bf16.gmra.mrb[0].mxu0 %v408
      %v585 = vpop.f32.mrb[0].mxu0
      %v586 = vadd.f32 0.0, %v585
      %v587 = vpop.f32.mrb[0].mxu0
      %v588 = vpop.f32.mrb[0].mxu0
      %v589 = vadd.f32 0.0, %v588
      %v590 = vpop.f32.mrb[0].mxu0
      %591 = vmatprep.mubr.bf16.mxu0 0
      %592 = vmatmul.mubr.bf16.gmra.mrb[0].mxu0 %v409
      %v593 = vpop.f32.mrb[0].mxu0
      %v594 = vadd.f32 0.0, %v593
      %v595 = vpop.f32.mrb[0].mxu0
      %v596 = vpop.f32.mrb[0].mxu0
      %v597 = vadd.f32 0.0, %v596
      %v598 = vpop.f32.mrb[0].mxu0
      %599 = vmatprep.mubr.bf16.mxu0 0
      %600 = vmatmul.mubr.bf16.gmra.mrb[0].mxu0 %v410
      %v601 = vpop.f32.mrb[0].mxu0
      %v602 = vadd.f32 0.0, %v601
      %v603 = vpop.f32.mrb[0].mxu0
      %v604 = vpop.f32.mrb[0].mxu0
      %v605 = vadd.f32 0.0, %v604
      %v606 = vpop.f32.mrb[0].mxu0
      %607 = vmatprep.mubr.bf16.mxu0 0
      %608 = vmatmul.mubr.bf16.gmra.mrb[0].mxu0 %v411
      %v609 = vpop.f32.mrb[0].mxu0
      %v610 = vadd.f32 0.0, %v609
      %v611 = vpop.f32.mrb[0].mxu0
      %v612 = vpop.f32.mrb[0].mxu0
      %v613 = vadd.f32 0.0, %v612
      %v614 = vpop.f32.mrb[0].mxu0
      %615 = vmatprep.mubr.bf16.mxu0 0
      %616 = vmatmul.mubr.bf16.gmra.mrb[0].mxu0 %v412
      %v617 = vpop.f32.mrb[0].mxu0
      %v618 = vadd.f32 0.0, %v617
      %v619 = vpop.f32.mrb[0].mxu0
      %v620 = vpop.f32.mrb[0].mxu0
      %v621 = vadd.f32 0.0, %v620
      %v622 = vpop.f32.mrb[0].mxu0
      %623 = vmatprep.mubr.bf16.mxu0 0
      %624 = vmatmul.mubr.bf16.gmra.mrb[0].mxu0 %v413
      %v625 = vpop.f32.mrb[0].mxu0
      %v626 = vadd.f32 0.0, %v625
      %v627 = vpop.f32.mrb[0].mxu0
      %v628 = vpop.f32.mrb[0].mxu0
      %v629 = vadd.f32 0.0, %v628
      %v630 = vpop.f32.mrb[0].mxu0
      %631 = vmatprep.mubr.bf16.mxu0 0
      %632 = vmatmul.mubr.bf16.gmra.mrb[0].mxu0 %v414
      %v633 = vpop.f32.mrb[0].mxu0
      %v634 = vadd.f32 0.0, %v633
      %v635 = vpop.f32.mrb[0].mxu0
      %v636 = vpop.f32.mrb[0].mxu0
      %v637 = vadd.f32 0.0, %v636
      %v638 = vpop.f32.mrb[0].mxu0
      %639 = vdwg.mxu0
      %v640 = vadd.f32 %v255, %v514
      %v641 = vadd.f32 %v256, %v517
      %v642 = vadd.f32 %v257, %v522
      %v643 = vadd.f32 %v258, %v525
      %v644 = vadd.f32 %v259, %v530
      %v645 = vadd.f32 %v260, %v533
      %v646 = vadd.f32 %v261, %v538
      %v647 = vadd.f32 %v262, %v541
      %v648 = vadd.f32 %v263, %v546
      %v649 = vadd.f32 %v264, %v549
      %v650 = vadd.f32 %v265, %v554
      %v651 = vadd.f32 %v266, %v557
      %v652 = vadd.f32 %v267, %v562
      %v653 = vadd.f32 %v268, %v565
      %v654 = vadd.f32 %v269, %v570
      %v655 = vadd.f32 %v270, %v573
      %v656 = vadd.f32 %v271, %v578
      %v657 = vadd.f32 %v272, %v581
      %v658 = vadd.f32 %v273, %v586
      %v659 = vadd.f32 %v274, %v589
      %v660 = vadd.f32 %v275, %v594
      %v661 = vadd.f32 %v276, %v597
      %v662 = vadd.f32 %v277, %v602
      %v663 = vadd.f32 %v278, %v605
      %v664 = vadd.f32 %v279, %v610
      %v665 = vadd.f32 %v280, %v613
      %v666 = vadd.f32 %v281, %v618
      %v667 = vadd.f32 %v282, %v621
      %v668 = vadd.f32 %v283, %v626
      %v669 = vadd.f32 %v284, %v629
      %v670 = vadd.f32 %v285, %v634
      %v671 = vadd.f32 %v286, %v637
      %672 = vst [vmem:[#allocation2] sm:$0xff] %v640
      %673 = vst [vmem:[#allocation2 + $0x8] sm:$0xff] %v641
      %674 = vst [vmem:[#allocation2 + $0x10] sm:$0xff] %v642
      %675 = vst [vmem:[#allocation2 + $0x18] sm:$0xff] %v643
      %676 = vst [vmem:[#allocation2 + $0x20] sm:$0xff] %v644
      %677 = vst [vmem:[#allocation2 + $0x28] sm:$0xff] %v645
      %678 = vst [vmem:[#allocation2 + $0x30] sm:$0xff] %v646
      %679 = vst [vmem:[#allocation2 + $0x38] sm:$0xff] %v647
      %680 = vst [vmem:[#allocation2 + $0x40] sm:$0xff] %v648
      %681 = vst [vmem:[#allocation2 + $0x48] sm:$0xff] %v649
      %682 = vst [vmem:[#allocation2 + $0x50] sm:$0xff] %v650
      %683 = vst [vmem:[#allocation2 + $0x58] sm:$0xff] %v651
      %684 = vst [vmem:[#allocation2 + $0x60] sm:$0xff] %v652
      %685 = vst [vmem:[#allocation2 + $0x68] sm:$0xff] %v653
      %686 = vst [vmem:[#allocation2 + $0x70] sm:$0xff] %v654
      %687 = vst [vmem:[#allocation2 + $0x78] sm:$0xff] %v655
      %688 = vst [vmem:[#allocation2 + $0x80] sm:$0xff] %v656
      %689 = vst [vmem:[#allocation2 + $0x88] sm:$0xff] %v657
      %690 = vst [vmem:[#allocation2 + $0x90] sm:$0xff] %v658
      %691 = vst [vmem:[#allocation2 + $0x98] sm:$0xff] %v659
      %692 = vst [vmem:[#allocation2 + $0xa0] sm:$0xff] %v660
      %693 = vst [vmem:[#allocation2 + $0xa8] sm:$0xff] %v661
      %694 = vst [vmem:[#allocation2 + $0xb0] sm:$0xff] %v662
      %695 = vst [vmem:[#allocation2 + $0xb8] sm:$0xff] %v663
      %696 = vst [vmem:[#allocation2 + $0xc0] sm:$0xff] %v664
      %697 = vst [vmem:[#allocation2 + $0xc8] sm:$0xff] %v665
      %698 = vst [vmem:[#allocation2 + $0xd0] sm:$0xff] %v666
      %699 = vst [vmem:[#allocation2 + $0xd8] sm:$0xff] %v667
      %700 = vst [vmem:[#allocation2 + $0xe0] sm:$0xff] %v668
      %701 = vst [vmem:[#allocation2 + $0xe8] sm:$0xff] %v669
      %702 = vst [vmem:[#allocation2 + $0xf0] sm:$0xff] %v670
      %703 = vst [vmem:[#allocation2 + $0xf8] sm:$0xff] %v671
      // Predicated region
      $region33: #{discriminator_forward.5} parent=27 // pred_check
        %p704 = pneg %p219
      $region34: #{discriminator_forward.5} parent=27 // pred_check_branch
        %706 = sbr.rel (%p704) target = $region36
      $region35: #{discriminator_forward.5} parent=27 // pred_region
        %v707 = vld [vmem:[#allocation2] sm:$0xff]
        %v708 = vld [vmem:[#allocation2 + $0x8] sm:$0xff]
        %v709 = vld [vmem:[#allocation2 + $0x10] sm:$0xff]
        %v710 = vld [vmem:[#allocation2 + $0x18] sm:$0xff]
        %v711 = vld [vmem:[#allocation2 + $0x20] sm:$0xff]
        %v712 = vld [vmem:[#allocation2 + $0x28] sm:$0xff]
        %v713 = vld [vmem:[#allocation2 + $0x30] sm:$0xff]
        %v714 = vld [vmem:[#allocation2 + $0x38] sm:$0xff]
        %v715 = vld [vmem:[#allocation2 + $0x40] sm:$0xff]
        %v716 = vld [vmem:[#allocation2 + $0x48] sm:$0xff]
        %v717 = vld [vmem:[#allocation2 + $0x50] sm:$0xff]
        %v718 = vld [vmem:[#allocation2 + $0x58] sm:$0xff]
        %v719 = vld [vmem:[#allocation2 + $0x60] sm:$0xff]
        %v720 = vld [vmem:[#allocation2 + $0x68] sm:$0xff]
        %v721 = vld [vmem:[#allocation2 + $0x70] sm:$0xff]
        %v722 = vld [vmem:[#allocation2 + $0x78] sm:$0xff]
        %v723 = vld [vmem:[#allocation2 + $0x80] sm:$0xff]
        %v724 = vld [vmem:[#allocation2 + $0x88] sm:$0xff]
        %v725 = vld [vmem:[#allocation2 + $0x90] sm:$0xff]
        %v726 = vld [vmem:[#allocation2 + $0x98] sm:$0xff]
        %v727 = vld [vmem:[#allocation2 + $0xa0] sm:$0xff]
        %v728 = vld [vmem:[#allocation2 + $0xa8] sm:$0xff]
        %v729 = vld [vmem:[#allocation2 + $0xb0] sm:$0xff]
        %v730 = vld [vmem:[#allocation2 + $0xb8] sm:$0xff]
        %v731 = vld [vmem:[#allocation2 + $0xc0] sm:$0xff]
        %v732 = vld [vmem:[#allocation2 + $0xc8] sm:$0xff]
        %v733 = vld [vmem:[#allocation2 + $0xd0] sm:$0xff]
        %v734 = vld [vmem:[#allocation2 + $0xd8] sm:$0xff]
        %v735 = vld [vmem:[#allocation2 + $0xe0] sm:$0xff]
        %v736 = vld [vmem:[#allocation2 + $0xe8] sm:$0xff]
        %v737 = vld [vmem:[#allocation2 + $0xf0] sm:$0xff]
        %v738 = vld [vmem:[#allocation2 + $0xf8] sm:$0xff]
        %vm739 = vcmp.ge.f32.partialorder %v707, 0.0
        %vm740 = vcmp.ge.f32.partialorder %v708, 0.0
        %vm741 = vcmp.ge.f32.partialorder %v709, 0.0
        %vm742 = vcmp.ge.f32.partialorder %v710, 0.0
        %vm743 = vcmp.ge.f32.partialorder %v711, 0.0
        %vm744 = vcmp.ge.f32.partialorder %v712, 0.0
        %vm745 = vcmp.ge.f32.partialorder %v713, 0.0
        %vm746 = vcmp.ge.f32.partialorder %v714, 0.0
        %vm747 = vcmp.ge.f32.partialorder %v715, 0.0
        %vm748 = vcmp.ge.f32.partialorder %v716, 0.0
        %vm749 = vcmp.ge.f32.partialorder %v717, 0.0
        %vm750 = vcmp.ge.f32.partialorder %v718, 0.0
        %vm751 = vcmp.ge.f32.partialorder %v719, 0.0
        %vm752 = vcmp.ge.f32.partialorder %v720, 0.0
        %vm753 = vcmp.ge.f32.partialorder %v721, 0.0
        %vm754 = vcmp.ge.f32.partialorder %v722, 0.0
        %vm755 = vcmp.ge.f32.partialorder %v723, 0.0
        %vm756 = vcmp.ge.f32.partialorder %v724, 0.0
        %vm757 = vcmp.ge.f32.partialorder %v725, 0.0
        %vm758 = vcmp.ge.f32.partialorder %v726, 0.0
        %vm759 = vcmp.ge.f32.partialorder %v727, 0.0
        %vm760 = vcmp.ge.f32.partialorder %v728, 0.0
        %vm761 = vcmp.ge.f32.partialorder %v729, 0.0
        %vm762 = vcmp.ge.f32.partialorder %v730, 0.0
        %vm763 = vcmp.ge.f32.partialorder %v731, 0.0
        %vm764 = vcmp.ge.f32.partialorder %v732, 0.0
        %vm765 = vcmp.ge.f32.partialorder %v733, 0.0
        %vm766 = vcmp.ge.f32.partialorder %v734, 0.0
        %vm767 = vcmp.ge.f32.partialorder %v735, 0.0
        %vm768 = vcmp.ge.f32.partialorder %v736, 0.0
        %vm769 = vcmp.ge.f32.partialorder %v737, 0.0
        %vm770 = vcmp.ge.f32.partialorder %v738, 0.0
        %v771 = vmul.f32 %v707, 0.2
        %v772 = vmul.f32 %v708, 0.2
        %v773 = vmul.f32 %v709, 0.2
        %v774 = vmul.f32 %v710, 0.2
        %v775 = vmul.f32 %v711, 0.2
        %v776 = vmul.f32 %v712, 0.2
        %v777 = vmul.f32 %v713, 0.2
        %v778 = vmul.f32 %v714, 0.2
        %v779 = vmul.f32 %v715, 0.2
        %v780 = vmul.f32 %v716, 0.2
        %v781 = vmul.f32 %v717, 0.2
        %v782 = vmul.f32 %v718, 0.2
        %v783 = vmul.f32 %v719, 0.2
        %v784 = vmul.f32 %v720, 0.2
        %v785 = vmul.f32 %v721, 0.2
        %v786 = vmul.f32 %v722, 0.2
        %v787 = vmul.f32 %v723, 0.2
        %v788 = vmul.f32 %v724, 0.2
        %v789 = vmul.f32 %v725, 0.2
        %v790 = vmul.f32 %v726, 0.2
        %v791 = vmul.f32 %v727, 0.2
        %v792 = vmul.f32 %v728, 0.2
        %v793 = vmul.f32 %v729, 0.2
        %v794 = vmul.f32 %v730, 0.2
        %v795 = vmul.f32 %v731, 0.2
        %v796 = vmul.f32 %v732, 0.2
        %v797 = vmul.f32 %v733, 0.2
        %v798 = vmul.f32 %v734, 0.2
        %v799 = vmul.f32 %v735, 0.2
        %v800 = vmul.f32 %v736, 0.2
        %v801 = vmul.f32 %v737, 0.2
        %v802 = vmul.f32 %v738, 0.2
        %v803 = vsel %vm739, %v707, %v771
        %v804 = vsel %vm740, %v708, %v772
        %v805 = vsel %vm741, %v709, %v773
        %v806 = vsel %vm742, %v710, %v774
        %v807 = vsel %vm743, %v711, %v775
        %v808 = vsel %vm744, %v712, %v776
        %v809 = vsel %vm745, %v713, %v777
        %v810 = vsel %vm746, %v714, %v778
        %v811 = vsel %vm747, %v715, %v779
        %v812 = vsel %vm748, %v716, %v780
        %v813 = vsel %vm749, %v717, %v781
        %v814 = vsel %vm750, %v718, %v782
        %v815 = vsel %vm751, %v719, %v783
        %v816 = vsel %vm752, %v720, %v784
        %v817 = vsel %vm753, %v721, %v785
        %v818 = vsel %vm754, %v722, %v786
        %v819 = vsel %vm755, %v723, %v787
        %v820 = vsel %vm756, %v724, %v788
        %v821 = vsel %vm757, %v725, %v789
        %v822 = vsel %vm758, %v726, %v790
        %v823 = vsel %vm759, %v727, %v791
        %v824 = vsel %vm760, %v728, %v792
        %v825 = vsel %vm761, %v729, %v793
        %v826 = vsel %vm762, %v730, %v794
        %v827 = vsel %vm763, %v731, %v795
        %v828 = vsel %vm764, %v732, %v796
        %v829 = vsel %vm765, %v733, %v797
        %v830 = vsel %vm766, %v734, %v798
        %v831 = vsel %vm767, %v735, %v799
        %v832 = vsel %vm768, %v736, %v800
        %v833 = vsel %vm769, %v737, %v801
        %v834 = vsel %vm770, %v738, %v802
        %835 = vst [vmem:[%s216] sm:$0xff] %v803
        %836 = vst [vmem:[%s216 + $0x8] sm:$0xff] %v804
        %837 = vst [vmem:[%s216 + $0x10] sm:$0xff] %v805
        %838 = vst [vmem:[%s216 + $0x18] sm:$0xff] %v806
        %839 = vst [vmem:[%s216 + $0x20] sm:$0xff] %v807
        %840 = vst [vmem:[%s216 + $0x28] sm:$0xff] %v808
        %841 = vst [vmem:[%s216 + $0x30] sm:$0xff] %v809
        %842 = vst [vmem:[%s216 + $0x38] sm:$0xff] %v810
        %843 = vst [vmem:[%s216 + $0x40] sm:$0xff] %v811
        %844 = vst [vmem:[%s216 + $0x48] sm:$0xff] %v812
        %845 = vst [vmem:[%s216 + $0x50] sm:$0xff] %v813
        %846 = vst [vmem:[%s216 + $0x58] sm:$0xff] %v814
        %847 = vst [vmem:[%s216 + $0x60] sm:$0xff] %v815
        %848 = vst [vmem:[%s216 + $0x68] sm:$0xff] %v816
        %849 = vst [vmem:[%s216 + $0x70] sm:$0xff] %v817
        %850 = vst [vmem:[%s216 + $0x78] sm:$0xff] %v818
        %851 = vst [vmem:[%s216 + $0x80] sm:$0xff] %v819
        %852 = vst [vmem:[%s216 + $0x88] sm:$0xff] %v820
        %853 = vst [vmem:[%s216 + $0x90] sm:$0xff] %v821
        %854 = vst [vmem:[%s216 + $0x98] sm:$0xff] %v822
        %855 = vst [vmem:[%s216 + $0xa0] sm:$0xff] %v823
        %856 = vst [vmem:[%s216 + $0xa8] sm:$0xff] %v824
        %857 = vst [vmem:[%s216 + $0xb0] sm:$0xff] %v825
        %858 = vst [vmem:[%s216 + $0xb8] sm:$0xff] %v826
        %859 = vst [vmem:[%s216 + $0xc0] sm:$0xff] %v827
        %860 = vst [vmem:[%s216 + $0xc8] sm:$0xff] %v828
        %861 = vst [vmem:[%s216 + $0xd0] sm:$0xff] %v829
        %862 = vst [vmem:[%s216 + $0xd8] sm:$0xff] %v830
        %863 = vst [vmem:[%s216 + $0xe0] sm:$0xff] %v831
        %864 = vst [vmem:[%s216 + $0xe8] sm:$0xff] %v832
        %865 = vst [vmem:[%s216 + $0xf0] sm:$0xff] %v833
        %866 = vst [vmem:[%s216 + $0xf8] sm:$0xff] %v834
      $region36: #{discriminator_forward.5} parent=27 // pred_fallthru
        _
      %s867 = smul.u32 32, %s18
      %p868 = scmp.lt.s32.totalorder %s867, 63
      %s869 = scalar_select %p868, %s867, 63
      %p870 = scmp.lt.s32.totalorder %s19, 0
      %s871 = scalar_select %p870, %s19, 0
      %s872 = sadd.s32 %s871, %s869
      %s873 = smul.addr %s872, 8
      %s874 = scalar_lea.vmem %s2, %s873
      // Predicated region
      $region37: #{discriminator_forward.5} parent=27 // pred_check
        %p875 = pneg %p108
      $region38: #{discriminator_forward.5} parent=27 // pred_check_branch
        %877 = sbr.rel (%p875) target = $region40
      $region39: #{discriminator_forward.5} parent=27 // pred_region
        %s878 = smul.u32 32, %s18
      $region40: #{discriminator_forward.5} parent=27 // pred_fallthru
        _
    $region28: #{discriminator_forward.5} parent=5 // pred_fallthru
      _
    %p879 = scmp.le.s32.totalorder 2, %s8
    // Predicated region
    $region41: #{discriminator_forward.5} parent=5 // pred_check
      %p880 = pneg %p879
    $region42: #{discriminator_forward.5} parent=5 // pred_check_branch
      %882 = sbr.rel (%p880) target = $region44
    $region43: #{discriminator_forward.5} parent=5 // pred_region
      %s883 = ssub.s32 %s8, 2
      // Predicated region
      $region45: #{discriminator_forward.5} parent=43 // pred_check
        %p884 = pneg %p114
      $region46: #{discriminator_forward.5} parent=43 // pred_check_branch
        %886 = sbr.rel (%p884) target = $region48
      $region47: #{discriminator_forward.5} parent=43 // pred_region
        %s887 = smul.u32 32, %s21
        %p888 = scmp.lt.s32.totalorder %s887, 63
        %s889 = scalar_select %p888, %s887, 63
        %p890 = scmp.lt.s32.totalorder %s22, 0
        %s891 = scalar_select %p890, %s22, 0
        %s892 = sadd.s32 %s891, %s889
        %s893 = smul.addr %s892, 8
        %s894 = scalar_lea.vmem %s2, %s893
      $region48: #{discriminator_forward.5} parent=43 // pred_fallthru
        _
    $region44: #{discriminator_forward.5} parent=5 // pred_fallthru
      _
  $region6: #{discriminator_forward.5} parent=0 // loop_footer
    %s12 = sadd.s32 1, %s8
  $region7: #{discriminator_forward.5} parent=0 // loop_footer_branch
    %7 = sbr.rel target = $region3
  $region8: #{discriminator_forward.5} parent=0 // loop_exit
    _

// kernel: discriminator_forward.6
$region0: #{discriminator_forward.6}
  #allocation0 [shape = 'u32[]', space=smem, size = 0x4, offset = 0x4, fixed_abs, tag = 'smem constant byte address 0x4 - core index']
  #allocation1 [shape = 'u32[144,128]{1,0:T(1,128)}', space=vmem, size = 0x12000, scoped, tag = 'internal scratch']
  #allocation2 [shape = 'f32[128,128]{1,0:T(8,128)}', space=vmem, size = 0x10000, scoped, tag = 'scratch operand']
  %s0 = inlined_call_operand.vmem [shape: bf16[128,1024], index: 0, kind: input, shape index: {}]
  %s1 = inlined_call_operand.vmem [shape: bf16[1024,128], index: 1, kind: input, shape index: {}]
  %s2 = inlined_call_operand.vmem [shape: f32[128,128], index: 2, kind: output, shape index: {}]
  %s3 = sld [smem:[#allocation0]]
  $region72: #{discriminator_forward.6} parent=0
    _
  %s5 = ssub.s32 1, %s3
  %s6 = scalar_select 0, %s5, %s3
  $region1: #{discriminator_forward.6} parent=0
    #allocation3 [shape = 'u8[262144]{0}', space=vmem, size = 0x40000, scoped, tag = 'input window, operand 0']
    loop: start=0, step=1, limit=4
    $region2: #{discriminator_forward.6} parent=1 // loop_pre_header
      _
    $region3: #{discriminator_forward.6} parent=1 // loop_header
      %s8 = sphi 0, %s12
      %p9 = scmp.ge.s32.totalorder %s8, 4
      %s15 = sphi 0, %s34
      %s16 = sphi 0, %s30
      %s17 = sphi 0, %s26
      %s18 = sphi 0, %s15
      %s19 = sphi 0, %s16
      %s20 = sphi 0, %s17
      %s21 = sphi 0, %s18
      %s22 = sphi 0, %s19
      %s23 = sphi 0, %s20
      %s39 = sphi 0, %s41
      %s42 = sphi 0, %s39
      %s43 = sphi 0, %s42
      %s59 = sphi 0, %s43
      %s67 = sphi 0, %s69
      %s70 = sphi 0, %s67
      %s71 = sphi 0, %s70
      %s87 = sphi 0, %s71
      %s95 = sphi 0, %s97
      %s98 = sphi 0, %s95
      %s99 = sphi 0, %s98
      %s115 = sphi 0, %s99
    $region4: #{discriminator_forward.6} parent=1 // loop_header_branch
      %11 = sbr.rel (%p9) target = $region8
    $region5: #{discriminator_forward.6} parent=1 // loop_body
      %s13 = ssub.s32 %s8, 1
      %s14 = ssub.s32 %s8, 2
      %s24 = sadd.s32 1, %s17
      %p25 = scmp.ge.s32.totalorder %s24, 2
      %s26 = scalar_select %p25, 0, %s24
      %s27 = sadd.s32 1, %s16
      %s28 = scalar_select %p25, %s27, %s16
      %p29 = scmp.ge.s32.totalorder %s28, 1
      %s30 = scalar_select %p29, 0, %s28
      %s31 = sadd.s32 1, %s15
      %s32 = scalar_select %p29, %s31, %s15
      %p33 = scmp.ge.s32.totalorder %s32, 1
      %s34 = scalar_select %p33, 0, %s32
      %s35 = ssub.s32 %s15, %s34
      %s36 = ssub.s32 %s17, %s26
      %s37 = sor.u32 %s35, %s36
      %p38 = scmp.eq.s32.totalorder %s37, 0
      %s40 = sadd.s32 %s39, 1
      %s41 = scalar_select %p38, %s39, %s40
      %p44 = pneg %p38
      %p45 = scmp.eq.s32.totalorder %s8, 1
      %p46 = por %p44, %p45
      %p47 = scmp.ne.s32.totalorder %s39, %s42
      %p48 = scmp.eq.s32.totalorder %s8, 0
      %p49 = por %p47, %p48
      %p50 = scmp.ne.s32.totalorder %s39, %s42
      %p51 = scmp.eq.s32.totalorder %s13, 1
      %p52 = por %p50, %p51
      %p53 = scmp.ne.s32.totalorder %s42, %s43
      %p54 = scmp.eq.s32.totalorder %s13, 0
      %p55 = por %p53, %p54
      %p56 = scmp.ne.s32.totalorder %s42, %s43
      %p57 = scmp.eq.s32.totalorder %s14, 1
      %p58 = por %p56, %p57
      %p60 = scmp.ne.s32.totalorder %s43, %s59
      %p61 = scmp.eq.s32.totalorder %s14, 0
      %p62 = por %p60, %p61
      %s63 = ssub.s32 %s17, %s26
      %s64 = ssub.s32 %s16, %s30
      %s65 = sor.u32 %s63, %s64
      %p66 = scmp.eq.s32.totalorder %s65, 0
      %s68 = sadd.s32 %s67, 1
      %s69 = scalar_select %p66, %s67, %s68
      %p72 = pneg %p66
      %p73 = scmp.eq.s32.totalorder %s8, 1
      %p74 = por %p72, %p73
      %p75 = scmp.ne.s32.totalorder %s67, %s70
      %p76 = scmp.eq.s32.totalorder %s8, 0
      %p77 = por %p75, %p76
      %p78 = scmp.ne.s32.totalorder %s67, %s70
      %p79 = scmp.eq.s32.totalorder %s13, 1
      %p80 = por %p78, %p79
      %p81 = scmp.ne.s32.totalorder %s70, %s71
      %p82 = scmp.eq.s32.totalorder %s13, 0
      %p83 = por %p81, %p82
      %p84 = scmp.ne.s32.totalorder %s70, %s71
      %p85 = scmp.eq.s32.totalorder %s14, 1
      %p86 = por %p84, %p85
      %p88 = scmp.ne.s32.totalorder %s71, %s87
      %p89 = scmp.eq.s32.totalorder %s14, 0
      %p90 = por %p88, %p89
      %s91 = ssub.s32 %s15, %s34
      %s92 = ssub.s32 %s16, %s30
      %s93 = sor.u32 %s91, %s92
      %p94 = scmp.eq.s32.totalorder %s93, 0
      %s96 = sadd.s32 %s95, 1
      %s97 = scalar_select %p94, %s95, %s96
      %p100 = pneg %p94
      %p101 = scmp.eq.s32.totalorder %s8, 1
      %p102 = por %p100, %p101
      %p103 = scmp.ne.s32.totalorder %s95, %s98
      %p104 = scmp.eq.s32.totalorder %s8, 0
      %p105 = por %p103, %p104
      %p106 = scmp.ne.s32.totalorder %s95, %s98
      %p107 = scmp.eq.s32.totalorder %s13, 1
      %p108 = por %p106, %p107
      %p109 = scmp.ne.s32.totalorder %s98, %s99
      %p110 = scmp.eq.s32.totalorder %s13, 0
      %p111 = por %p109, %p110
      %p112 = scmp.ne.s32.totalorder %s98, %s99
      %p113 = scmp.eq.s32.totalorder %s14, 1
      %p114 = por %p112, %p113
      %p116 = scmp.ne.s32.totalorder %s99, %s115
      %p117 = scmp.eq.s32.totalorder %s14, 0
      %p118 = por %p116, %p117
      %p119 = scmp.le.s32.totalorder 1, %s8
      %p120 = scmp.lt.s32.totalorder %s8, 3
      %p121 = pnand %p119, %p120
      %p122 = pneg %p121
      // Predicated region
      $region9: #{discriminator_forward.6} parent=5 // pred_check
        _
      $region10: #{discriminator_forward.6} parent=5 // pred_check_branch
        %124 = sbr.rel (%p121) target = $region12
      $region11: #{discriminator_forward.6} parent=5 // pred_region
        %s125 = ssub.s32 %s8, 1
      $region12: #{discriminator_forward.6} parent=5 // pred_fallthru
        _
      %p126 = scmp.lt.s32.totalorder %s8, 2
      // Predicated region
      $region13: #{discriminator_forward.6} parent=5 // pred_check
        %p127 = pneg %p126
      $region14: #{discriminator_forward.6} parent=5 // pred_check_branch
        %129 = sbr.rel (%p127) target = $region16
      $region15: #{discriminator_forward.6} parent=5 // pred_region
        // Predicated region
        $region17: #{discriminator_forward.6} parent=15 // pred_check
          %p130 = pneg %p49
        $region18: #{discriminator_forward.6} parent=15 // pred_check_branch
          %132 = sbr.rel (%p130) target = $region20
        $region19: #{discriminator_forward.6} parent=15 // pred_region
          %s133 = sand.u32 %s39, 1
          %s134 = sand.u32 %s39, 1
          %s135 = smul.addr %s134, 256
          %s136 = scalar_lea.vmem [#allocation3], %s135
          %s137 = smul.u32 16, %s15
          %s138 = smul.u32 4, %s17
          %s139 = smul.addr %s137, 8
          %s140 = sadd.s32 %s138, %s139
          %s141 = smul.addr %s140, 4
          %s142 = scalar_lea.vmem %s0, %s141
          // Predicated region
          $region21: #{discriminator_forward.6} parent=19 // pred_check
            _
          $region22: #{discriminator_forward.6} parent=19 // pred_check_branch
            %144 = sbr.rel (0) target = $region24
          $region23: #{discriminator_forward.6} parent=19 // pred_region
            // Predicated region
            $region25: #{discriminator_forward.6} parent=23 // pred_check
              _
            $region26: #{discriminator_forward.6} parent=23 // pred_check_branch
              %146 = sbr.rel (0) target = $region28
            $region27: #{discriminator_forward.6} parent=23 // pred_region
              loop: start=0, step=1, limit=1
              $region29: #{discriminator_forward.6} parent=27 // loop_pre_header
                _
              $region30: #{discriminator_forward.6} parent=27 // loop_header
                %s148 = sphi 0, %s152
                %p149 = scmp.ge.s32.totalorder %s148, 1
                %s153 = sphi %s142, %s142
                %s154 = sphi %s136, %s136
              $region31: #{discriminator_forward.6} parent=27 // loop_header_branch
                %151 = sbr.rel (%p149) target = $region35
              $region32: #{discriminator_forward.6} parent=27 // loop_body
                %v155 = vld [vmem:[%s153] sm:$0xff]
                %156 = vst [vmem:[%s154] sm:$0xff] %v155
                %v157 = vld [vmem:[%s153 + $0x8] sm:$0xff]
                %158 = vst [vmem:[%s154 + $0x8] sm:$0xff] %v157
                %v159 = vld [vmem:[%s153 + $0x20] sm:$0xff]
                %160 = vst [vmem:[%s154 + $0x10] sm:$0xff] %v159
                %v161 = vld [vmem:[%s153 + $0x28] sm:$0xff]
                %162 = vst [vmem:[%s154 + $0x18] sm:$0xff] %v161
                %v163 = vld [vmem:[%s153 + $0x40] sm:$0xff]
                %164 = vst [vmem:[%s154 + $0x20] sm:$0xff] %v163
                %v165 = vld [vmem:[%s153 + $0x48] sm:$0xff]
                %166 = vst [vmem:[%s154 + $0x28] sm:$0xff] %v165
                %v167 = vld [vmem:[%s153 + $0x60] sm:$0xff]
                %168 = vst [vmem:[%s154 + $0x30] sm:$0xff] %v167
                %v169 = vld [vmem:[%s153 + $0x68] sm:$0xff]
                %170 = vst [vmem:[%s154 + $0x38] sm:$0xff] %v169
                %v171 = vld [vmem:[%s153 + $0x80] sm:$0xff]
                %172 = vst [vmem:[%s154 + $0x40] sm:$0xff] %v171
                %v173 = vld [vmem:[%s153 + $0x88] sm:$0xff]
                %174 = vst [vmem:[%s154 + $0x48] sm:$0xff] %v173
                %v175 = vld [vmem:[%s153 + $0xa0] sm:$0xff]
                %176 = vst [vmem:[%s154 + $0x50] sm:$0xff] %v175
                %v177 = vld [vmem:[%s153 + $0xa8] sm:$0xff]
                %178 = vst [vmem:[%s154 + $0x58] sm:$0xff] %v177
                %v179 = vld [vmem:[%s153 + $0xc0] sm:$0xff]
                %180 = vst [vmem:[%s154 + $0x60] sm:$0xff] %v179
                %v181 = vld [vmem:[%s153 + $0xc8] sm:$0xff]
                %182 = vst [vmem:[%s154 + $0x68] sm:$0xff] %v181
                %v183 = vld [vmem:[%s153 + $0xe0] sm:$0xff]
                %184 = vst [vmem:[%s154 + $0x70] sm:$0xff] %v183
                %v185 = vld [vmem:[%s153 + $0xe8] sm:$0xff]
                %186 = vst [vmem:[%s154 + $0x78] sm:$0xff] %v185
                %v187 = vld [vmem:[%s153 + $0x100] sm:$0xff]
                %188 = vst [vmem:[%s154 + $0x80] sm:$0xff] %v187
                %v189 = vld [vmem:[%s153 + $0x108] sm:$0xff]
                %190 = vst [vmem:[%s154 + $0x88] sm:$0xff] %v189
                %v191 = vld [vmem:[%s153 + $0x120] sm:$0xff]
                %192 = vst [vmem:[%s154 + $0x90] sm:$0xff] %v191
                %v193 = vld [vmem:[%s153 + $0x128] sm:$0xff]
                %194 = vst [vmem:[%s154 + $0x98] sm:$0xff] %v193
                %v195 = vld [vmem:[%s153 + $0x140] sm:$0xff]
                %196 = vst [vmem:[%s154 + $0xa0] sm:$0xff] %v195
                %v197 = vld [vmem:[%s153 + $0x148] sm:$0xff]
                %198 = vst [vmem:[%s154 + $0xa8] sm:$0xff] %v197
                %v199 = vld [vmem:[%s153 + $0x160] sm:$0xff]
                %200 = vst [vmem:[%s154 + $0xb0] sm:$0xff] %v199
                %v201 = vld [vmem:[%s153 + $0x168] sm:$0xff]
                %202 = vst [vmem:[%s154 + $0xb8] sm:$0xff] %v201
                %v203 = vld [vmem:[%s153 + $0x180] sm:$0xff]
                %204 = vst [vmem:[%s154 + $0xc0] sm:$0xff] %v203
                %v205 = vld [vmem:[%s153 + $0x188] sm:$0xff]
                %206 = vst [vmem:[%s154 + $0xc8] sm:$0xff] %v205
                %v207 = vld [vmem:[%s153 + $0x1a0] sm:$0xff]
                %208 = vst [vmem:[%s154 + $0xd0] sm:$0xff] %v207
                %v209 = vld [vmem:[%s153 + $0x1a8] sm:$0xff]
                %210 = vst [vmem:[%s154 + $0xd8] sm:$0xff] %v209
                %v211 = vld [vmem:[%s153 + $0x1c0] sm:$0xff]
                %212 = vst [vmem:[%s154 + $0xe0] sm:$0xff] %v211
                %v213 = vld [vmem:[%s153 + $0x1c8] sm:$0xff]
                %214 = vst [vmem:[%s154 + $0xe8] sm:$0xff] %v213
                %v215 = vld [vmem:[%s153 + $0x1e0] sm:$0xff]
                %216 = vst [vmem:[%s154 + $0xf0] sm:$0xff] %v215
                %v217 = vld [vmem:[%s153 + $0x1e8] sm:$0xff]
                %218 = vst [vmem:[%s154 + $0xf8] sm:$0xff] %v217
              $region33: #{discriminator_forward.6} parent=27 // loop_footer
                %s152 = sadd.s32 1, %s148
              $region34: #{discriminator_forward.6} parent=27 // loop_footer_branch
                %147 = sbr.rel target = $region30
              $region35: #{discriminator_forward.6} parent=27 // loop_exit
                _
            $region28: #{discriminator_forward.6} parent=23 // pred_fallthru
              _
            // Predicated region
            $region36: #{discriminator_forward.6} parent=23 // pred_check
              _
            $region37: #{discriminator_forward.6} parent=23 // pred_check_branch
              %220 = sbr.rel target = $region39
            $region38: #{discriminator_forward.6} parent=23 // pred_region
              _
            $region39: #{discriminator_forward.6} parent=23 // pred_fallthru
              _
          $region24: #{discriminator_forward.6} parent=19 // pred_fallthru
            _
          %221 = vnop
        $region20: #{discriminator_forward.6} parent=15 // pred_fallthru
          _
        // Predicated region
        $region40: #{discriminator_forward.6} parent=15 // pred_check
          %p222 = pneg %p77
        $region41: #{discriminator_forward.6} parent=15 // pred_check_branch
          %224 = sbr.rel (%p222) target = $region43
        $region42: #{discriminator_forward.6} parent=15 // pred_region
          %s225 = smul.u32 64, %s17
          %p226 = scmp.lt.s32.totalorder %s225, 127
          %s227 = scalar_select %p226, %s225, 127
          %p228 = scmp.lt.s32.totalorder %s16, 0
          %s229 = scalar_select %p228, %s16, 0
          %s230 = sadd.s32 %s229, %s227
          %s231 = smul.addr %s230, 4
          %s232 = scalar_lea.vmem %s1, %s231
          %s233 = smul.u32 64, %s17
        $region43: #{discriminator_forward.6} parent=15 // pred_fallthru
          _
      $region16: #{discriminator_forward.6} parent=5 // pred_fallthru
        _
      %p234 = scmp.le.s32.totalorder 1, %s8
      %p235 = scmp.lt.s32.totalorder %s8, 3
      %p236 = pnand %p234, %p235
      %p237 = pneg %p236
      // Predicated region
      $region44: #{discriminator_forward.6} parent=5 // pred_check
        _
      $region45: #{discriminator_forward.6} parent=5 // pred_check_branch
        %239 = sbr.rel (%p236) target = $region47
      $region46: #{discriminator_forward.6} parent=5 // pred_region
        %s240 = ssub.s32 %s8, 1
        %s241 = sand.u32 %s42, 1
        %s242 = sand.u32 %s42, 1
        %s243 = smul.addr %s242, 256
        %s244 = scalar_lea.vmem [#allocation3], %s243
        // Predicated region
        $region48: #{discriminator_forward.6} parent=46 // pred_check
          %p245 = pneg %p55
        $region49: #{discriminator_forward.6} parent=46 // pred_check_branch
          %247 = sbr.rel (%p245) target = $region51
        $region50: #{discriminator_forward.6} parent=46 // pred_region
          _
        $region51: #{discriminator_forward.6} parent=46 // pred_fallthru
          _
        %s248 = sand.u32 %s42, 1
        %s249 = sand.u32 %s42, 1
        %s250 = smul.addr %s249, 256
        %s251 = scalar_lea.vmem [#allocation3], %s250
        %p252 = pneg %p55
        %p253 = pneg %p52
        %s254 = smul.u32 64, %s20
        %p255 = scmp.lt.s32.totalorder %s254, 127
        %s256 = scalar_select %p255, %s254, 127
        %p257 = scmp.lt.s32.totalorder %s19, 0
        %s258 = scalar_select %p257, %s19, 0
        %s259 = sadd.s32 %s258, %s256
        %s260 = smul.addr %s259, 4
        %s261 = scalar_lea.vmem %s1, %s260
        %p262 = pneg %p83
        %p263 = pneg %p80
        %p264 = pneg %p111
        %p265 = pneg %p108
        %s266 = smul.u32 16, %s18
        %p267 = scmp.lt.s32.totalorder %s266, 15
        %s268 = scalar_select %p267, %s266, 15
        %p269 = scmp.lt.s32.totalorder %s19, 0
        %s270 = scalar_select %p269, %s19, 0
        %s271 = sadd.s32 %s270, %s268
        %s272 = smul.addr %s271, 8
        %s273 = scalar_lea.vmem %s2, %s272
        %s274 = smul.u32 16, %s18
        %s275 = smul.u32 4, %s20
        %s276 = smul.u32 64, %s20
        %p277 = scmp.lt.s32.totalorder %s276, 127
        %s278 = scalar_select %p277, %s276, 127
        %p279 = scmp.lt.s32.totalorder %s19, 0
        %s280 = scalar_select %p279, %s19, 0
        %s281 = sadd.s32 %s280, %s278
        %s282 = smul.addr %s281, 4
        %s283 = scalar_lea.vmem %s1, %s282
        %s284 = smul.u32 64, %s20
        %s285 = smul.u32 16, %s18
        %p286 = scmp.lt.s32.totalorder %s285, 15
        %s287 = scalar_select %p286, %s285, 15
        %p288 = scmp.lt.s32.totalorder %s19, 0
        %s289 = scalar_select %p288, %s19, 0
        %s290 = sadd.s32 %s289, %s287
        %s291 = smul.addr %s290, 8
        %s292 = scalar_lea.vmem %s2, %s291
        %s293 = smul.u32 16, %s18
        %p295 = scmp.eq.s32.totalorder %s20, 0
        // Predicated region
        $region52: #{discriminator_forward.6} parent=46 // pred_check
          %p296 = pneg %p295
        $region53: #{discriminator_forward.6} parent=46 // pred_check_branch
          %298 = sbr.rel (%p296) target = $region55
        $region54: #{discriminator_forward.6} parent=46 // pred_region
          %299 = vst [vmem:[#allocation2] sm:$0xff] 0.0
          %300 = vst [vmem:[#allocation2 + $0x8] sm:$0xff] 0.0
          %301 = vst [vmem:[#allocation2 + $0x10] sm:$0xff] 0.0
          %302 = vst [vmem:[#allocation2 + $0x18] sm:$0xff] 0.0
          %303 = vst [vmem:[#allocation2 + $0x20] sm:$0xff] 0.0
          %304 = vst [vmem:[#allocation2 + $0x28] sm:$0xff] 0.0
          %305 = vst [vmem:[#allocation2 + $0x30] sm:$0xff] 0.0
          %306 = vst [vmem:[#allocation2 + $0x38] sm:$0xff] 0.0
          %307 = vst [vmem:[#allocation2 + $0x40] sm:$0xff] 0.0
          %308 = vst [vmem:[#allocation2 + $0x48] sm:$0xff] 0.0
          %309 = vst [vmem:[#allocation2 + $0x50] sm:$0xff] 0.0
          %310 = vst [vmem:[#allocation2 + $0x58] sm:$0xff] 0.0
          %311 = vst [vmem:[#allocation2 + $0x60] sm:$0xff] 0.0
          %312 = vst [vmem:[#allocation2 + $0x68] sm:$0xff] 0.0
          %313 = vst [vmem:[#allocation2 + $0x70] sm:$0xff] 0.0
          %314 = vst [vmem:[#allocation2 + $0x78] sm:$0xff] 0.0
        $region55: #{discriminator_forward.6} parent=46 // pred_fallthru
          _
        %v315 = vld [vmem:[#allocation2] sm:$0xff]
        %v316 = vld [vmem:[#allocation2 + $0x8] sm:$0xff]
        %v317 = vld [vmem:[#allocation2 + $0x10] sm:$0xff]
        %v318 = vld [vmem:[#allocation2 + $0x18] sm:$0xff]
        %v319 = vld [vmem:[#allocation2 + $0x20] sm:$0xff]
        %v320 = vld [vmem:[#allocation2 + $0x28] sm:$0xff]
        %v321 = vld [vmem:[#allocation2 + $0x30] sm:$0xff]
        %v322 = vld [vmem:[#allocation2 + $0x38] sm:$0xff]
        %v323 = vld [vmem:[#allocation2 + $0x40] sm:$0xff]
        %v324 = vld [vmem:[#allocation2 + $0x48] sm:$0xff]
        %v325 = vld [vmem:[#allocation2 + $0x50] sm:$0xff]
        %v326 = vld [vmem:[#allocation2 + $0x58] sm:$0xff]
        %v327 = vld [vmem:[#allocation2 + $0x60] sm:$0xff]
        %v328 = vld [vmem:[#allocation2 + $0x68] sm:$0xff]
        %v329 = vld [vmem:[#allocation2 + $0x70] sm:$0xff]
        %v330 = vld [vmem:[#allocation2 + $0x78] sm:$0xff]
        %v331 = vld [vmem:[%s244] sm:$0xff]
        %v332 = vld [vmem:[%s244 + $0x8] sm:$0xff]
        %v333 = vld [vmem:[%s244 + $0x10] sm:$0xff]
        %v334 = vld [vmem:[%s244 + $0x18] sm:$0xff]
        %v335 = vld [vmem:[%s244 + $0x20] sm:$0xff]
        %v336 = vld [vmem:[%s244 + $0x28] sm:$0xff]
        %v337 = vld [vmem:[%s244 + $0x30] sm:$0xff]
        %v338 = vld [vmem:[%s244 + $0x38] sm:$0xff]
        %v339 = vld [vmem:[%s244 + $0x40] sm:$0xff]
        %v340 = vld [vmem:[%s244 + $0x48] sm:$0xff]
        %v341 = vld [vmem:[%s244 + $0x50] sm:$0xff]
        %v342 = vld [vmem:[%s244 + $0x58] sm:$0xff]
        %v343 = vld [vmem:[%s244 + $0x60] sm:$0xff]
        %v344 = vld [vmem:[%s244 + $0x68] sm:$0xff]
        %v345 = vld [vmem:[%s244 + $0x70] sm:$0xff]
        %v346 = vld [vmem:[%s244 + $0x78] sm:$0xff]
        %v347 = vld [vmem:[%s244 + $0x80] sm:$0xff]
        %v348 = vld [vmem:[%s244 + $0x88] sm:$0xff]
        %v349 = vld [vmem:[%s244 + $0x90] sm:$0xff]
        %v350 = vld [vmem:[%s244 + $0x98] sm:$0xff]
        %v351 = vld [vmem:[%s244 + $0xa0] sm:$0xff]
        %v352 = vld [vmem:[%s244 + $0xa8] sm:$0xff]
        %v353 = vld [vmem:[%s244 + $0xb0] sm:$0xff]
        %v354 = vld [vmem:[%s244 + $0xb8] sm:$0xff]
        %v355 = vld [vmem:[%s244 + $0xc0] sm:$0xff]
        %v356 = vld [vmem:[%s244 + $0xc8] sm:$0xff]
        %v357 = vld [vmem:[%s244 + $0xd0] sm:$0xff]
        %v358 = vld [vmem:[%s244 + $0xd8] sm:$0xff]
        %v359 = vld [vmem:[%s244 + $0xe0] sm:$0xff]
        %v360 = vld [vmem:[%s244 + $0xe8] sm:$0xff]
        %v361 = vld [vmem:[%s244 + $0xf0] sm:$0xff]
        %v362 = vld [vmem:[%s244 + $0xf8] sm:$0xff]
        %v363 = vld [vmem:[%s283] sm:$0xf]
        %v364 = vld [vmem:[%s283 + $0x4] sm:$0xf]
        %v365 = vld [vmem:[%s283 + $0x8] sm:$0xf]
        %v366 = vld [vmem:[%s283 + $0xc] sm:$0xf]
        %v367 = vld [vmem:[%s283 + $0x10] sm:$0xf]
        %v368 = vld [vmem:[%s283 + $0x14] sm:$0xf]
        %v369 = vld [vmem:[%s283 + $0x18] sm:$0xf]
        %v370 = vld [vmem:[%s283 + $0x1c] sm:$0xf]
        %v371 = vld [vmem:[%s283 + $0x20] sm:$0xf]
        %v372 = vld [vmem:[%s283 + $0x24] sm:$0xf]
        %v373 = vld [vmem:[%s283 + $0x28] sm:$0xf]
        %v374 = vld [vmem:[%s283 + $0x2c] sm:$0xf]
        %v375 = vld [vmem:[%s283 + $0x30] sm:$0xf]
        %v376 = vld [vmem:[%s283 + $0x34] sm:$0xf]
        %v377 = vld [vmem:[%s283 + $0x38] sm:$0xf]
        %v378 = vld [vmem:[%s283 + $0x3c] sm:$0xf]
        %v379 = vld [vmem:[%s283 + $0x40] sm:$0xf]
        %v380 = vld [vmem:[%s283 + $0x44] sm:$0xf]
        %v381 = vld [vmem:[%s283 + $0x48] sm:$0xf]
        %v382 = vld [vmem:[%s283 + $0x4c] sm:$0xf]
        %v383 = vld [vmem:[%s283 + $0x50] sm:$0xf]
        %v384 = vld [vmem:[%s283 + $0x54] sm:$0xf]
        %v385 = vld [vmem:[%s283 + $0x58] sm:$0xf]
        %v386 = vld [vmem:[%s283 + $0x5c] sm:$0xf]
        %v387 = vld [vmem:[%s283 + $0x60] sm:$0xf]
        %v388 = vld [vmem:[%s283 + $0x64] sm:$0xf]
        %v389 = vld [vmem:[%s283 + $0x68] sm:$0xf]
        %v390 = vld [vmem:[%s283 + $0x6c] sm:$0xf]
        %v391 = vld [vmem:[%s283 + $0x70] sm:$0xf]
        %v392 = vld [vmem:[%s283 + $0x74] sm:$0xf]
        %v393 = vld [vmem:[%s283 + $0x78] sm:$0xf]
        %v394 = vld [vmem:[%s283 + $0x7c] sm:$0xf]
        %v395 = vld [vmem:[%s283 + $0x80] sm:$0xf]
        %v396 = vld [vmem:[%s283 + $0x84] sm:$0xf]
        %v397 = vld [vmem:[%s283 + $0x88] sm:$0xf]
        %v398 = vld [vmem:[%s283 + $0x8c] sm:$0xf]
        %v399 = vld [vmem:[%s283 + $0x90] sm:$0xf]
        %v400 = vld [vmem:[%s283 + $0x94] sm:$0xf]
        %v401 = vld [vmem:[%s283 + $0x98] sm:$0xf]
        %v402 = vld [vmem:[%s283 + $0x9c] sm:$0xf]
        %v403 = vld [vmem:[%s283 + $0xa0] sm:$0xf]
        %v404 = vld [vmem:[%s283 + $0xa4] sm:$0xf]
        %v405 = vld [vmem:[%s283 + $0xa8] sm:$0xf]
        %v406 = vld [vmem:[%s283 + $0xac] sm:$0xf]
        %v407 = vld [vmem:[%s283 + $0xb0] sm:$0xf]
        %v408 = vld [vmem:[%s283 + $0xb4] sm:$0xf]
        %v409 = vld [vmem:[%s283 + $0xb8] sm:$0xf]
        %v410 = vld [vmem:[%s283 + $0xbc] sm:$0xf]
        %v411 = vld [vmem:[%s283 + $0xc0] sm:$0xf]
        %v412 = vld [vmem:[%s283 + $0xc4] sm:$0xf]
        %v413 = vld [vmem:[%s283 + $0xc8] sm:$0xf]
        %v414 = vld [vmem:[%s283 + $0xcc] sm:$0xf]
        %v415 = vld [vmem:[%s283 + $0xd0] sm:$0xf]
        %v416 = vld [vmem:[%s283 + $0xd4] sm:$0xf]
        %v417 = vld [vmem:[%s283 + $0xd8] sm:$0xf]
        %v418 = vld [vmem:[%s283 + $0xdc] sm:$0xf]
        %v419 = vld [vmem:[%s283 + $0xe0] sm:$0xf]
        %v420 = vld [vmem:[%s283 + $0xe4] sm:$0xf]
        %v421 = vld [vmem:[%s283 + $0xe8] sm:$0xf]
        %v422 = vld [vmem:[%s283 + $0xec] sm:$0xf]
        %v423 = vld [vmem:[%s283 + $0xf0] sm:$0xf]
        %v424 = vld [vmem:[%s283 + $0xf4] sm:$0xf]
        %v425 = vld [vmem:[%s283 + $0xf8] sm:$0xf]
        %v426 = vld [vmem:[%s283 + $0xfc] sm:$0xf]
        %v459 = vunpack.c.l.b16 %v331
        %v460 = vunpack.c.h.b16 %v331
        %v461 = vunpack.c.l.b16 %v332
        %v462 = vunpack.c.h.b16 %v332
        %v463 = vunpack.c.l.b16 %v333
        %v464 = vunpack.c.h.b16 %v333
        %v465 = vunpack.c.l.b16 %v334
        %v466 = vunpack.c.h.b16 %v334
        %v467 = vunpack.c.l.b16 %v335
        %v468 = vunpack.c.h.b16 %v335
        %v469 = vunpack.c.l.b16 %v336
        %v470 = vunpack.c.h.b16 %v336
        %v471 = vunpack.c.l.b16 %v337
        %v472 = vunpack.c.h.b16 %v337
        %v473 = vunpack.c.l.b16 %v338
        %v474 = vunpack.c.h.b16 %v338
        %v475 = vunpack.c.l.b16 %v339
        %v476 = vunpack.c.h.b16 %v339
        %v477 = vunpack.c.l.b16 %v340
        %v478 = vunpack.c.h.b16 %v340
        %v479 = vunpack.c.l.b16 %v341
        %v480 = vunpack.c.h.b16 %v341
        %v481 = vunpack.c.l.b16 %v342
        %v482 = vunpack.c.h.b16 %v342
        %v483 = vunpack.c.l.b16 %v343
        %v484 = vunpack.c.h.b16 %v343
        %v485 = vunpack.c.l.b16 %v344
        %v486 = vunpack.c.h.b16 %v344
        %v487 = vunpack.c.l.b16 %v345
        %v488 = vunpack.c.h.b16 %v345
        %v489 = vunpack.c.l.b16 %v346
        %v490 = vunpack.c.h.b16 %v346
        %v491 = vunpack.c.l.b16 %v347
        %v492 = vunpack.c.h.b16 %v347
        %v493 = vunpack.c.l.b16 %v348
        %v494 = vunpack.c.h.b16 %v348
        %v495 = vunpack.c.l.b16 %v349
        %v496 = vunpack.c.h.b16 %v349
        %v497 = vunpack.c.l.b16 %v350
        %v498 = vunpack.c.h.b16 %v350
        %v499 = vunpack.c.l.b16 %v351
        %v500 = vunpack.c.h.b16 %v351
        %v501 = vunpack.c.l.b16 %v352
        %v502 = vunpack.c.h.b16 %v352
        %v503 = vunpack.c.l.b16 %v353
        %v504 = vunpack.c.h.b16 %v353
        %v505 = vunpack.c.l.b16 %v354
        %v506 = vunpack.c.h.b16 %v354
        %v507 = vunpack.c.l.b16 %v355
        %v508 = vunpack.c.h.b16 %v355
        %v509 = vunpack.c.l.b16 %v356
        %v510 = vunpack.c.h.b16 %v356
        %v511 = vunpack.c.l.b16 %v357
        %v512 = vunpack.c.h.b16 %v357
        %v513 = vunpack.c.l.b16 %v358
        %v514 = vunpack.c.h.b16 %v358
        %v515 = vunpack.c.l.b16 %v359
        %v516 = vunpack.c.h.b16 %v359
        %v517 = vunpack.c.l.b16 %v360
        %v518 = vunpack.c.h.b16 %v360
        %v519 = vunpack.c.l.b16 %v361
        %v520 = vunpack.c.h.b16 %v361
        %v521 = vunpack.c.l.b16 %v362
        %v522 = vunpack.c.h.b16 %v362
        %v523 = vpack.c.b16 %v463, %v459
        %v524 = vpack.c.b16 %v464, %v460
        %v525 = vpack.c.b16 %v465, %v461
        %v526 = vpack.c.b16 %v466, %v462
        %v527 = vpack.c.b16 %v471, %v467
        %v528 = vpack.c.b16 %v472, %v468
        %v529 = vpack.c.b16 %v473, %v469
        %v530 = vpack.c.b16 %v474, %v470
        %v531 = vpack.c.b16 %v479, %v475
        %v532 = vpack.c.b16 %v480, %v476
        %v533 = vpack.c.b16 %v481, %v477
        %v534 = vpack.c.b16 %v482, %v478
        %v535 = vpack.c.b16 %v487, %v483
        %v536 = vpack.c.b16 %v488, %v484
        %v537 = vpack.c.b16 %v489, %v485
        %v538 = vpack.c.b16 %v490, %v486
        %v539 = vpack.c.b16 %v495, %v491
        %v540 = vpack.c.b16 %v496, %v492
        %v541 = vpack.c.b16 %v497, %v493
        %v542 = vpack.c.b16 %v498, %v494
        %v543 = vpack.c.b16 %v503, %v499
        %v544 = vpack.c.b16 %v504, %v500
        %v545 = vpack.c.b16 %v505, %v501
        %v546 = vpack.c.b16 %v506, %v502
        %v547 = vpack.c.b16 %v511, %v507
        %v548 = vpack.c.b16 %v512, %v508
        %v549 = vpack.c.b16 %v513, %v509
        %v550 = vpack.c.b16 %v514, %v510
        %v551 = vpack.c.b16 %v519, %v515
        %v552 = vpack.c.b16 %v520, %v516
        %v553 = vpack.c.b16 %v521, %v517
        %v554 = vpack.c.b16 %v522, %v518
        %v651 = vunpack.c.l.b16 %v363
        %v652 = vunpack.c.l.b16 %v364
        %v653 = vunpack.c.l.b16 %v365
        %v654 = vunpack.c.l.b16 %v366
        %v655 = vunpack.c.l.b16 %v367
        %v656 = vunpack.c.l.b16 %v368
        %v657 = vunpack.c.l.b16 %v369
        %v658 = vunpack.c.l.b16 %v370
        %v659 = vunpack.c.l.b16 %v371
        %v660 = vunpack.c.l.b16 %v372
        %v661 = vunpack.c.l.b16 %v373
        %v662 = vunpack.c.l.b16 %v374
        %v663 = vunpack.c.l.b16 %v375
        %v664 = vunpack.c.l.b16 %v376
        %v665 = vunpack.c.l.b16 %v377
        %v666 = vunpack.c.l.b16 %v378
        %v667 = vunpack.c.l.b16 %v379
        %v668 = vunpack.c.l.b16 %v380
        %v669 = vunpack.c.l.b16 %v381
        %v670 = vunpack.c.l.b16 %v382
        %v671 = vunpack.c.l.b16 %v383
        %v672 = vunpack.c.l.b16 %v384
        %v673 = vunpack.c.l.b16 %v385
        %v674 = vunpack.c.l.b16 %v386
        %v675 = vunpack.c.l.b16 %v387
        %v676 = vunpack.c.l.b16 %v388
        %v677 = vunpack.c.l.b16 %v389
        %v678 = vunpack.c.l.b16 %v390
        %v679 = vunpack.c.l.b16 %v391
        %v680 = vunpack.c.l.b16 %v392
        %v681 = vunpack.c.l.b16 %v393
        %v682 = vunpack.c.l.b16 %v394
        %v683 = vunpack.c.l.b16 %v395
        %v684 = vunpack.c.l.b16 %v396
        %v685 = vunpack.c.l.b16 %v397
        %v686 = vunpack.c.l.b16 %v398
        %v687 = vunpack.c.l.b16 %v399
        %v688 = vunpack.c.l.b16 %v400
        %v689 = vunpack.c.l.b16 %v401
        %v690 = vunpack.c.l.b16 %v402
        %v691 = vunpack.c.l.b16 %v403
        %v692 = vunpack.c.l.b16 %v404
        %v693 = vunpack.c.l.b16 %v405
        %v694 = vunpack.c.l.b16 %v406
        %v695 = vunpack.c.l.b16 %v407
        %v696 = vunpack.c.l.b16 %v408
        %v697 = vunpack.c.l.b16 %v409
        %v698 = vunpack.c.l.b16 %v410
        %v699 = vunpack.c.l.b16 %v411
        %v700 = vunpack.c.l.b16 %v412
        %v701 = vunpack.c.l.b16 %v413
        %v702 = vunpack.c.l.b16 %v414
        %v703 = vunpack.c.l.b16 %v415
        %v704 = vunpack.c.l.b16 %v416
        %v705 = vunpack.c.l.b16 %v417
        %v706 = vunpack.c.l.b16 %v418
        %v707 = vunpack.c.l.b16 %v419
        %v708 = vunpack.c.l.b16 %v420
        %v709 = vunpack.c.l.b16 %v421
        %v710 = vunpack.c.l.b16 %v422
        %v711 = vunpack.c.l.b16 %v423
        %v712 = vunpack.c.l.b16 %v424
        %v713 = vunpack.c.l.b16 %v425
        %v714 = vunpack.c.l.b16 %v426
        %v715 = vpack.c.b16 %v652, %v651
        %v716 = vpack.c.b16 %v654, %v653
        %v717 = vpack.c.b16 %v656, %v655
        %v718 = vpack.c.b16 %v658, %v657
        %v719 = vpack.c.b16 %v660, %v659
        %v720 = vpack.c.b16 %v662, %v661
        %v721 = vpack.c.b16 %v664, %v663
        %v722 = vpack.c.b16 %v666, %v665
        %v723 = vpack.c.b16 %v668, %v667
        %v724 = vpack.c.b16 %v670, %v669
        %v725 = vpack.c.b16 %v672, %v671
        %v726 = vpack.c.b16 %v674, %v673
        %v727 = vpack.c.b16 %v676, %v675
        %v728 = vpack.c.b16 %v678, %v677
        %v729 = vpack.c.b16 %v680, %v679
        %v730 = vpack.c.b16 %v682, %v681
        %v731 = vpack.c.b16 %v684, %v683
        %v732 = vpack.c.b16 %v686, %v685
        %v733 = vpack.c.b16 %v688, %v687
        %v734 = vpack.c.b16 %v690, %v689
        %v735 = vpack.c.b16 %v692, %v691
        %v736 = vpack.c.b16 %v694, %v693
        %v737 = vpack.c.b16 %v696, %v695
        %v738 = vpack.c.b16 %v698, %v697
        %v739 = vpack.c.b16 %v700, %v699
        %v740 = vpack.c.b16 %v702, %v701
        %v741 = vpack.c.b16 %v704, %v703
        %v742 = vpack.c.b16 %v706, %v705
        %v743 = vpack.c.b16 %v708, %v707
        %v744 = vpack.c.b16 %v710, %v709
        %v745 = vpack.c.b16 %v712, %v711
        %v746 = vpack.c.b16 %v714, %v713
        %779 = vmatprep.subr.bf16.mxu0 0
        %780 = vmatpush1.bf16.msra.mxu0 %v715
        %781 = vmatprep.subr.bf16.mxu0 0
        %782 = vmatpush1.bf16.msra.mxu0 %v716
        %783 = vmatprep.subr.bf16.mxu0 0
        %784 = vmatpush1.bf16.msra.mxu0 %v717
        %785 = vmatprep.subr.bf16.mxu0 0
        %786 = vmatpush1.bf16.msra.mxu0 %v718
        %787 = vmatprep.subr.bf16.mxu0 0
        %788 = vmatpush1.bf16.msra.mxu0 %v719
        %789 = vmatprep.subr.bf16.mxu0 0
        %790 = vmatpush1.bf16.msra.mxu0 %v720
        %791 = vmatprep.subr.bf16.mxu0 0
        %792 = vmatpush1.bf16.msra.mxu0 %v721
        %793 = vmatprep.subr.bf16.mxu0 0
        %794 = vmatpush1.bf16.msra.mxu0 %v722
        %795 = vmatprep.subr.bf16.mxu0 0
        %796 = vmatpush1.bf16.msra.mxu0 %v723
        %797 = vmatprep.subr.bf16.mxu0 0
        %798 = vmatpush1.bf16.msra.mxu0 %v724
        %799 = vmatprep.subr.bf16.mxu0 0
        %800 = vmatpush1.bf16.msra.mxu0 %v725
        %801 = vmatprep.subr.bf16.mxu0 0
        %802 = vmatpush1.bf16.msra.mxu0 %v726
        %803 = vmatprep.subr.bf16.mxu0 0
        %804 = vmatpush1.bf16.msra.mxu0 %v727
        %805 = vmatprep.subr.bf16.mxu0 0
        %806 = vmatpush1.bf16.msra.mxu0 %v728
        %807 = vmatprep.subr.bf16.mxu0 0
        %808 = vmatpush1.bf16.msra.mxu0 %v729
        %809 = vmatprep.subr.bf16.mxu0 0
        %810 = vmatpush1.bf16.msra.mxu0 %v730
        %811 = vmatprep.mubr.bf16.mxu0 %v524
        %812 = vmatmul.mubr.bf16.gmra.mrb[0].mxu0 %v523
        %v813 = vpop.f32.mrb[0].mxu0
        %v814 = vadd.f32 0.0, %v813
        %v815 = vpop.f32.mrb[0].mxu0
        %v816 = vpop.f32.mrb[0].mxu0
        %v817 = vadd.f32 0.0, %v816
        %v818 = vpop.f32.mrb[0].mxu0
        %819 = vmatprep.mubr.bf16.mxu0 %v528
        %820 = vmatmul.mubr.bf16.gmra.mrb[0].mxu0 %v527
        %v821 = vpop.f32.mrb[0].mxu0
        %v822 = vadd.f32 0.0, %v821
        %v823 = vpop.f32.mrb[0].mxu0
        %v824 = vpop.f32.mrb[0].mxu0
        %v825 = vadd.f32 0.0, %v824
        %v826 = vpop.f32.mrb[0].mxu0
        %827 = vmatprep.mubr.bf16.mxu0 %v532
        %828 = vmatmul.mubr.bf16.gmra.mrb[0].mxu0 %v531
        %v829 = vpop.f32.mrb[0].mxu0
        %v830 = vadd.f32 0.0, %v829
        %v831 = vpop.f32.mrb[0].mxu0
        %v832 = vpop.f32.mrb[0].mxu0
        %v833 = vadd.f32 0.0, %v832
        %v834 = vpop.f32.mrb[0].mxu0
        %835 = vmatprep.mubr.bf16.mxu0 %v536
        %836 = vmatmul.mubr.bf16.gmra.mrb[0].mxu0 %v535
        %v837 = vpop.f32.mrb[0].mxu0
        %v838 = vadd.f32 0.0, %v837
        %v839 = vpop.f32.mrb[0].mxu0
        %v840 = vpop.f32.mrb[0].mxu0
        %v841 = vadd.f32 0.0, %v840
        %v842 = vpop.f32.mrb[0].mxu0
        %843 = vmatprep.mubr.bf16.mxu0 %v540
        %844 = vmatmul.mubr.bf16.gmra.mrb[0].mxu0 %v539
        %v845 = vpop.f32.mrb[0].mxu0
        %v846 = vadd.f32 0.0, %v845
        %v847 = vpop.f32.mrb[0].mxu0
        %v848 = vpop.f32.mrb[0].mxu0
        %v849 = vadd.f32 0.0, %v848
        %v850 = vpop.f32.mrb[0].mxu0
        %851 = vmatprep.mubr.bf16.mxu0 %v544
        %852 = vmatmul.mubr.bf16.gmra.mrb[0].mxu0 %v543
        %v853 = vpop.f32.mrb[0].mxu0
        %v854 = vadd.f32 0.0, %v853
        %v855 = vpop.f32.mrb[0].mxu0
        %v856 = vpop.f32.mrb[0].mxu0
        %v857 = vadd.f32 0.0, %v856
        %v858 = vpop.f32.mrb[0].mxu0
        %859 = vmatprep.mubr.bf16.mxu0 %v548
        %860 = vmatmul.mubr.bf16.gmra.mrb[0].mxu0 %v547
        %v861 = vpop.f32.mrb[0].mxu0
        %v862 = vadd.f32 0.0, %v861
        %v863 = vpop.f32.mrb[0].mxu0
        %v864 = vpop.f32.mrb[0].mxu0
        %v865 = vadd.f32 0.0, %v864
        %v866 = vpop.f32.mrb[0].mxu0
        %867 = vmatprep.mubr.bf16.mxu0 %v552
        %868 = vmatmul.mubr.bf16.gmra.mrb[0].mxu0 %v551
        %v869 = vpop.f32.mrb[0].mxu0
        %v870 = vadd.f32 0.0, %v869
        %v871 = vpop.f32.mrb[0].mxu0
        %v872 = vpop.f32.mrb[0].mxu0
        %v873 = vadd.f32 0.0, %v872
        %v874 = vpop.f32.mrb[0].mxu0
        %875 = vdwg.mxu0
        %876 = vmatprep.subr.bf16.mxu0 0
        %877 = vmatpush1.bf16.msra.mxu0 %v731
        %878 = vmatprep.subr.bf16.mxu0 0
        %879 = vmatpush1.bf16.msra.mxu0 %v732
        %880 = vmatprep.subr.bf16.mxu0 0
        %881 = vmatpush1.bf16.msra.mxu0 %v733
        %882 = vmatprep.subr.bf16.mxu0 0
        %883 = vmatpush1.bf16.msra.mxu0 %v734
        %884 = vmatprep.subr.bf16.mxu0 0
        %885 = vmatpush1.bf16.msra.mxu0 %v735
        %886 = vmatprep.subr.bf16.mxu0 0
        %887 = vmatpush1.bf16.msra.mxu0 %v736
        %888 = vmatprep.subr.bf16.mxu0 0
        %889 = vmatpush1.bf16.msra.mxu0 %v737
        %890 = vmatprep.subr.bf16.mxu0 0
        %891 = vmatpush1.bf16.msra.mxu0 %v738
        %892 = vmatprep.subr.bf16.mxu0 0
        %893 = vmatpush1.bf16.msra.mxu0 %v739
        %894 = vmatprep.subr.bf16.mxu0 0
        %895 = vmatpush1.bf16.msra.mxu0 %v740
        %896 = vmatprep.subr.bf16.mxu0 0
        %897 = vmatpush1.bf16.msra.mxu0 %v741
        %898 = vmatprep.subr.bf16.mxu0 0
        %899 = vmatpush1.bf16.msra.mxu0 %v742
        %900 = vmatprep.subr.bf16.mxu0 0
        %901 = vmatpush1.bf16.msra.mxu0 %v743
        %902 = vmatprep.subr.bf16.mxu0 0
        %903 = vmatpush1.bf16.msra.mxu0 %v744
        %904 = vmatprep.subr.bf16.mxu0 0
        %905 = vmatpush1.bf16.msra.mxu0 %v745
        %906 = vmatprep.subr.bf16.mxu0 0
        %907 = vmatpush1.bf16.msra.mxu0 %v746
        %908 = vmatprep.mubr.bf16.mxu0 %v526
        %909 = vmatmul.mubr.bf16.gmra.mrb[0].mxu0 %v525
        %v910 = vpop.f32.mrb[0].mxu0
        %v911 = vadd.f32 %v814, %v910
        %v912 = vpop.f32.mrb[0].mxu0
        %v913 = vpop.f32.mrb[0].mxu0
        %v914 = vadd.f32 %v817, %v913
        %v915 = vpop.f32.mrb[0].mxu0
        %916 = vmatprep.mubr.bf16.mxu0 %v530
        %917 = vmatmul.mubr.bf16.gmra.mrb[0].mxu0 %v529
        %v918 = vpop.f32.mrb[0].mxu0
        %v919 = vadd.f32 %v822, %v918
        %v920 = vpop.f32.mrb[0].mxu0
        %v921 = vpop.f32.mrb[0].mxu0
        %v922 = vadd.f32 %v825, %v921
        %v923 = vpop.f32.mrb[0].mxu0
        %924 = vmatprep.mubr.bf16.mxu0 %v534
        %925 = vmatmul.mubr.bf16.gmra.mrb[0].mxu0 %v533
        %v926 = vpop.f32.mrb[0].mxu0
        %v927 = vadd.f32 %v830, %v926
        %v928 = vpop.f32.mrb[0].mxu0
        %v929 = vpop.f32.mrb[0].mxu0
        %v930 = vadd.f32 %v833, %v929
        %v931 = vpop.f32.mrb[0].mxu0
        %932 = vmatprep.mubr.bf16.mxu0 %v538
        %933 = vmatmul.mubr.bf16.gmra.mrb[0].mxu0 %v537
        %v934 = vpop.f32.mrb[0].mxu0
        %v935 = vadd.f32 %v838, %v934
        %v936 = vpop.f32.mrb[0].mxu0
        %v937 = vpop.f32.mrb[0].mxu0
        %v938 = vadd.f32 %v841, %v937
        %v939 = vpop.f32.mrb[0].mxu0
        %940 = vmatprep.mubr.bf16.mxu0 %v542
        %941 = vmatmul.mubr.bf16.gmra.mrb[0].mxu0 %v541
        %v942 = vpop.f32.mrb[0].mxu0
        %v943 = vadd.f32 %v846, %v942
        %v944 = vpop.f32.mrb[0].mxu0
        %v945 = vpop.f32.mrb[0].mxu0
        %v946 = vadd.f32 %v849, %v945
        %v947 = vpop.f32.mrb[0].mxu0
        %948 = vmatprep.mubr.bf16.mxu0 %v546
        %949 = vmatmul.mubr.bf16.gmra.mrb[0].mxu0 %v545
        %v950 = vpop.f32.mrb[0].mxu0
        %v951 = vadd.f32 %v854, %v950
        %v952 = vpop.f32.mrb[0].mxu0
        %v953 = vpop.f32.mrb[0].mxu0
        %v954 = vadd.f32 %v857, %v953
        %v955 = vpop.f32.mrb[0].mxu0
        %956 = vmatprep.mubr.bf16.mxu0 %v550
        %957 = vmatmul.mubr.bf16.gmra.mrb[0].mxu0 %v549
        %v958 = vpop.f32.mrb[0].mxu0
        %v959 = vadd.f32 %v862, %v958
        %v960 = vpop.f32.mrb[0].mxu0
        %v961 = vpop.f32.mrb[0].mxu0
        %v962 = vadd.f32 %v865, %v961
        %v963 = vpop.f32.mrb[0].mxu0
        %964 = vmatprep.mubr.bf16.mxu0 %v554
        %965 = vmatmul.mubr.bf16.gmra.mrb[0].mxu0 %v553
        %v966 = vpop.f32.mrb[0].mxu0
        %v967 = vadd.f32 %v870, %v966
        %v968 = vpop.f32.mrb[0].mxu0
        %v969 = vpop.f32.mrb[0].mxu0
        %v970 = vadd.f32 %v873, %v969
        %v971 = vpop.f32.mrb[0].mxu0
        %972 = vdwg.mxu0
        %v973 = vadd.f32 %v315, %v911
        %v974 = vadd.f32 %v316, %v914
        %v975 = vadd.f32 %v317, %v919
        %v976 = vadd.f32 %v318, %v922
        %v977 = vadd.f32 %v319, %v927
        %v978 = vadd.f32 %v320, %v930
        %v979 = vadd.f32 %v321, %v935
        %v980 = vadd.f32 %v322, %v938
        %v981 = vadd.f32 %v323, %v943
        %v982 = vadd.f32 %v324, %v946
        %v983 = vadd.f32 %v325, %v951
        %v984 = vadd.f32 %v326, %v954
        %v985 = vadd.f32 %v327, %v959
        %v986 = vadd.f32 %v328, %v962
        %v987 = vadd.f32 %v329, %v967
        %v988 = vadd.f32 %v330, %v970
        %989 = vst [vmem:[#allocation2] sm:$0xff] %v973
        %990 = vst [vmem:[#allocation2 + $0x8] sm:$0xff] %v974
        %991 = vst [vmem:[#allocation2 + $0x10] sm:$0xff] %v975
        %992 = vst [vmem:[#allocation2 + $0x18] sm:$0xff] %v976
        %993 = vst [vmem:[#allocation2 + $0x20] sm:$0xff] %v977
        %994 = vst [vmem:[#allocation2 + $0x28] sm:$0xff] %v978
        %995 = vst [vmem:[#allocation2 + $0x30] sm:$0xff] %v979
        %996 = vst [vmem:[#allocation2 + $0x38] sm:$0xff] %v980
        %997 = vst [vmem:[#allocation2 + $0x40] sm:$0xff] %v981
        %998 = vst [vmem:[#allocation2 + $0x48] sm:$0xff] %v982
        %999 = vst [vmem:[#allocation2 + $0x50] sm:$0xff] %v983
        %1000 = vst [vmem:[#allocation2 + $0x58] sm:$0xff] %v984
        %1001 = vst [vmem:[#allocation2 + $0x60] sm:$0xff] %v985
        %1002 = vst [vmem:[#allocation2 + $0x68] sm:$0xff] %v986
        %1003 = vst [vmem:[#allocation2 + $0x70] sm:$0xff] %v987
        %1004 = vst [vmem:[#allocation2 + $0x78] sm:$0xff] %v988
        %p1005 = scmp.eq.s32.totalorder %s20, 1
        // Predicated region
        $region56: #{discriminator_forward.6} parent=46 // pred_check
          %p1006 = pneg %p1005
        $region57: #{discriminator_forward.6} parent=46 // pred_check_branch
          %1008 = sbr.rel (%p1006) target = $region59
        $region58: #{discriminator_forward.6} parent=46 // pred_region
          %v1009 = vld [vmem:[#allocation2] sm:$0xff]
          %v1010 = vld [vmem:[#allocation2 + $0x8] sm:$0xff]
          %v1011 = vld [vmem:[#allocation2 + $0x10] sm:$0xff]
          %v1012 = vld [vmem:[#allocation2 + $0x18] sm:$0xff]
          %v1013 = vld [vmem:[#allocation2 + $0x20] sm:$0xff]
          %v1014 = vld [vmem:[#allocation2 + $0x28] sm:$0xff]
          %v1015 = vld [vmem:[#allocation2 + $0x30] sm:$0xff]
          %v1016 = vld [vmem:[#allocation2 + $0x38] sm:$0xff]
          %v1017 = vld [vmem:[#allocation2 + $0x40] sm:$0xff]
          %v1018 = vld [vmem:[#allocation2 + $0x48] sm:$0xff]
          %v1019 = vld [vmem:[#allocation2 + $0x50] sm:$0xff]
          %v1020 = vld [vmem:[#allocation2 + $0x58] sm:$0xff]
          %v1021 = vld [vmem:[#allocation2 + $0x60] sm:$0xff]
          %v1022 = vld [vmem:[#allocation2 + $0x68] sm:$0xff]
          %v1023 = vld [vmem:[#allocation2 + $0x70] sm:$0xff]
          %v1024 = vld [vmem:[#allocation2 + $0x78] sm:$0xff]
          %vm1025 = vcmp.ge.f32.partialorder %v1009, 0.0
          %vm1026 = vcmp.ge.f32.partialorder %v1010, 0.0
          %vm1027 = vcmp.ge.f32.partialorder %v1011, 0.0
          %vm1028 = vcmp.ge.f32.partialorder %v1012, 0.0
          %vm1029 = vcmp.ge.f32.partialorder %v1013, 0.0
          %vm1030 = vcmp.ge.f32.partialorder %v1014, 0.0
          %vm1031 = vcmp.ge.f32.partialorder %v1015, 0.0
          %vm1032 = vcmp.ge.f32.partialorder %v1016, 0.0
          %vm1033 = vcmp.ge.f32.partialorder %v1017, 0.0
          %vm1034 = vcmp.ge.f32.partialorder %v1018, 0.0
          %vm1035 = vcmp.ge.f32.partialorder %v1019, 0.0
          %vm1036 = vcmp.ge.f32.partialorder %v1020, 0.0
          %vm1037 = vcmp.ge.f32.partialorder %v1021, 0.0
          %vm1038 = vcmp.ge.f32.partialorder %v1022, 0.0
          %vm1039 = vcmp.ge.f32.partialorder %v1023, 0.0
          %vm1040 = vcmp.ge.f32.partialorder %v1024, 0.0
          %v1041 = vmul.f32 %v1009, 0.2
          %v1042 = vmul.f32 %v1010, 0.2
          %v1043 = vmul.f32 %v1011, 0.2
          %v1044 = vmul.f32 %v1012, 0.2
          %v1045 = vmul.f32 %v1013, 0.2
          %v1046 = vmul.f32 %v1014, 0.2
          %v1047 = vmul.f32 %v1015, 0.2
          %v1048 = vmul.f32 %v1016, 0.2
          %v1049 = vmul.f32 %v1017, 0.2
          %v1050 = vmul.f32 %v1018, 0.2
          %v1051 = vmul.f32 %v1019, 0.2
          %v1052 = vmul.f32 %v1020, 0.2
          %v1053 = vmul.f32 %v1021, 0.2
          %v1054 = vmul.f32 %v1022, 0.2
          %v1055 = vmul.f32 %v1023, 0.2
          %v1056 = vmul.f32 %v1024, 0.2
          %v1057 = vsel %vm1025, %v1009, %v1041
          %v1058 = vsel %vm1026, %v1010, %v1042
          %v1059 = vsel %vm1027, %v1011, %v1043
          %v1060 = vsel %vm1028, %v1012, %v1044
          %v1061 = vsel %vm1029, %v1013, %v1045
          %v1062 = vsel %vm1030, %v1014, %v1046
          %v1063 = vsel %vm1031, %v1015, %v1047
          %v1064 = vsel %vm1032, %v1016, %v1048
          %v1065 = vsel %vm1033, %v1017, %v1049
          %v1066 = vsel %vm1034, %v1018, %v1050
          %v1067 = vsel %vm1035, %v1019, %v1051
          %v1068 = vsel %vm1036, %v1020, %v1052
          %v1069 = vsel %vm1037, %v1021, %v1053
          %v1070 = vsel %vm1038, %v1022, %v1054
          %v1071 = vsel %vm1039, %v1023, %v1055
          %v1072 = vsel %vm1040, %v1024, %v1056
          %1073 = vst [vmem:[%s292] sm:$0xff] %v1057
          %1074 = vst [vmem:[%s292 + $0x8] sm:$0xff] %v1058
          %1075 = vst [vmem:[%s292 + $0x10] sm:$0xff] %v1059
          %1076 = vst [vmem:[%s292 + $0x18] sm:$0xff] %v1060
          %1077 = vst [vmem:[%s292 + $0x20] sm:$0xff] %v1061
          %1078 = vst [vmem:[%s292 + $0x28] sm:$0xff] %v1062
          %1079 = vst [vmem:[%s292 + $0x30] sm:$0xff] %v1063
          %1080 = vst [vmem:[%s292 + $0x38] sm:$0xff] %v1064
          %1081 = vst [vmem:[%s292 + $0x40] sm:$0xff] %v1065
          %1082 = vst [vmem:[%s292 + $0x48] sm:$0xff] %v1066
          %1083 = vst [vmem:[%s292 + $0x50] sm:$0xff] %v1067
          %1084 = vst [vmem:[%s292 + $0x58] sm:$0xff] %v1068
          %1085 = vst [vmem:[%s292 + $0x60] sm:$0xff] %v1069
          %1086 = vst [vmem:[%s292 + $0x68] sm:$0xff] %v1070
          %1087 = vst [vmem:[%s292 + $0x70] sm:$0xff] %v1071
          %1088 = vst [vmem:[%s292 + $0x78] sm:$0xff] %v1072
        $region59: #{discriminator_forward.6} parent=46 // pred_fallthru
          _
        %s1089 = smul.u32 16, %s18
        %p1090 = scmp.lt.s32.totalorder %s1089, 15
        %s1091 = scalar_select %p1090, %s1089, 15
        %p1092 = scmp.lt.s32.totalorder %s19, 0
        %s1093 = scalar_select %p1092, %s19, 0
        %s1094 = sadd.s32 %s1093, %s1091
        %s1095 = smul.addr %s1094, 8
        %s1096 = scalar_lea.vmem %s2, %s1095
        // Predicated region
        $region60: #{discriminator_forward.6} parent=46 // pred_check
          %p1097 = pneg %p108
        $region61: #{discriminator_forward.6} parent=46 // pred_check_branch
          %1099 = sbr.rel (%p1097) target = $region63
        $region62: #{discriminator_forward.6} parent=46 // pred_region
          %s1100 = smul.u32 16, %s18
        $region63: #{discriminator_forward.6} parent=46 // pred_fallthru
          _
        // Predicated region
        $region64: #{discriminator_forward.6} parent=46 // pred_check
          %p1101 = pneg %p108
        $region65: #{discriminator_forward.6} parent=46 // pred_check_branch
          %1103 = sbr.rel (%p1101) target = $region67
        $region66: #{discriminator_forward.6} parent=46 // pred_region
          %s1104 = smul.u32 16, %s18
          %p1105 = scmp.lt.s32.totalorder %s1104, 15
          %s1106 = scalar_select %p1105, %s1104, 15
          %p1107 = scmp.lt.s32.totalorder %s19, 0
          %s1108 = scalar_select %p1107, %s19, 0
          %s1109 = sadd.s32 %s1108, %s1106
          %s1110 = smul.addr %s1109, 8
          %s1111 = scalar_lea.vmem %s2, %s1110
        $region67: #{discriminator_forward.6} parent=46 // pred_fallthru
          _
      $region47: #{discriminator_forward.6} parent=5 // pred_fallthru
        _
      %p1112 = scmp.le.s32.totalorder 2, %s8
      // Predicated region
      $region68: #{discriminator_forward.6} parent=5 // pred_check
        %p1113 = pneg %p1112
      $region69: #{discriminator_forward.6} parent=5 // pred_check_branch
        %1115 = sbr.rel (%p1113) target = $region71
      $region70: #{discriminator_forward.6} parent=5 // pred_region
        %s1116 = ssub.s32 %s8, 2
      $region71: #{discriminator_forward.6} parent=5 // pred_fallthru
        _
    $region6: #{discriminator_forward.6} parent=1 // loop_footer
      %s12 = sadd.s32 1, %s8
    $region7: #{discriminator_forward.6} parent=1 // loop_footer_branch
      %7 = sbr.rel target = $region3
    $region8: #{discriminator_forward.6} parent=1 // loop_exit
      _

// kernel: discriminator_forward.7
$region0: #{discriminator_forward.7}
  #allocation0 [shape = 'u32[]', space=smem, size = 0x4, offset = 0x4, fixed_abs, tag = 'smem constant byte address 0x4 - core index']
  #allocation1 [shape = 'u32[144,128]{1,0:T(1,128)}', space=vmem, size = 0x12000, scoped, tag = 'internal scratch']
  #allocation2 [shape = 'f32[32,256]{1,0:T(8,128)}', space=vmem, size = 0x8000, scoped, tag = 'scratch operand']
  %s0 = inlined_call_operand.vmem [shape: bf16[32,2048], index: 0, kind: input, shape index: {}]
  %s1 = inlined_call_operand.vmem [shape: bf16[2048,256], index: 1, kind: input, shape index: {}]
  %s2 = inlined_call_operand.vmem [shape: f32[32,256], index: 2, kind: output, shape index: {}]
  %s3 = sld [smem:[#allocation0]]
  $region72: #{discriminator_forward.7} parent=0
    _
  %s5 = ssub.s32 1, %s3
  %s6 = scalar_select 0, %s5, %s3
  $region1: #{discriminator_forward.7} parent=0
    #allocation3 [shape = 'u8[65536]{0}', space=vmem, size = 0x10000, scoped, tag = 'input window, operand 0']
    loop: start=0, step=1, limit=6
    $region2: #{discriminator_forward.7} parent=1 // loop_pre_header
      _
    $region3: #{discriminator_forward.7} parent=1 // loop_header
      %s8 = sphi 0, %s12
      %p9 = scmp.ge.s32.totalorder %s8, 6
      %s15 = sphi 0, %s34
      %s16 = sphi 0, %s30
      %s17 = sphi 0, %s26
      %s18 = sphi 0, %s15
      %s19 = sphi 0, %s16
      %s20 = sphi 0, %s17
      %s21 = sphi 0, %s18
      %s22 = sphi 0, %s19
      %s23 = sphi 0, %s20
      %s39 = sphi 0, %s41
      %s42 = sphi 0, %s39
      %s43 = sphi 0, %s42
      %s59 = sphi 0, %s43
      %s67 = sphi 0, %s69
      %s70 = sphi 0, %s67
      %s71 = sphi 0, %s70
      %s87 = sphi 0, %s71
      %s95 = sphi 0, %s97
      %s98 = sphi 0, %s95
      %s99 = sphi 0, %s98
      %s115 = sphi 0, %s99
    $region4: #{discriminator_forward.7} parent=1 // loop_header_branch
      %11 = sbr.rel (%p9) target = $region8
    $region5: #{discriminator_forward.7} parent=1 // loop_body
      %s13 = ssub.s32 %s8, 1
      %s14 = ssub.s32 %s8, 2
      %s24 = sadd.s32 1, %s17
      %p25 = scmp.ge.s32.totalorder %s24, 4
      %s26 = scalar_select %p25, 0, %s24
      %s27 = sadd.s32 1, %s16
      %s28 = scalar_select %p25, %s27, %s16
      %p29 = scmp.ge.s32.totalorder %s28, 1
      %s30 = scalar_select %p29, 0, %s28
      %s31 = sadd.s32 1, %s15
      %s32 = scalar_select %p29, %s31, %s15
      %p33 = scmp.ge.s32.totalorder %s32, 1
      %s34 = scalar_select %p33, 0, %s32
      %s35 = ssub.s32 %s15, %s34
      %s36 = ssub.s32 %s17, %s26
      %s37 = sor.u32 %s35, %s36
      %p38 = scmp.eq.s32.totalorder %s37, 0
      %s40 = sadd.s32 %s39, 1
      %s41 = scalar_select %p38, %s39, %s40
      %p44 = pneg %p38
      %p45 = scmp.eq.s32.totalorder %s8, 3
      %p46 = por %p44, %p45
      %p47 = scmp.ne.s32.totalorder %s39, %s42
      %p48 = scmp.eq.s32.totalorder %s8, 0
      %p49 = por %p47, %p48
      %p50 = scmp.ne.s32.totalorder %s39, %s42
      %p51 = scmp.eq.s32.totalorder %s13, 3
      %p52 = por %p50, %p51
      %p53 = scmp.ne.s32.totalorder %s42, %s43
      %p54 = scmp.eq.s32.totalorder %s13, 0
      %p55 = por %p53, %p54
      %p56 = scmp.ne.s32.totalorder %s42, %s43
      %p57 = scmp.eq.s32.totalorder %s14, 3
      %p58 = por %p56, %p57
      %p60 = scmp.ne.s32.totalorder %s43, %s59
      %p61 = scmp.eq.s32.totalorder %s14, 0
      %p62 = por %p60, %p61
      %s63 = ssub.s32 %s17, %s26
      %s64 = ssub.s32 %s16, %s30
      %s65 = sor.u32 %s63, %s64
      %p66 = scmp.eq.s32.totalorder %s65, 0
      %s68 = sadd.s32 %s67, 1
      %s69 = scalar_select %p66, %s67, %s68
      %p72 = pneg %p66
      %p73 = scmp.eq.s32.totalorder %s8, 3
      %p74 = por %p72, %p73
      %p75 = scmp.ne.s32.totalorder %s67, %s70
      %p76 = scmp.eq.s32.totalorder %s8, 0
      %p77 = por %p75, %p76
      %p78 = scmp.ne.s32.totalorder %s67, %s70
      %p79 = scmp.eq.s32.totalorder %s13, 3
      %p80 = por %p78, %p79
      %p81 = scmp.ne.s32.totalorder %s70, %s71
      %p82 = scmp.eq.s32.totalorder %s13, 0
      %p83 = por %p81, %p82
      %p84 = scmp.ne.s32.totalorder %s70, %s71
      %p85 = scmp.eq.s32.totalorder %s14, 3
      %p86 = por %p84, %p85
      %p88 = scmp.ne.s32.totalorder %s71, %s87
      %p89 = scmp.eq.s32.totalorder %s14, 0
      %p90 = por %p88, %p89
      %s91 = ssub.s32 %s15, %s34
      %s92 = ssub.s32 %s16, %s30
      %s93 = sor.u32 %s91, %s92
      %p94 = scmp.eq.s32.totalorder %s93, 0
      %s96 = sadd.s32 %s95, 1
      %s97 = scalar_select %p94, %s95, %s96
      %p100 = pneg %p94
      %p101 = scmp.eq.s32.totalorder %s8, 3
      %p102 = por %p100, %p101
      %p103 = scmp.ne.s32.totalorder %s95, %s98
      %p104 = scmp.eq.s32.totalorder %s8, 0
      %p105 = por %p103, %p104
      %p106 = scmp.ne.s32.totalorder %s95, %s98
      %p107 = scmp.eq.s32.totalorder %s13, 3
      %p108 = por %p106, %p107
      %p109 = scmp.ne.s32.totalorder %s98, %s99
      %p110 = scmp.eq.s32.totalorder %s13, 0
      %p111 = por %p109, %p110
      %p112 = scmp.ne.s32.totalorder %s98, %s99
      %p113 = scmp.eq.s32.totalorder %s14, 3
      %p114 = por %p112, %p113
      %p116 = scmp.ne.s32.totalorder %s99, %s115
      %p117 = scmp.eq.s32.totalorder %s14, 0
      %p118 = por %p116, %p117
      %p119 = scmp.le.s32.totalorder 1, %s8
      %p120 = scmp.lt.s32.totalorder %s8, 5
      %p121 = pnand %p119, %p120
      %p122 = pneg %p121
      // Predicated region
      $region9: #{discriminator_forward.7} parent=5 // pred_check
        _
      $region10: #{discriminator_forward.7} parent=5 // pred_check_branch
        %124 = sbr.rel (%p121) target = $region12
      $region11: #{discriminator_forward.7} parent=5 // pred_region
        %s125 = ssub.s32 %s8, 1
      $region12: #{discriminator_forward.7} parent=5 // pred_fallthru
        _
      %p126 = scmp.lt.s32.totalorder %s8, 4
      // Predicated region
      $region13: #{discriminator_forward.7} parent=5 // pred_check
        %p127 = pneg %p126
      $region14: #{discriminator_forward.7} parent=5 // pred_check_branch
        %129 = sbr.rel (%p127) target = $region16
      $region15: #{discriminator_forward.7} parent=5 // pred_region
        // Predicated region
        $region17: #{discriminator_forward.7} parent=15 // pred_check
          %p130 = pneg %p49
        $region18: #{discriminator_forward.7} parent=15 // pred_check_branch
          %132 = sbr.rel (%p130) target = $region20
        $region19: #{discriminator_forward.7} parent=15 // pred_region
          %s133 = sand.u32 %s39, 1
          %s134 = sand.u32 %s39, 1
          %s135 = smul.addr %s134, 64
          %s136 = scalar_lea.vmem [#allocation3], %s135
          %s137 = smul.u32 4, %s15
          %s138 = smul.u32 4, %s17
          %s139 = smul.addr %s137, 16
          %s140 = sadd.s32 %s138, %s139
          %s141 = smul.addr %s140, 4
          %s142 = scalar_lea.vmem %s0, %s141
          // Predicated region
          $region21: #{discriminator_forward.7} parent=19 // pred_check
            _
          $region22: #{discriminator_forward.7} parent=19 // pred_check_branch
            %144 = sbr.rel (0) target = $region24
          $region23: #{discriminator_forward.7} parent=19 // pred_region
            // Predicated region
            $region25: #{discriminator_forward.7} parent=23 // pred_check
              _
            $region26: #{discriminator_forward.7} parent=23 // pred_check_branch
              %146 = sbr.rel (0) target = $region28
            $region27: #{discriminator_forward.7} parent=23 // pred_region
              loop: start=0, step=1, limit=1
              $region29: #{discriminator_forward.7} parent=27 // loop_pre_header
                _
              $region30: #{discriminator_forward.7} parent=27 // loop_header
                %s148 = sphi 0, %s152
                %p149 = scmp.ge.s32.totalorder %s148, 1
                %s153 = sphi %s142, %s142
                %s154 = sphi %s136, %s136
              $region31: #{discriminator_forward.7} parent=27 // loop_header_branch
                %151 = sbr.rel (%p149) target = $region35
              $region32: #{discriminator_forward.7} parent=27 // loop_body
                %v155 = vld [vmem:[%s153] sm:$0xff]
                %156 = vst [vmem:[%s154] sm:$0xff] %v155
                %v157 = vld [vmem:[%s153 + $0x8] sm:$0xff]
                %158 = vst [vmem:[%s154 + $0x8] sm:$0xff] %v157
                %v159 = vld [vmem:[%s153 + $0x40] sm:$0xff]
                %160 = vst [vmem:[%s154 + $0x10] sm:$0xff] %v159
                %v161 = vld [vmem:[%s153 + $0x48] sm:$0xff]
                %162 = vst [vmem:[%s154 + $0x18] sm:$0xff] %v161
                %v163 = vld [vmem:[%s153 + $0x80] sm:$0xff]
                %164 = vst [vmem:[%s154 + $0x20] sm:$0xff] %v163
                %v165 = vld [vmem:[%s153 + $0x88] sm:$0xff]
                %166 = vst [vmem:[%s154 + $0x28] sm:$0xff] %v165
                %v167 = vld [vmem:[%s153 + $0xc0] sm:$0xff]
                %168 = vst [vmem:[%s154 + $0x30] sm:$0xff] %v167
                %v169 = vld [vmem:[%s153 + $0xc8] sm:$0xff]
                %170 = vst [vmem:[%s154 + $0x38] sm:$0xff] %v169
              $region33: #{discriminator_forward.7} parent=27 // loop_footer
                %s152 = sadd.s32 1, %s148
              $region34: #{discriminator_forward.7} parent=27 // loop_footer_branch
                %147 = sbr.rel target = $region30
              $region35: #{discriminator_forward.7} parent=27 // loop_exit
                _
            $region28: #{discriminator_forward.7} parent=23 // pred_fallthru
              _
            // Predicated region
            $region36: #{discriminator_forward.7} parent=23 // pred_check
              _
            $region37: #{discriminator_forward.7} parent=23 // pred_check_branch
              %172 = sbr.rel target = $region39
            $region38: #{discriminator_forward.7} parent=23 // pred_region
              _
            $region39: #{discriminator_forward.7} parent=23 // pred_fallthru
              _
          $region24: #{discriminator_forward.7} parent=19 // pred_fallthru
            _
          %173 = vnop
        $region20: #{discriminator_forward.7} parent=15 // pred_fallthru
          _
        // Predicated region
        $region40: #{discriminator_forward.7} parent=15 // pred_check
          %p174 = pneg %p77
        $region41: #{discriminator_forward.7} parent=15 // pred_check_branch
          %176 = sbr.rel (%p174) target = $region43
        $region42: #{discriminator_forward.7} parent=15 // pred_region
          %s177 = smul.u32 64, %s17
          %s178 = smul.u32 2, %s16
          %p179 = scmp.lt.s32.totalorder %s177, 255
          %s180 = scalar_select %p179, %s177, 255
          %p181 = scmp.lt.s32.totalorder %s178, 1
          %s182 = scalar_select %p181, %s178, 1
          %s183 = smul.addr %s180, 2
          %s184 = sadd.s32 %s182, %s183
          %s185 = smul.addr %s184, 4
          %s186 = scalar_lea.vmem %s1, %s185
          %s187 = smul.u32 64, %s17
          %s188 = smul.u32 2, %s16
        $region43: #{discriminator_forward.7} parent=15 // pred_fallthru
          _
      $region16: #{discriminator_forward.7} parent=5 // pred_fallthru
        _
      %p189 = scmp.le.s32.totalorder 1, %s8
      %p190 = scmp.lt.s32.totalorder %s8, 5
      %p191 = pnand %p189, %p190
      %p192 = pneg %p191
      // Predicated region
      $region44: #{discriminator_forward.7} parent=5 // pred_check
        _
      $region45: #{discriminator_forward.7} parent=5 // pred_check_branch
        %194 = sbr.rel (%p191) target = $region47
      $region46: #{discriminator_forward.7} parent=5 // pred_region
        %s195 = ssub.s32 %s8, 1
        %s196 = sand.u32 %s42, 1
        %s197 = sand.u32 %s42, 1
        %s198 = smul.addr %s197, 64
        %s199 = scalar_lea.vmem [#allocation3], %s198
        // Predicated region
        $region48: #{discriminator_forward.7} parent=46 // pred_check
          %p200 = pneg %p55
        $region49: #{discriminator_forward.7} parent=46 // pred_check_branch
          %202 = sbr.rel (%p200) target = $region51
        $region50: #{discriminator_forward.7} parent=46 // pred_region
          _
        $region51: #{discriminator_forward.7} parent=46 // pred_fallthru
          _
        %s203 = sand.u32 %s42, 1
        %s204 = sand.u32 %s42, 1
        %s205 = smul.addr %s204, 64
        %s206 = scalar_lea.vmem [#allocation3], %s205
        %p207 = pneg %p55
        %p208 = pneg %p52
        %s209 = smul.u32 64, %s20
        %s210 = smul.u32 2, %s19
        %p211 = scmp.lt.s32.totalorder %s209, 255
        %s212 = scalar_select %p211, %s209, 255
        %p213 = scmp.lt.s32.totalorder %s210, 1
        %s214 = scalar_select %p213, %s210, 1
        %s215 = smul.addr %s212, 2
        %s216 = sadd.s32 %s214, %s215
        %s217 = smul.addr %s216, 4
        %s218 = scalar_lea.vmem %s1, %s217
        %p219 = pneg %p83
        %p220 = pneg %p80
        %p221 = pneg %p111
        %p222 = pneg %p108
        %s223 = smul.u32 4, %s18
        %s224 = smul.u32 2, %s19
        %p225 = scmp.lt.s32.totalorder %s223, 3
        %s226 = scalar_select %p225, %s223, 3
        %p227 = scmp.lt.s32.totalorder %s224, 1
        %s228 = scalar_select %p227, %s224, 1
        %s229 = smul.addr %s226, 2
        %s230 = sadd.s32 %s228, %s229
        %s231 = smul.addr %s230, 8
        %s232 = scalar_lea.vmem %s2, %s231
        %s233 = smul.u32 4, %s18
        %s234 = smul.u32 4, %s20
        %s235 = smul.u32 64, %s20
        %s236 = smul.u32 2, %s19
        %p237 = scmp.lt.s32.totalorder %s235, 255
        %s238 = scalar_select %p237, %s235, 255
        %p239 = scmp.lt.s32.totalorder %s236, 1
        %s240 = scalar_select %p239, %s236, 1
        %s241 = smul.addr %s238, 2
        %s242 = sadd.s32 %s240, %s241
        %s243 = smul.addr %s242, 4
        %s244 = scalar_lea.vmem %s1, %s243
        %s245 = smul.u32 64, %s20
        %s246 = smul.u32 2, %s19
        %s247 = smul.u32 4, %s18
        %s248 = smul.u32 2, %s19
        %p249 = scmp.lt.s32.totalorder %s247, 3
        %s250 = scalar_select %p249, %s247, 3
        %p251 = scmp.lt.s32.totalorder %s248, 1
        %s252 = scalar_select %p251, %s248, 1
        %s253 = smul.addr %s250, 2
        %s254 = sadd.s32 %s252, %s253
        %s255 = smul.addr %s254, 8
        %s256 = scalar_lea.vmem %s2, %s255
        %s257 = smul.u32 4, %s18
        %s258 = smul.u32 2, %s19
        %p259 = scmp.eq.s32.totalorder %s20, 0
        // Predicated region
        $region52: #{discriminator_forward.7} parent=46 // pred_check
          %p260 = pneg %p259
        $region53: #{discriminator_forward.7} parent=46 // pred_check_branch
          %262 = sbr.rel (%p260) target = $region55
        $region54: #{discriminator_forward.7} parent=46 // pred_region
          %263 = vst [vmem:[#allocation2] sm:$0xff] 0.0
          %264 = vst [vmem:[#allocation2 + $0x8] sm:$0xff] 0.0
          %265 = vst [vmem:[#allocation2 + $0x10] sm:$0xff] 0.0
          %266 = vst [vmem:[#allocation2 + $0x18] sm:$0xff] 0.0
          %267 = vst [vmem:[#allocation2 + $0x20] sm:$0xff] 0.0
          %268 = vst [vmem:[#allocation2 + $0x28] sm:$0xff] 0.0
          %269 = vst [vmem:[#allocation2 + $0x30] sm:$0xff] 0.0
          %270 = vst [vmem:[#allocation2 + $0x38] sm:$0xff] 0.0
        $region55: #{discriminator_forward.7} parent=46 // pred_fallthru
          _
        %v271 = vld [vmem:[#allocation2] sm:$0xff]
        %v272 = vld [vmem:[#allocation2 + $0x8] sm:$0xff]
        %v273 = vld [vmem:[#allocation2 + $0x10] sm:$0xff]
        %v274 = vld [vmem:[#allocation2 + $0x18] sm:$0xff]
        %v275 = vld [vmem:[#allocation2 + $0x20] sm:$0xff]
        %v276 = vld [vmem:[#allocation2 + $0x28] sm:$0xff]
        %v277 = vld [vmem:[#allocation2 + $0x30] sm:$0xff]
        %v278 = vld [vmem:[#allocation2 + $0x38] sm:$0xff]
        %v279 = vld [vmem:[%s199] sm:$0xff]
        %v280 = vld [vmem:[%s199 + $0x8] sm:$0xff]
        %v281 = vld [vmem:[%s199 + $0x10] sm:$0xff]
        %v282 = vld [vmem:[%s199 + $0x18] sm:$0xff]
        %v283 = vld [vmem:[%s199 + $0x20] sm:$0xff]
        %v284 = vld [vmem:[%s199 + $0x28] sm:$0xff]
        %v285 = vld [vmem:[%s199 + $0x30] sm:$0xff]
        %v286 = vld [vmem:[%s199 + $0x38] sm:$0xff]
        %v287 = vld [vmem:[%s244] sm:$0xff]
        %v288 = vld [vmem:[%s244 + $0x8] sm:$0xff]
        %v289 = vld [vmem:[%s244 + $0x10] sm:$0xff]
        %v290 = vld [vmem:[%s244 + $0x18] sm:$0xff]
        %v291 = vld [vmem:[%s244 + $0x20] sm:$0xff]
        %v292 = vld [vmem:[%s244 + $0x28] sm:$0xff]
        %v293 = vld [vmem:[%s244 + $0x30] sm:$0xff]
        %v294 = vld [vmem:[%s244 + $0x38] sm:$0xff]
        %v295 = vld [vmem:[%s244 + $0x40] sm:$0xff]
        %v296 = vld [vmem:[%s244 + $0x48] sm:$0xff]
        %v297 = vld [vmem:[%s244 + $0x50] sm:$0xff]
        %v298 = vld [vmem:[%s244 + $0x58] sm:$0xff]
        %v299 = vld [vmem:[%s244 + $0x60] sm:$0xff]
        %v300 = vld [vmem:[%s244 + $0x68] sm:$0xff]
        %v301 = vld [vmem:[%s244 + $0x70] sm:$0xff]
        %v302 = vld [vmem:[%s244 + $0x78] sm:$0xff]
        %v303 = vld [vmem:[%s244 + $0x80] sm:$0xff]
        %v304 = vld [vmem:[%s244 + $0x88] sm:$0xff]
        %v305 = vld [vmem:[%s244 + $0x90] sm:$0xff]
        %v306 = vld [vmem:[%s244 + $0x98] sm:$0xff]
        %v307 = vld [vmem:[%s244 + $0xa0] sm:$0xff]
        %v308 = vld [vmem:[%s244 + $0xa8] sm:$0xff]
        %v309 = vld [vmem:[%s244 + $0xb0] sm:$0xff]
        %v310 = vld [vmem:[%s244 + $0xb8] sm:$0xff]
        %v311 = vld [vmem:[%s244 + $0xc0] sm:$0xff]
        %v312 = vld [vmem:[%s244 + $0xc8] sm:$0xff]
        %v313 = vld [vmem:[%s244 + $0xd0] sm:$0xff]
        %v314 = vld [vmem:[%s244 + $0xd8] sm:$0xff]
        %v315 = vld [vmem:[%s244 + $0xe0] sm:$0xff]
        %v316 = vld [vmem:[%s244 + $0xe8] sm:$0xff]
        %v317 = vld [vmem:[%s244 + $0xf0] sm:$0xff]
        %v318 = vld [vmem:[%s244 + $0xf8] sm:$0xff]
        %v319 = vld [vmem:[%s244 + $0x100] sm:$0xff]
        %v320 = vld [vmem:[%s244 + $0x108] sm:$0xff]
        %v321 = vld [vmem:[%s244 + $0x110] sm:$0xff]
        %v322 = vld [vmem:[%s244 + $0x118] sm:$0xff]
        %v323 = vld [vmem:[%s244 + $0x120] sm:$0xff]
        %v324 = vld [vmem:[%s244 + $0x128] sm:$0xff]
        %v325 = vld [vmem:[%s244 + $0x130] sm:$0xff]
        %v326 = vld [vmem:[%s244 + $0x138] sm:$0xff]
        %v327 = vld [vmem:[%s244 + $0x140] sm:$0xff]
        %v328 = vld [vmem:[%s244 + $0x148] sm:$0xff]
        %v329 = vld [vmem:[%s244 + $0x150] sm:$0xff]
        %v330 = vld [vmem:[%s244 + $0x158] sm:$0xff]
        %v331 = vld [vmem:[%s244 + $0x160] sm:$0xff]
        %v332 = vld [vmem:[%s244 + $0x168] sm:$0xff]
        %v333 = vld [vmem:[%s244 + $0x170] sm:$0xff]
        %v334 = vld [vmem:[%s244 + $0x178] sm:$0xff]
        %v335 = vld [vmem:[%s244 + $0x180] sm:$0xff]
        %v336 = vld [vmem:[%s244 + $0x188] sm:$0xff]
        %v337 = vld [vmem:[%s244 + $0x190] sm:$0xff]
        %v338 = vld [vmem:[%s244 + $0x198] sm:$0xff]
        %v339 = vld [vmem:[%s244 + $0x1a0] sm:$0xff]
        %v340 = vld [vmem:[%s244 + $0x1a8] sm:$0xff]
        %v341 = vld [vmem:[%s244 + $0x1b0] sm:$0xff]
        %v342 = vld [vmem:[%s244 + $0x1b8] sm:$0xff]
        %v343 = vld [vmem:[%s244 + $0x1c0] sm:$0xff]
        %v344 = vld [vmem:[%s244 + $0x1c8] sm:$0xff]
        %v345 = vld [vmem:[%s244 + $0x1d0] sm:$0xff]
        %v346 = vld [vmem:[%s244 + $0x1d8] sm:$0xff]
        %v347 = vld [vmem:[%s244 + $0x1e0] sm:$0xff]
        %v348 = vld [vmem:[%s244 + $0x1e8] sm:$0xff]
        %v349 = vld [vmem:[%s244 + $0x1f0] sm:$0xff]
        %v350 = vld [vmem:[%s244 + $0x1f8] sm:$0xff]
        %v359 = vunpack.c.l.b16 %v279
        %v360 = vunpack.c.h.b16 %v279
        %v361 = vunpack.c.l.b16 %v280
        %v362 = vunpack.c.h.b16 %v280
        %v363 = vunpack.c.l.b16 %v281
        %v364 = vunpack.c.h.b16 %v281
        %v365 = vunpack.c.l.b16 %v282
        %v366 = vunpack.c.h.b16 %v282
        %v367 = vunpack.c.l.b16 %v283
        %v368 = vunpack.c.h.b16 %v283
        %v369 = vunpack.c.l.b16 %v284
        %v370 = vunpack.c.h.b16 %v284
        %v371 = vunpack.c.l.b16 %v285
        %v372 = vunpack.c.h.b16 %v285
        %v373 = vunpack.c.l.b16 %v286
        %v374 = vunpack.c.h.b16 %v286
        %v375 = vpack.c.b16 %v363, %v359
        %v376 = vpack.c.b16 %v364, %v360
        %v377 = vpack.c.b16 %v365, %v361
        %v378 = vpack.c.b16 %v366, %v362
        %v379 = vpack.c.b16 %v371, %v367
        %v380 = vpack.c.b16 %v372, %v368
        %v381 = vpack.c.b16 %v373, %v369
        %v382 = vpack.c.b16 %v374, %v370
        %v455 = vunpack.c.l.b16 %v287
        %v456 = vunpack.c.h.b16 %v287
        %v457 = vunpack.c.l.b16 %v288
        %v458 = vunpack.c.h.b16 %v288
        %v459 = vunpack.c.l.b16 %v289
        %v460 = vunpack.c.h.b16 %v289
        %v461 = vunpack.c.l.b16 %v290
        %v462 = vunpack.c.h.b16 %v290
        %v463 = vunpack.c.l.b16 %v291
        %v464 = vunpack.c.h.b16 %v291
        %v465 = vunpack.c.l.b16 %v292
        %v466 = vunpack.c.h.b16 %v292
        %v467 = vunpack.c.l.b16 %v293
        %v468 = vunpack.c.h.b16 %v293
        %v469 = vunpack.c.l.b16 %v294
        %v470 = vunpack.c.h.b16 %v294
        %v471 = vunpack.c.l.b16 %v295
        %v472 = vunpack.c.h.b16 %v295
        %v473 = vunpack.c.l.b16 %v296
        %v474 = vunpack.c.h.b16 %v296
        %v475 = vunpack.c.l.b16 %v297
        %v476 = vunpack.c.h.b16 %v297
        %v477 = vunpack.c.l.b16 %v298
        %v478 = vunpack.c.h.b16 %v298
        %v479 = vunpack.c.l.b16 %v299
        %v480 = vunpack.c.h.b16 %v299
        %v481 = vunpack.c.l.b16 %v300
        %v482 = vunpack.c.h.b16 %v300
        %v483 = vunpack.c.l.b16 %v301
        %v484 = vunpack.c.h.b16 %v301
        %v485 = vunpack.c.l.b16 %v302
        %v486 = vunpack.c.h.b16 %v302
        %v487 = vunpack.c.l.b16 %v303
        %v488 = vunpack.c.h.b16 %v303
        %v489 = vunpack.c.l.b16 %v304
        %v490 = vunpack.c.h.b16 %v304
        %v491 = vunpack.c.l.b16 %v305
        %v492 = vunpack.c.h.b16 %v305
        %v493 = vunpack.c.l.b16 %v306
        %v494 = vunpack.c.h.b16 %v306
        %v495 = vunpack.c.l.b16 %v307
        %v496 = vunpack.c.h.b16 %v307
        %v497 = vunpack.c.l.b16 %v308
        %v498 = vunpack.c.h.b16 %v308
        %v499 = vunpack.c.l.b16 %v309
        %v500 = vunpack.c.h.b16 %v309
        %v501 = vunpack.c.l.b16 %v310
        %v502 = vunpack.c.h.b16 %v310
        %v503 = vunpack.c.l.b16 %v311
        %v504 = vunpack.c.h.b16 %v311
        %v505 = vunpack.c.l.b16 %v312
        %v506 = vunpack.c.h.b16 %v312
        %v507 = vunpack.c.l.b16 %v313
        %v508 = vunpack.c.h.b16 %v313
        %v509 = vunpack.c.l.b16 %v314
        %v510 = vunpack.c.h.b16 %v314
        %v511 = vunpack.c.l.b16 %v315
        %v512 = vunpack.c.h.b16 %v315
        %v513 = vunpack.c.l.b16 %v316
        %v514 = vunpack.c.h.b16 %v316
        %v515 = vunpack.c.l.b16 %v317
        %v516 = vunpack.c.h.b16 %v317
        %v517 = vunpack.c.l.b16 %v318
        %v518 = vunpack.c.h.b16 %v318
        %v519 = vunpack.c.l.b16 %v319
        %v520 = vunpack.c.h.b16 %v319
        %v521 = vunpack.c.l.b16 %v320
        %v522 = vunpack.c.h.b16 %v320
        %v523 = vunpack.c.l.b16 %v321
        %v524 = vunpack.c.h.b16 %v321
        %v525 = vunpack.c.l.b16 %v322
        %v526 = vunpack.c.h.b16 %v322
        %v527 = vunpack.c.l.b16 %v323
        %v528 = vunpack.c.h.b16 %v323
        %v529 = vunpack.c.l.b16 %v324
        %v530 = vunpack.c.h.b16 %v324
        %v531 = vunpack.c.l.b16 %v325
        %v532 = vunpack.c.h.b16 %v325
        %v533 = vunpack.c.l.b16 %v326
        %v534 = vunpack.c.h.b16 %v326
        %v535 = vunpack.c.l.b16 %v327
        %v536 = vunpack.c.h.b16 %v327
        %v537 = vunpack.c.l.b16 %v328
        %v538 = vunpack.c.h.b16 %v328
        %v539 = vunpack.c.l.b16 %v329
        %v540 = vunpack.c.h.b16 %v329
        %v541 = vunpack.c.l.b16 %v330
        %v542 = vunpack.c.h.b16 %v330
        %v543 = vunpack.c.l.b16 %v331
        %v544 = vunpack.c.h.b16 %v331
        %v545 = vunpack.c.l.b16 %v332
        %v546 = vunpack.c.h.b16 %v332
        %v547 = vunpack.c.l.b16 %v333
        %v548 = vunpack.c.h.b16 %v333
        %v549 = vunpack.c.l.b16 %v334
        %v550 = vunpack.c.h.b16 %v334
        %v551 = vunpack.c.l.b16 %v335
        %v552 = vunpack.c.h.b16 %v335
        %v553 = vunpack.c.l.b16 %v336
        %v554 = vunpack.c.h.b16 %v336
        %v555 = vunpack.c.l.b16 %v337
        %v556 = vunpack.c.h.b16 %v337
        %v557 = vunpack.c.l.b16 %v338
        %v558 = vunpack.c.h.b16 %v338
        %v559 = vunpack.c.l.b16 %v339
        %v560 = vunpack.c.h.b16 %v339
        %v561 = vunpack.c.l.b16 %v340
        %v562 = vunpack.c.h.b16 %v340
        %v563 = vunpack.c.l.b16 %v341
        %v564 = vunpack.c.h.b16 %v341
        %v565 = vunpack.c.l.b16 %v342
        %v566 = vunpack.c.h.b16 %v342
        %v567 = vunpack.c.l.b16 %v343
        %v568 = vunpack.c.h.b16 %v343
        %v569 = vunpack.c.l.b16 %v344
        %v570 = vunpack.c.h.b16 %v344
        %v571 = vunpack.c.l.b16 %v345
        %v572 = vunpack.c.h.b16 %v345
        %v573 = vunpack.c.l.b16 %v346
        %v574 = vunpack.c.h.b16 %v346
        %v575 = vunpack.c.l.b16 %v347
        %v576 = vunpack.c.h.b16 %v347
        %v577 = vunpack.c.l.b16 %v348
        %v578 = vunpack.c.h.b16 %v348
        %v579 = vunpack.c.l.b16 %v349
        %v580 = vunpack.c.h.b16 %v349
        %v581 = vunpack.c.l.b16 %v350
        %v582 = vunpack.c.h.b16 %v350
        %v583 = vpack.c.b16 %v457, %v455
        %v584 = vpack.c.b16 %v458, %v456
        %v585 = vpack.c.b16 %v461, %v459
        %v586 = vpack.c.b16 %v462, %v460
        %v587 = vpack.c.b16 %v465, %v463
        %v588 = vpack.c.b16 %v466, %v464
        %v589 = vpack.c.b16 %v469, %v467
        %v590 = vpack.c.b16 %v470, %v468
        %v591 = vpack.c.b16 %v473, %v471
        %v592 = vpack.c.b16 %v474, %v472
        %v593 = vpack.c.b16 %v477, %v475
        %v594 = vpack.c.b16 %v478, %v476
        %v595 = vpack.c.b16 %v481, %v479
        %v596 = vpack.c.b16 %v482, %v480
        %v597 = vpack.c.b16 %v485, %v483
        %v598 = vpack.c.b16 %v486, %v484
        %v599 = vpack.c.b16 %v489, %v487
        %v600 = vpack.c.b16 %v490, %v488
        %v601 = vpack.c.b16 %v493, %v491
        %v602 = vpack.c.b16 %v494, %v492
        %v603 = vpack.c.b16 %v497, %v495
        %v604 = vpack.c.b16 %v498, %v496
        %v605 = vpack.c.b16 %v501, %v499
        %v606 = vpack.c.b16 %v502, %v500
        %v607 = vpack.c.b16 %v505, %v503
        %v608 = vpack.c.b16 %v506, %v504
        %v609 = vpack.c.b16 %v509, %v507
        %v610 = vpack.c.b16 %v510, %v508
        %v611 = vpack.c.b16 %v513, %v511
        %v612 = vpack.c.b16 %v514, %v512
        %v613 = vpack.c.b16 %v517, %v515
        %v614 = vpack.c.b16 %v518, %v516
        %v615 = vpack.c.b16 %v521, %v519
        %v616 = vpack.c.b16 %v522, %v520
        %v617 = vpack.c.b16 %v525, %v523
        %v618 = vpack.c.b16 %v526, %v524
        %v619 = vpack.c.b16 %v529, %v527
        %v620 = vpack.c.b16 %v530, %v528
        %v621 = vpack.c.b16 %v533, %v531
        %v622 = vpack.c.b16 %v534, %v532
        %v623 = vpack.c.b16 %v537, %v535
        %v624 = vpack.c.b16 %v538, %v536
        %v625 = vpack.c.b16 %v541, %v539
        %v626 = vpack.c.b16 %v542, %v540
        %v627 = vpack.c.b16 %v545, %v543
        %v628 = vpack.c.b16 %v546, %v544
        %v629 = vpack.c.b16 %v549, %v547
        %v630 = vpack.c.b16 %v550, %v548
        %v631 = vpack.c.b16 %v553, %v551
        %v632 = vpack.c.b16 %v554, %v552
        %v633 = vpack.c.b16 %v557, %v555
        %v634 = vpack.c.b16 %v558, %v556
        %v635 = vpack.c.b16 %v561, %v559
        %v636 = vpack.c.b16 %v562, %v560
        %v637 = vpack.c.b16 %v565, %v563
        %v638 = vpack.c.b16 %v566, %v564
        %v639 = vpack.c.b16 %v569, %v567
        %v640 = vpack.c.b16 %v570, %v568
        %v641 = vpack.c.b16 %v573, %v571
        %v642 = vpack.c.b16 %v574, %v572
        %v643 = vpack.c.b16 %v577, %v575
        %v644 = vpack.c.b16 %v578, %v576
        %v645 = vpack.c.b16 %v581, %v579
        %v646 = vpack.c.b16 %v582, %v580
        %711 = vmatprep.subr.bf16.mxu0 %v584
        %712 = vmatpush1.bf16.msra.mxu0 %v583
        %713 = vmatprep.subr.bf16.mxu0 %v586
        %714 = vmatpush1.bf16.msra.mxu0 %v585
        %715 = vmatprep.subr.bf16.mxu0 %v588
        %716 = vmatpush1.bf16.msra.mxu0 %v587
        %717 = vmatprep.subr.bf16.mxu0 %v590
        %718 = vmatpush1.bf16.msra.mxu0 %v589
        %719 = vmatprep.subr.bf16.mxu0 %v592
        %720 = vmatpush1.bf16.msra.mxu0 %v591
        %721 = vmatprep.subr.bf16.mxu0 %v594
        %722 = vmatpush1.bf16.msra.mxu0 %v593
        %723 = vmatprep.subr.bf16.mxu0 %v596
        %724 = vmatpush1.bf16.msra.mxu0 %v595
        %725 = vmatprep.subr.bf16.mxu0 %v598
        %726 = vmatpush1.bf16.msra.mxu0 %v597
        %727 = vmatprep.subr.bf16.mxu0 %v600
        %728 = vmatpush1.bf16.msra.mxu0 %v599
        %729 = vmatprep.subr.bf16.mxu0 %v602
        %730 = vmatpush1.bf16.msra.mxu0 %v601
        %731 = vmatprep.subr.bf16.mxu0 %v604
        %732 = vmatpush1.bf16.msra.mxu0 %v603
        %733 = vmatprep.subr.bf16.mxu0 %v606
        %734 = vmatpush1.bf16.msra.mxu0 %v605
        %735 = vmatprep.subr.bf16.mxu0 %v608
        %736 = vmatpush1.bf16.msra.mxu0 %v607
        %737 = vmatprep.subr.bf16.mxu0 %v610
        %738 = vmatpush1.bf16.msra.mxu0 %v609
        %739 = vmatprep.subr.bf16.mxu0 %v612
        %740 = vmatpush1.bf16.msra.mxu0 %v611
        %741 = vmatprep.subr.bf16.mxu0 %v614
        %742 = vmatpush1.bf16.msra.mxu0 %v613
        %743 = vmatprep.mubr.bf16.mxu0 %v376
        %744 = vmatmul.mubr.bf16.gmra.mrb[0].mxu0 %v375
        %v745 = vpop.f32.mrb[0].mxu0
        %v746 = vadd.f32 0.0, %v745
        %v747 = vpop.f32.mrb[0].mxu0
        %v748 = vadd.f32 0.0, %v747
        %v749 = vpop.f32.mrb[0].mxu0
        %v750 = vadd.f32 0.0, %v749
        %v751 = vpop.f32.mrb[0].mxu0
        %v752 = vadd.f32 0.0, %v751
        %753 = vmatprep.mubr.bf16.mxu0 %v380
        %754 = vmatmul.mubr.bf16.gmra.mrb[0].mxu0 %v379
        %v755 = vpop.f32.mrb[0].mxu0
        %v756 = vadd.f32 0.0, %v755
        %v757 = vpop.f32.mrb[0].mxu0
        %v758 = vadd.f32 0.0, %v757
        %v759 = vpop.f32.mrb[0].mxu0
        %v760 = vadd.f32 0.0, %v759
        %v761 = vpop.f32.mrb[0].mxu0
        %v762 = vadd.f32 0.0, %v761
        %763 = vdwg.mxu0
        %764 = vmatprep.subr.bf16.mxu0 %v616
        %765 = vmatpush1.bf16.msra.mxu0 %v615
        %766 = vmatprep.subr.bf16.mxu0 %v618
        %767 = vmatpush1.bf16.msra.mxu0 %v617
        %768 = vmatprep.subr.bf16.mxu0 %v620
        %769 = vmatpush1.bf16.msra.mxu0 %v619
        %770 = vmatprep.subr.bf16.mxu0 %v622
        %771 = vmatpush1.bf16.msra.mxu0 %v621
        %772 = vmatprep.subr.bf16.mxu0 %v624
        %773 = vmatpush1.bf16.msra.mxu0 %v623
        %774 = vmatprep.subr.bf16.mxu0 %v626
        %775 = vmatpush1.bf16.msra.mxu0 %v625
        %776 = vmatprep.subr.bf16.mxu0 %v628
        %777 = vmatpush1.bf16.msra.mxu0 %v627
        %778 = vmatprep.subr.bf16.mxu0 %v630
        %779 = vmatpush1.bf16.msra.mxu0 %v629
        %780 = vmatprep.subr.bf16.mxu0 %v632
        %781 = vmatpush1.bf16.msra.mxu0 %v631
        %782 = vmatprep.subr.bf16.mxu0 %v634
        %783 = vmatpush1.bf16.msra.mxu0 %v633
        %784 = vmatprep.subr.bf16.mxu0 %v636
        %785 = vmatpush1.bf16.msra.mxu0 %v635
        %786 = vmatprep.subr.bf16.mxu0 %v638
        %787 = vmatpush1.bf16.msra.mxu0 %v637
        %788 = vmatprep.subr.bf16.mxu0 %v640
        %789 = vmatpush1.bf16.msra.mxu0 %v639
        %790 = vmatprep.subr.bf16.mxu0 %v642
        %791 = vmatpush1.bf16.msra.mxu0 %v641
        %792 = vmatprep.subr.bf16.mxu0 %v644
        %793 = vmatpush1.bf16.msra.mxu0 %v643
        %794 = vmatprep.subr.bf16.mxu0 %v646
        %795 = vmatpush1.bf16.msra.mxu0 %v645
        %796 = vmatprep.mubr.bf16.mxu0 %v378
        %797 = vmatmul.mubr.bf16.gmra.mrb[0].mxu0 %v377
        %v798 = vpop.f32.mrb[0].mxu0
        %v799 = vadd.f32 %v746, %v798
        %v800 = vpop.f32.mrb[0].mxu0
        %v801 = vadd.f32 %v748, %v800
        %v802 = vpop.f32.mrb[0].mxu0
        %v803 = vadd.f32 %v750, %v802
        %v804 = vpop.f32.mrb[0].mxu0
        %v805 = vadd.f32 %v752, %v804
        %806 = vmatprep.mubr.bf16.mxu0 %v382
        %807 = vmatmul.mubr.bf16.gmra.mrb[0].mxu0 %v381
        %v808 = vpop.f32.mrb[0].mxu0
        %v809 = vadd.f32 %v756, %v808
        %v810 = vpop.f32.mrb[0].mxu0
        %v811 = vadd.f32 %v758, %v810
        %v812 = vpop.f32.mrb[0].mxu0
        %v813 = vadd.f32 %v760, %v812
        %v814 = vpop.f32.mrb[0].mxu0
        %v815 = vadd.f32 %v762, %v814
        %816 = vdwg.mxu0
        %v817 = vadd.f32 %v271, %v799
        %v818 = vadd.f32 %v272, %v801
        %v819 = vadd.f32 %v273, %v803
        %v820 = vadd.f32 %v274, %v805
        %v821 = vadd.f32 %v275, %v809
        %v822 = vadd.f32 %v276, %v811
        %v823 = vadd.f32 %v277, %v813
        %v824 = vadd.f32 %v278, %v815
        %825 = vst [vmem:[#allocation2] sm:$0xff] %v817
        %826 = vst [vmem:[#allocation2 + $0x8] sm:$0xff] %v818
        %827 = vst [vmem:[#allocation2 + $0x10] sm:$0xff] %v819
        %828 = vst [vmem:[#allocation2 + $0x18] sm:$0xff] %v820
        %829 = vst [vmem:[#allocation2 + $0x20] sm:$0xff] %v821
        %830 = vst [vmem:[#allocation2 + $0x28] sm:$0xff] %v822
        %831 = vst [vmem:[#allocation2 + $0x30] sm:$0xff] %v823
        %832 = vst [vmem:[#allocation2 + $0x38] sm:$0xff] %v824
        %p833 = scmp.eq.s32.totalorder %s20, 3
        // Predicated region
        $region56: #{discriminator_forward.7} parent=46 // pred_check
          %p834 = pneg %p833
        $region57: #{discriminator_forward.7} parent=46 // pred_check_branch
          %836 = sbr.rel (%p834) target = $region59
        $region58: #{discriminator_forward.7} parent=46 // pred_region
          %v837 = vld [vmem:[#allocation2] sm:$0xff]
          %v838 = vld [vmem:[#allocation2 + $0x8] sm:$0xff]
          %v839 = vld [vmem:[#allocation2 + $0x10] sm:$0xff]
          %v840 = vld [vmem:[#allocation2 + $0x18] sm:$0xff]
          %v841 = vld [vmem:[#allocation2 + $0x20] sm:$0xff]
          %v842 = vld [vmem:[#allocation2 + $0x28] sm:$0xff]
          %v843 = vld [vmem:[#allocation2 + $0x30] sm:$0xff]
          %v844 = vld [vmem:[#allocation2 + $0x38] sm:$0xff]
          %vm845 = vcmp.ge.f32.partialorder %v837, 0.0
          %vm846 = vcmp.ge.f32.partialorder %v838, 0.0
          %vm847 = vcmp.ge.f32.partialorder %v839, 0.0
          %vm848 = vcmp.ge.f32.partialorder %v840, 0.0
          %vm849 = vcmp.ge.f32.partialorder %v841, 0.0
          %vm850 = vcmp.ge.f32.partialorder %v842, 0.0
          %vm851 = vcmp.ge.f32.partialorder %v843, 0.0
          %vm852 = vcmp.ge.f32.partialorder %v844, 0.0
          %v853 = vmul.f32 %v837, 0.2
          %v854 = vmul.f32 %v838, 0.2
          %v855 = vmul.f32 %v839, 0.2
          %v856 = vmul.f32 %v840, 0.2
          %v857 = vmul.f32 %v841, 0.2
          %v858 = vmul.f32 %v842, 0.2
          %v859 = vmul.f32 %v843, 0.2
          %v860 = vmul.f32 %v844, 0.2
          %v861 = vsel %vm845, %v837, %v853
          %v862 = vsel %vm846, %v838, %v854
          %v863 = vsel %vm847, %v839, %v855
          %v864 = vsel %vm848, %v840, %v856
          %v865 = vsel %vm849, %v841, %v857
          %v866 = vsel %vm850, %v842, %v858
          %v867 = vsel %vm851, %v843, %v859
          %v868 = vsel %vm852, %v844, %v860
          %869 = vst [vmem:[%s256] sm:$0xff] %v861
          %870 = vst [vmem:[%s256 + $0x8] sm:$0xff] %v862
          %871 = vst [vmem:[%s256 + $0x10] sm:$0xff] %v863
          %872 = vst [vmem:[%s256 + $0x18] sm:$0xff] %v864
          %873 = vst [vmem:[%s256 + $0x20] sm:$0xff] %v865
          %874 = vst [vmem:[%s256 + $0x28] sm:$0xff] %v866
          %875 = vst [vmem:[%s256 + $0x30] sm:$0xff] %v867
          %876 = vst [vmem:[%s256 + $0x38] sm:$0xff] %v868
        $region59: #{discriminator_forward.7} parent=46 // pred_fallthru
          _
        %s877 = smul.u32 4, %s18
        %s878 = smul.u32 2, %s19
        %p879 = scmp.lt.s32.totalorder %s877, 3
        %s880 = scalar_select %p879, %s877, 3
        %p881 = scmp.lt.s32.totalorder %s878, 1
        %s882 = scalar_select %p881, %s878, 1
        %s883 = smul.addr %s880, 2
        %s884 = sadd.s32 %s882, %s883
        %s885 = smul.addr %s884, 8
        %s886 = scalar_lea.vmem %s2, %s885
        // Predicated region
        $region60: #{discriminator_forward.7} parent=46 // pred_check
          %p887 = pneg %p108
        $region61: #{discriminator_forward.7} parent=46 // pred_check_branch
          %889 = sbr.rel (%p887) target = $region63
        $region62: #{discriminator_forward.7} parent=46 // pred_region
          %s890 = smul.u32 4, %s18
          %s891 = smul.u32 2, %s19
        $region63: #{discriminator_forward.7} parent=46 // pred_fallthru
          _
        // Predicated region
        $region64: #{discriminator_forward.7} parent=46 // pred_check
          %p892 = pneg %p108
        $region65: #{discriminator_forward.7} parent=46 // pred_check_branch
          %894 = sbr.rel (%p892) target = $region67
        $region66: #{discriminator_forward.7} parent=46 // pred_region
          %s895 = smul.u32 4, %s18
          %s896 = smul.u32 2, %s19
          %p897 = scmp.lt.s32.totalorder %s895, 3
          %s898 = scalar_select %p897, %s895, 3
          %p899 = scmp.lt.s32.totalorder %s896, 1
          %s900 = scalar_select %p899, %s896, 1
          %s901 = smul.addr %s898, 2
          %s902 = sadd.s32 %s900, %s901
          %s903 = smul.addr %s902, 8
          %s904 = scalar_lea.vmem %s2, %s903
        $region67: #{discriminator_forward.7} parent=46 // pred_fallthru
          _
      $region47: #{discriminator_forward.7} parent=5 // pred_fallthru
        _
      %p905 = scmp.le.s32.totalorder 2, %s8
      // Predicated region
      $region68: #{discriminator_forward.7} parent=5 // pred_check
        %p906 = pneg %p905
      $region69: #{discriminator_forward.7} parent=5 // pred_check_branch
        %908 = sbr.rel (%p906) target = $region71
      $region70: #{discriminator_forward.7} parent=5 // pred_region
        %s909 = ssub.s32 %s8, 2
      $region71: #{discriminator_forward.7} parent=5 // pred_fallthru
        _
    $region6: #{discriminator_forward.7} parent=1 // loop_footer
      %s12 = sadd.s32 1, %s8
    $region7: #{discriminator_forward.7} parent=1 // loop_footer_branch
      %7 = sbr.rel target = $region3
    $region8: #{discriminator_forward.7} parent=1 // loop_exit
      _

// kernel: discriminator_forward.8
$region0: #{discriminator_forward.8}
  #allocation0 [shape = 'u32[]', space=smem, size = 0x4, offset = 0x4, fixed_abs, tag = 'smem constant byte address 0x4 - core index']
  #allocation1 [shape = 'u32[144,128]{1,0:T(1,128)}', space=vmem, size = 0x12000, scoped, tag = 'internal scratch']
  #allocation2 [shape = 'f32[32,256]{1,0:T(8,128)}', space=vmem, size = 0x8000, scoped, tag = 'scratch operand']
  %s0 = inlined_call_operand.vmem [shape: bf16[32,4096], index: 0, kind: input, shape index: {}]
  %s1 = inlined_call_operand.vmem [shape: bf16[4096,512], index: 1, kind: input, shape index: {}]
  %s2 = inlined_call_operand.vmem [shape: f32[32,512], index: 2, kind: output, shape index: {}]
  %s3 = sld [smem:[#allocation0]]
  $region129: #{discriminator_forward.8} parent=0
    _
  %s5 = ssub.s32 1, %s3
  %s6 = scalar_select 0, %s5, %s3
  $region1: #{discriminator_forward.8} parent=0
    #allocation3 [shape = 'u8[65536]{0}', space=vmem, size = 0x10000, scoped, tag = 'input window, operand 0']
    #allocation4 [shape = 'u8[524288]{0}', space=vmem, size = 0x80000, scoped, tag = 'input window, operand 1']
    #allocation5 [shape = 'u8[65536]{0}', space=vmem, size = 0x10000, scoped, tag = 'output window, operand 0']
    loop: start=0, step=1, limit=18
    $region2: #{discriminator_forward.8} parent=1 // loop_pre_header
      _
    $region3: #{discriminator_forward.8} parent=1 // loop_header
      %s8 = sphi 0, %s12
      %p9 = scmp.ge.s32.totalorder %s8, 18
      %s15 = sphi 0, %s34
      %s16 = sphi 0, %s30
      %s17 = sphi 0, %s26
      %s18 = sphi 0, %s15
      %s19 = sphi 0, %s16
      %s20 = sphi 0, %s17
      %s21 = sphi 0, %s18
      %s22 = sphi 0, %s19
      %s23 = sphi 0, %s20
      %s39 = sphi 0, %s41
      %s42 = sphi 0, %s39
      %s43 = sphi 0, %s42
      %s59 = sphi 0, %s43
      %s67 = sphi 0, %s69
      %s70 = sphi 0, %s67
      %s71 = sphi 0, %s70
      %s87 = sphi 0, %s71
      %s95 = sphi 0, %s97
      %s98 = sphi 0, %s95
      %s99 = sphi 0, %s98
      %s115 = sphi 0, %s99
    $region4: #{discriminator_forward.8} parent=1 // loop_header_branch
      %11 = sbr.rel (%p9) target = $region8
    $region5: #{discriminator_forward.8} parent=1 // loop_body
      %s13 = ssub.s32 %s8, 1
      %s14 = ssub.s32 %s8, 2
      %s24 = sadd.s32 1, %s17
      %p25 = scmp.ge.s32.totalorder %s24, 8
      %s26 = scalar_select %p25, 0, %s24
      %s27 = sadd.s32 1, %s16
      %s28 = scalar_select %p25, %s27, %s16
      %p29 = scmp.ge.s32.totalorder %s28, 2
      %s30 = scalar_select %p29, 0, %s28
      %s31 = sadd.s32 1, %s15
      %s32 = scalar_select %p29, %s31, %s15
      %p33 = scmp.ge.s32.totalorder %s32, 1
      %s34 = scalar_select %p33, 0, %s32
      %s35 = ssub.s32 %s15, %s34
      %s36 = ssub.s32 %s17, %s26
      %s37 = sor.u32 %s35, %s36
      %p38 = scmp.eq.s32.totalorder %s37, 0
      %s40 = sadd.s32 %s39, 1
      %s41 = scalar_select %p38, %s39, %s40
      %p44 = pneg %p38
      %p45 = scmp.eq.s32.totalorder %s8, 15
      %p46 = por %p44, %p45
      %p47 = scmp.ne.s32.totalorder %s39, %s42
      %p48 = scmp.eq.s32.totalorder %s8, 0
      %p49 = por %p47, %p48
      %p50 = scmp.ne.s32.totalorder %s39, %s42
      %p51 = scmp.eq.s32.totalorder %s13, 15
      %p52 = por %p50, %p51
      %p53 = scmp.ne.s32.totalorder %s42, %s43
      %p54 = scmp.eq.s32.totalorder %s13, 0
      %p55 = por %p53, %p54
      %p56 = scmp.ne.s32.totalorder %s42, %s43
      %p57 = scmp.eq.s32.totalorder %s14, 15
      %p58 = por %p56, %p57
      %p60 = scmp.ne.s32.totalorder %s43, %s59
      %p61 = scmp.eq.s32.totalorder %s14, 0
      %p62 = por %p60, %p61
      %s63 = ssub.s32 %s17, %s26
      %s64 = ssub.s32 %s16, %s30
      %s65 = sor.u32 %s63, %s64
      %p66 = scmp.eq.s32.totalorder %s65, 0
      %s68 = sadd.s32 %s67, 1
      %s69 = scalar_select %p66, %s67, %s68
      %p72 = pneg %p66
      %p73 = scmp.eq.s32.totalorder %s8, 15
      %p74 = por %p72, %p73
      %p75 = scmp.ne.s32.totalorder %s67, %s70
      %p76 = scmp.eq.s32.totalorder %s8, 0
      %p77 = por %p75, %p76
      %p78 = scmp.ne.s32.totalorder %s67, %s70
      %p79 = scmp.eq.s32.totalorder %s13, 15
      %p80 = por %p78, %p79
      %p81 = scmp.ne.s32.totalorder %s70, %s71
      %p82 = scmp.eq.s32.totalorder %s13, 0
      %p83 = por %p81, %p82
      %p84 = scmp.ne.s32.totalorder %s70, %s71
      %p85 = scmp.eq.s32.totalorder %s14, 15
      %p86 = por %p84, %p85
      %p88 = scmp.ne.s32.totalorder %s71, %s87
      %p89 = scmp.eq.s32.totalorder %s14, 0
      %p90 = por %p88, %p89
      %s91 = ssub.s32 %s15, %s34
      %s92 = ssub.s32 %s16, %s30
      %s93 = sor.u32 %s91, %s92
      %p94 = scmp.eq.s32.totalorder %s93, 0
      %s96 = sadd.s32 %s95, 1
      %s97 = scalar_select %p94, %s95, %s96
      %p100 = pneg %p94
      %p101 = scmp.eq.s32.totalorder %s8, 15
      %p102 = por %p100, %p101
      %p103 = scmp.ne.s32.totalorder %s95, %s98
      %p104 = scmp.eq.s32.totalorder %s8, 0
      %p105 = por %p103, %p104
      %p106 = scmp.ne.s32.totalorder %s95, %s98
      %p107 = scmp.eq.s32.totalorder %s13, 15
      %p108 = por %p106, %p107
      %p109 = scmp.ne.s32.totalorder %s98, %s99
      %p110 = scmp.eq.s32.totalorder %s13, 0
      %p111 = por %p109, %p110
      %p112 = scmp.ne.s32.totalorder %s98, %s99
      %p113 = scmp.eq.s32.totalorder %s14, 15
      %p114 = por %p112, %p113
      %p116 = scmp.ne.s32.totalorder %s99, %s115
      %p117 = scmp.eq.s32.totalorder %s14, 0
      %p118 = por %p116, %p117
      %p119 = scmp.le.s32.totalorder 1, %s8
      %p120 = scmp.lt.s32.totalorder %s8, 17
      %p121 = pnand %p119, %p120
      %p122 = pneg %p121
      // Predicated region
      $region9: #{discriminator_forward.8} parent=5 // pred_check
        _
      $region10: #{discriminator_forward.8} parent=5 // pred_check_branch
        %124 = sbr.rel (%p121) target = $region12
      $region11: #{discriminator_forward.8} parent=5 // pred_region
        %s125 = ssub.s32 %s8, 1
      $region12: #{discriminator_forward.8} parent=5 // pred_fallthru
        _
      %p126 = scmp.lt.s32.totalorder %s8, 16
      // Predicated region
      $region13: #{discriminator_forward.8} parent=5 // pred_check
        %p127 = pneg %p126
      $region14: #{discriminator_forward.8} parent=5 // pred_check_branch
        %129 = sbr.rel (%p127) target = $region16
      $region15: #{discriminator_forward.8} parent=5 // pred_region
        // Predicated region
        $region17: #{discriminator_forward.8} parent=15 // pred_check
          %p130 = pneg %p49
        $region18: #{discriminator_forward.8} parent=15 // pred_check_branch
          %132 = sbr.rel (%p130) target = $region20
        $region19: #{discriminator_forward.8} parent=15 // pred_region
          %s133 = sand.u32 %s39, 1
          %s134 = sand.u32 %s39, 1
          %s135 = smul.addr %s134, 64
          %s136 = scalar_lea.vmem [#allocation3], %s135
          %s137 = smul.u32 4, %s15
          %s138 = smul.u32 4, %s17
          %s139 = smul.addr %s137, 32
          %s140 = sadd.s32 %s138, %s139
          %s141 = smul.addr %s140, 4
          %s142 = scalar_lea.vmem %s0, %s141
          // Predicated region
          $region21: #{discriminator_forward.8} parent=19 // pred_check
            _
          $region22: #{discriminator_forward.8} parent=19 // pred_check_branch
            %144 = sbr.rel (0) target = $region24
          $region23: #{discriminator_forward.8} parent=19 // pred_region
            // Predicated region
            $region25: #{discriminator_forward.8} parent=23 // pred_check
              _
            $region26: #{discriminator_forward.8} parent=23 // pred_check_branch
              %146 = sbr.rel (0) target = $region28
            $region27: #{discriminator_forward.8} parent=23 // pred_region
              loop: start=0, step=1, limit=1
              $region29: #{discriminator_forward.8} parent=27 // loop_pre_header
                _
              $region30: #{discriminator_forward.8} parent=27 // loop_header
                %s148 = sphi 0, %s152
                %p149 = scmp.ge.s32.totalorder %s148, 1
                %s153 = sphi %s142, %s142
                %s154 = sphi %s136, %s136
              $region31: #{discriminator_forward.8} parent=27 // loop_header_branch
                %151 = sbr.rel (%p149) target = $region35
              $region32: #{discriminator_forward.8} parent=27 // loop_body
                %v155 = vld [vmem:[%s153] sm:$0xff]
                %156 = vst [vmem:[%s154] sm:$0xff] %v155
                %v157 = vld [vmem:[%s153 + $0x8] sm:$0xff]
                %158 = vst [vmem:[%s154 + $0x8] sm:$0xff] %v157
                %v159 = vld [vmem:[%s153 + $0x80] sm:$0xff]
                %160 = vst [vmem:[%s154 + $0x10] sm:$0xff] %v159
                %v161 = vld [vmem:[%s153 + $0x88] sm:$0xff]
                %162 = vst [vmem:[%s154 + $0x18] sm:$0xff] %v161
                %v163 = vld [vmem:[%s153 + $0x100] sm:$0xff]
                %164 = vst [vmem:[%s154 + $0x20] sm:$0xff] %v163
                %v165 = vld [vmem:[%s153 + $0x108] sm:$0xff]
                %166 = vst [vmem:[%s154 + $0x28] sm:$0xff] %v165
                %v167 = vld [vmem:[%s153 + $0x180] sm:$0xff]
                %168 = vst [vmem:[%s154 + $0x30] sm:$0xff] %v167
                %v169 = vld [vmem:[%s153 + $0x188] sm:$0xff]
                %170 = vst [vmem:[%s154 + $0x38] sm:$0xff] %v169
              $region33: #{discriminator_forward.8} parent=27 // loop_footer
                %s152 = sadd.s32 1, %s148
              $region34: #{discriminator_forward.8} parent=27 // loop_footer_branch
                %147 = sbr.rel target = $region30
              $region35: #{discriminator_forward.8} parent=27 // loop_exit
                _
            $region28: #{discriminator_forward.8} parent=23 // pred_fallthru
              _
            // Predicated region
            $region36: #{discriminator_forward.8} parent=23 // pred_check
              _
            $region37: #{discriminator_forward.8} parent=23 // pred_check_branch
              %172 = sbr.rel target = $region39
            $region38: #{discriminator_forward.8} parent=23 // pred_region
              _
            $region39: #{discriminator_forward.8} parent=23 // pred_fallthru
              _
          $region24: #{discriminator_forward.8} parent=19 // pred_fallthru
            _
          %173 = vnop
        $region20: #{discriminator_forward.8} parent=15 // pred_fallthru
          _
        // Predicated region
        $region40: #{discriminator_forward.8} parent=15 // pred_check
          %p174 = pneg %p77
        $region41: #{discriminator_forward.8} parent=15 // pred_check_branch
          %176 = sbr.rel (%p174) target = $region43
        $region42: #{discriminator_forward.8} parent=15 // pred_region
          %s177 = sand.u32 %s67, 1
          %s178 = sand.u32 %s67, 1
          %s179 = smul.addr %s178, 512
          %s180 = scalar_lea.vmem [#allocation4], %s179
          %s181 = smul.u32 64, %s17
          %s182 = smul.u32 2, %s16
          %s183 = smul.addr %s181, 4
          %s184 = sadd.s32 %s182, %s183
          %s185 = smul.addr %s184, 4
          %s186 = scalar_lea.vmem %s1, %s185
          // Predicated region
          $region44: #{discriminator_forward.8} parent=42 // pred_check
            _
          $region45: #{discriminator_forward.8} parent=42 // pred_check_branch
            %188 = sbr.rel (0) target = $region47
          $region46: #{discriminator_forward.8} parent=42 // pred_region
            // Predicated region
            $region48: #{discriminator_forward.8} parent=46 // pred_check
              _
            $region49: #{discriminator_forward.8} parent=46 // pred_check_branch
              %190 = sbr.rel (0) target = $region51
            $region50: #{discriminator_forward.8} parent=46 // pred_region
              // Predicated region
              $region63: #{discriminator_forward.8} parent=50 // pred_check
                _
              $region64: #{discriminator_forward.8} parent=50 // pred_check_branch
                %331 = sbr.rel (0) target = $region66
              $region65: #{discriminator_forward.8} parent=50 // pred_region
                loop: start=0, step=1, limit=1
                $region67: #{discriminator_forward.8} parent=65 // loop_pre_header
                  _
                $region68: #{discriminator_forward.8} parent=65 // loop_header
                  %s333 = sphi 0, %s337
                  %p334 = scmp.ge.s32.totalorder %s333, 1
                  %s338 = sphi %s186, %s186
                  %s339 = sphi %s180, %s180
                $region69: #{discriminator_forward.8} parent=65 // loop_header_branch
                  %336 = sbr.rel (%p334) target = $region73
                $region70: #{discriminator_forward.8} parent=65 // loop_body
                  %v340 = vld [vmem:[%s338] sm:$0xff]
                  %341 = vst [vmem:[%s339] sm:$0xff] %v340
                  %v342 = vld [vmem:[%s338 + $0x10] sm:$0xff]
                  %343 = vst [vmem:[%s339 + $0x8] sm:$0xff] %v342
                  %v344 = vld [vmem:[%s338 + $0x20] sm:$0xff]
                  %345 = vst [vmem:[%s339 + $0x10] sm:$0xff] %v344
                  %v346 = vld [vmem:[%s338 + $0x30] sm:$0xff]
                  %347 = vst [vmem:[%s339 + $0x18] sm:$0xff] %v346
                  %v348 = vld [vmem:[%s338 + $0x40] sm:$0xff]
                  %349 = vst [vmem:[%s339 + $0x20] sm:$0xff] %v348
                  %v350 = vld [vmem:[%s338 + $0x50] sm:$0xff]
                  %351 = vst [vmem:[%s339 + $0x28] sm:$0xff] %v350
                  %v352 = vld [vmem:[%s338 + $0x60] sm:$0xff]
                  %353 = vst [vmem:[%s339 + $0x30] sm:$0xff] %v352
                  %v354 = vld [vmem:[%s338 + $0x70] sm:$0xff]
                  %355 = vst [vmem:[%s339 + $0x38] sm:$0xff] %v354
                  %v356 = vld [vmem:[%s338 + $0x80] sm:$0xff]
                  %357 = vst [vmem:[%s339 + $0x40] sm:$0xff] %v356
                  %v358 = vld [vmem:[%s338 + $0x90] sm:$0xff]
                  %359 = vst [vmem:[%s339 + $0x48] sm:$0xff] %v358
                  %v360 = vld [vmem:[%s338 + $0xa0] sm:$0xff]
                  %361 = vst [vmem:[%s339 + $0x50] sm:$0xff] %v360
                  %v362 = vld [vmem:[%s338 + $0xb0] sm:$0xff]
                  %363 = vst [vmem:[%s339 + $0x58] sm:$0xff] %v362
                  %v364 = vld [vmem:[%s338 + $0xc0] sm:$0xff]
                  %365 = vst [vmem:[%s339 + $0x60] sm:$0xff] %v364
                  %v366 = vld [vmem:[%s338 + $0xd0] sm:$0xff]
                  %367 = vst [vmem:[%s339 + $0x68] sm:$0xff] %v366
                  %v368 = vld [vmem:[%s338 + $0xe0] sm:$0xff]
                  %369 = vst [vmem:[%s339 + $0x70] sm:$0xff] %v368
                  %v370 = vld [vmem:[%s338 + $0xf0] sm:$0xff]
                  %371 = vst [vmem:[%s339 + $0x78] sm:$0xff] %v370
                  %v372 = vld [vmem:[%s338 + $0x100] sm:$0xff]
                  %373 = vst [vmem:[%s339 + $0x80] sm:$0xff] %v372
                  %v374 = vld [vmem:[%s338 + $0x110] sm:$0xff]
                  %375 = vst [vmem:[%s339 + $0x88] sm:$0xff] %v374
                  %v376 = vld [vmem:[%s338 + $0x120] sm:$0xff]
                  %377 = vst [vmem:[%s339 + $0x90] sm:$0xff] %v376
                  %v378 = vld [vmem:[%s338 + $0x130] sm:$0xff]
                  %379 = vst [vmem:[%s339 + $0x98] sm:$0xff] %v378
                  %v380 = vld [vmem:[%s338 + $0x140] sm:$0xff]
                  %381 = vst [vmem:[%s339 + $0xa0] sm:$0xff] %v380
                  %v382 = vld [vmem:[%s338 + $0x150] sm:$0xff]
                  %383 = vst [vmem:[%s339 + $0xa8] sm:$0xff] %v382
                  %v384 = vld [vmem:[%s338 + $0x160] sm:$0xff]
                  %385 = vst [vmem:[%s339 + $0xb0] sm:$0xff] %v384
                  %v386 = vld [vmem:[%s338 + $0x170] sm:$0xff]
                  %387 = vst [vmem:[%s339 + $0xb8] sm:$0xff] %v386
                  %v388 = vld [vmem:[%s338 + $0x180] sm:$0xff]
                  %389 = vst [vmem:[%s339 + $0xc0] sm:$0xff] %v388
                  %v390 = vld [vmem:[%s338 + $0x190] sm:$0xff]
                  %391 = vst [vmem:[%s339 + $0xc8] sm:$0xff] %v390
                  %v392 = vld [vmem:[%s338 + $0x1a0] sm:$0xff]
                  %393 = vst [vmem:[%s339 + $0xd0] sm:$0xff] %v392
                  %v394 = vld [vmem:[%s338 + $0x1b0] sm:$0xff]
                  %395 = vst [vmem:[%s339 + $0xd8] sm:$0xff] %v394
                  %v396 = vld [vmem:[%s338 + $0x1c0] sm:$0xff]
                  %397 = vst [vmem:[%s339 + $0xe0] sm:$0xff] %v396
                  %v398 = vld [vmem:[%s338 + $0x1d0] sm:$0xff]
                  %399 = vst [vmem:[%s339 + $0xe8] sm:$0xff] %v398
                  %v400 = vld [vmem:[%s338 + $0x1e0] sm:$0xff]
                  %401 = vst [vmem:[%s339 + $0xf0] sm:$0xff] %v400
                  %v402 = vld [vmem:[%s338 + $0x1f0] sm:$0xff]
                  %403 = vst [vmem:[%s339 + $0xf8] sm:$0xff] %v402
                  %v404 = vld [vmem:[%s338 + $0x200] sm:$0xff]
                  %405 = vst [vmem:[%s339 + $0x100] sm:$0xff] %v404
                  %v406 = vld [vmem:[%s338 + $0x210] sm:$0xff]
                  %407 = vst [vmem:[%s339 + $0x108] sm:$0xff] %v406
                  %v408 = vld [vmem:[%s338 + $0x220] sm:$0xff]
                  %409 = vst [vmem:[%s339 + $0x110] sm:$0xff] %v408
                  %v410 = vld [vmem:[%s338 + $0x230] sm:$0xff]
                  %411 = vst [vmem:[%s339 + $0x118] sm:$0xff] %v410
                  %v412 = vld [vmem:[%s338 + $0x240] sm:$0xff]
                  %413 = vst [vmem:[%s339 + $0x120] sm:$0xff] %v412
                  %v414 = vld [vmem:[%s338 + $0x250] sm:$0xff]
                  %415 = vst [vmem:[%s339 + $0x128] sm:$0xff] %v414
                  %v416 = vld [vmem:[%s338 + $0x260] sm:$0xff]
                  %417 = vst [vmem:[%s339 + $0x130] sm:$0xff] %v416
                  %v418 = vld [vmem:[%s338 + $0x270] sm:$0xff]
                  %419 = vst [vmem:[%s339 + $0x138] sm:$0xff] %v418
                  %v420 = vld [vmem:[%s338 + $0x280] sm:$0xff]
                  %421 = vst [vmem:[%s339 + $0x140] sm:$0xff] %v420
                  %v422 = vld [vmem:[%s338 + $0x290] sm:$0xff]
                  %423 = vst [vmem:[%s339 + $0x148] sm:$0xff] %v422
                  %v424 = vld [vmem:[%s338 + $0x2a0] sm:$0xff]
                  %425 = vst [vmem:[%s339 + $0x150] sm:$0xff] %v424
                  %v426 = vld [vmem:[%s338 + $0x2b0] sm:$0xff]
                  %427 = vst [vmem:[%s339 + $0x158] sm:$0xff] %v426
                  %v428 = vld [vmem:[%s338 + $0x2c0] sm:$0xff]
                  %429 = vst [vmem:[%s339 + $0x160] sm:$0xff] %v428
                  %v430 = vld [vmem:[%s338 + $0x2d0] sm:$0xff]
                  %431 = vst [vmem:[%s339 + $0x168] sm:$0xff] %v430
                  %v432 = vld [vmem:[%s338 + $0x2e0] sm:$0xff]
                  %433 = vst [vmem:[%s339 + $0x170] sm:$0xff] %v432
                  %v434 = vld [vmem:[%s338 + $0x2f0] sm:$0xff]
                  %435 = vst [vmem:[%s339 + $0x178] sm:$0xff] %v434
                  %v436 = vld [vmem:[%s338 + $0x300] sm:$0xff]
                  %437 = vst [vmem:[%s339 + $0x180] sm:$0xff] %v436
                  %v438 = vld [vmem:[%s338 + $0x310] sm:$0xff]
                  %439 = vst [vmem:[%s339 + $0x188] sm:$0xff] %v438
                  %v440 = vld [vmem:[%s338 + $0x320] sm:$0xff]
                  %441 = vst [vmem:[%s339 + $0x190] sm:$0xff] %v440
                  %v442 = vld [vmem:[%s338 + $0x330] sm:$0xff]
                  %443 = vst [vmem:[%s339 + $0x198] sm:$0xff] %v442
                  %v444 = vld [vmem:[%s338 + $0x340] sm:$0xff]
                  %445 = vst [vmem:[%s339 + $0x1a0] sm:$0xff] %v444
                  %v446 = vld [vmem:[%s338 + $0x350] sm:$0xff]
                  %447 = vst [vmem:[%s339 + $0x1a8] sm:$0xff] %v446
                  %v448 = vld [vmem:[%s338 + $0x360] sm:$0xff]
                  %449 = vst [vmem:[%s339 + $0x1b0] sm:$0xff] %v448
                  %v450 = vld [vmem:[%s338 + $0x370] sm:$0xff]
                  %451 = vst [vmem:[%s339 + $0x1b8] sm:$0xff] %v450
                  %v452 = vld [vmem:[%s338 + $0x380] sm:$0xff]
                  %453 = vst [vmem:[%s339 + $0x1c0] sm:$0xff] %v452
                  %v454 = vld [vmem:[%s338 + $0x390] sm:$0xff]
                  %455 = vst [vmem:[%s339 + $0x1c8] sm:$0xff] %v454
                  %v456 = vld [vmem:[%s338 + $0x3a0] sm:$0xff]
                  %457 = vst [vmem:[%s339 + $0x1d0] sm:$0xff] %v456
                  %v458 = vld [vmem:[%s338 + $0x3b0] sm:$0xff]
                  %459 = vst [vmem:[%s339 + $0x1d8] sm:$0xff] %v458
                  %v460 = vld [vmem:[%s338 + $0x3c0] sm:$0xff]
                  %461 = vst [vmem:[%s339 + $0x1e0] sm:$0xff] %v460
                  %v462 = vld [vmem:[%s338 + $0x3d0] sm:$0xff]
                  %463 = vst [vmem:[%s339 + $0x1e8] sm:$0xff] %v462
                  %v464 = vld [vmem:[%s338 + $0x3e0] sm:$0xff]
                  %465 = vst [vmem:[%s339 + $0x1f0] sm:$0xff] %v464
                  %v466 = vld [vmem:[%s338 + $0x3f0] sm:$0xff]
                  %467 = vst [vmem:[%s339 + $0x1f8] sm:$0xff] %v466
                $region71: #{discriminator_forward.8} parent=65 // loop_footer
                  %s337 = sadd.s32 1, %s333
                $region72: #{discriminator_forward.8} parent=65 // loop_footer_branch
                  %332 = sbr.rel target = $region68
                $region73: #{discriminator_forward.8} parent=65 // loop_exit
                  _
              $region66: #{discriminator_forward.8} parent=50 // pred_fallthru
                _
              // Predicated region
              $region74: #{discriminator_forward.8} parent=50 // pred_check
                _
              $region75: #{discriminator_forward.8} parent=50 // pred_check_branch
                %469 = sbr.rel target = $region77
              $region76: #{discriminator_forward.8} parent=50 // pred_region
                _
              $region77: #{discriminator_forward.8} parent=50 // pred_fallthru
                _
            $region51: #{discriminator_forward.8} parent=46 // pred_fallthru
              _
            // Predicated region
            $region52: #{discriminator_forward.8} parent=46 // pred_check
              _
            $region53: #{discriminator_forward.8} parent=46 // pred_check_branch
              %192 = sbr.rel target = $region55
            $region54: #{discriminator_forward.8} parent=46 // pred_region
              loop: start=0, step=1, limit=1
              $region56: #{discriminator_forward.8} parent=54 // loop_pre_header
                _
              $region57: #{discriminator_forward.8} parent=54 // loop_header
                %s195 = sphi 0, %s199
                %p196 = scmp.ge.s32.totalorder %s195, 1
                %s200 = sphi %s186, %s186
                %s201 = sphi %s180, %s180
              $region58: #{discriminator_forward.8} parent=54 // loop_header_branch
                %198 = sbr.rel (%p196) target = $region62
              $region59: #{discriminator_forward.8} parent=54 // loop_body
                %v202 = vld [vmem:[%s200] sm:$0xff]
                %203 = vst [vmem:[%s201] sm:$0xff] %v202
                %v204 = vld [vmem:[%s200 + $0x10] sm:$0xff]
                %205 = vst [vmem:[%s201 + $0x8] sm:$0xff] %v204
                %v206 = vld [vmem:[%s200 + $0x20] sm:$0xff]
                %207 = vst [vmem:[%s201 + $0x10] sm:$0xff] %v206
                %v208 = vld [vmem:[%s200 + $0x30] sm:$0xff]
                %209 = vst [vmem:[%s201 + $0x18] sm:$0xff] %v208
                %v210 = vld [vmem:[%s200 + $0x40] sm:$0xff]
                %211 = vst [vmem:[%s201 + $0x20] sm:$0xff] %v210
                %v212 = vld [vmem:[%s200 + $0x50] sm:$0xff]
                %213 = vst [vmem:[%s201 + $0x28] sm:$0xff] %v212
                %v214 = vld [vmem:[%s200 + $0x60] sm:$0xff]
                %215 = vst [vmem:[%s201 + $0x30] sm:$0xff] %v214
                %v216 = vld [vmem:[%s200 + $0x70] sm:$0xff]
                %217 = vst [vmem:[%s201 + $0x38] sm:$0xff] %v216
                %v218 = vld [vmem:[%s200 + $0x80] sm:$0xff]
                %219 = vst [vmem:[%s201 + $0x40] sm:$0xff] %v218
                %v220 = vld [vmem:[%s200 + $0x90] sm:$0xff]
                %221 = vst [vmem:[%s201 + $0x48] sm:$0xff] %v220
                %v222 = vld [vmem:[%s200 + $0xa0] sm:$0xff]
                %223 = vst [vmem:[%s201 + $0x50] sm:$0xff] %v222
                %v224 = vld [vmem:[%s200 + $0xb0] sm:$0xff]
                %225 = vst [vmem:[%s201 + $0x58] sm:$0xff] %v224
                %v226 = vld [vmem:[%s200 + $0xc0] sm:$0xff]
                %227 = vst [vmem:[%s201 + $0x60] sm:$0xff] %v226
                %v228 = vld [vmem:[%s200 + $0xd0] sm:$0xff]
                %229 = vst [vmem:[%s201 + $0x68] sm:$0xff] %v228
                %v230 = vld [vmem:[%s200 + $0xe0] sm:$0xff]
                %231 = vst [vmem:[%s201 + $0x70] sm:$0xff] %v230
                %v232 = vld [vmem:[%s200 + $0xf0] sm:$0xff]
                %233 = vst [vmem:[%s201 + $0x78] sm:$0xff] %v232
                %v234 = vld [vmem:[%s200 + $0x100] sm:$0xff]
                %235 = vst [vmem:[%s201 + $0x80] sm:$0xff] %v234
                %v236 = vld [vmem:[%s200 + $0x110] sm:$0xff]
                %237 = vst [vmem:[%s201 + $0x88] sm:$0xff] %v236
                %v238 = vld [vmem:[%s200 + $0x120] sm:$0xff]
                %239 = vst [vmem:[%s201 + $0x90] sm:$0xff] %v238
                %v240 = vld [vmem:[%s200 + $0x130] sm:$0xff]
                %241 = vst [vmem:[%s201 + $0x98] sm:$0xff] %v240
                %v242 = vld [vmem:[%s200 + $0x140] sm:$0xff]
                %243 = vst [vmem:[%s201 + $0xa0] sm:$0xff] %v242
                %v244 = vld [vmem:[%s200 + $0x150] sm:$0xff]
                %245 = vst [vmem:[%s201 + $0xa8] sm:$0xff] %v244
                %v246 = vld [vmem:[%s200 + $0x160] sm:$0xff]
                %247 = vst [vmem:[%s201 + $0xb0] sm:$0xff] %v246
                %v248 = vld [vmem:[%s200 + $0x170] sm:$0xff]
                %249 = vst [vmem:[%s201 + $0xb8] sm:$0xff] %v248
                %v250 = vld [vmem:[%s200 + $0x180] sm:$0xff]
                %251 = vst [vmem:[%s201 + $0xc0] sm:$0xff] %v250
                %v252 = vld [vmem:[%s200 + $0x190] sm:$0xff]
                %253 = vst [vmem:[%s201 + $0xc8] sm:$0xff] %v252
                %v254 = vld [vmem:[%s200 + $0x1a0] sm:$0xff]
                %255 = vst [vmem:[%s201 + $0xd0] sm:$0xff] %v254
                %v256 = vld [vmem:[%s200 + $0x1b0] sm:$0xff]
                %257 = vst [vmem:[%s201 + $0xd8] sm:$0xff] %v256
                %v258 = vld [vmem:[%s200 + $0x1c0] sm:$0xff]
                %259 = vst [vmem:[%s201 + $0xe0] sm:$0xff] %v258
                %v260 = vld [vmem:[%s200 + $0x1d0] sm:$0xff]
                %261 = vst [vmem:[%s201 + $0xe8] sm:$0xff] %v260
                %v262 = vld [vmem:[%s200 + $0x1e0] sm:$0xff]
                %263 = vst [vmem:[%s201 + $0xf0] sm:$0xff] %v262
                %v264 = vld [vmem:[%s200 + $0x1f0] sm:$0xff]
                %265 = vst [vmem:[%s201 + $0xf8] sm:$0xff] %v264
                %v266 = vld [vmem:[%s200 + $0x200] sm:$0xff]
                %267 = vst [vmem:[%s201 + $0x100] sm:$0xff] %v266
                %v268 = vld [vmem:[%s200 + $0x210] sm:$0xff]
                %269 = vst [vmem:[%s201 + $0x108] sm:$0xff] %v268
                %v270 = vld [vmem:[%s200 + $0x220] sm:$0xff]
                %271 = vst [vmem:[%s201 + $0x110] sm:$0xff] %v270
                %v272 = vld [vmem:[%s200 + $0x230] sm:$0xff]
                %273 = vst [vmem:[%s201 + $0x118] sm:$0xff] %v272
                %v274 = vld [vmem:[%s200 + $0x240] sm:$0xff]
                %275 = vst [vmem:[%s201 + $0x120] sm:$0xff] %v274
                %v276 = vld [vmem:[%s200 + $0x250] sm:$0xff]
                %277 = vst [vmem:[%s201 + $0x128] sm:$0xff] %v276
                %v278 = vld [vmem:[%s200 + $0x260] sm:$0xff]
                %279 = vst [vmem:[%s201 + $0x130] sm:$0xff] %v278
                %v280 = vld [vmem:[%s200 + $0x270] sm:$0xff]
                %281 = vst [vmem:[%s201 + $0x138] sm:$0xff] %v280
                %v282 = vld [vmem:[%s200 + $0x280] sm:$0xff]
                %283 = vst [vmem:[%s201 + $0x140] sm:$0xff] %v282
                %v284 = vld [vmem:[%s200 + $0x290] sm:$0xff]
                %285 = vst [vmem:[%s201 + $0x148] sm:$0xff] %v284
                %v286 = vld [vmem:[%s200 + $0x2a0] sm:$0xff]
                %287 = vst [vmem:[%s201 + $0x150] sm:$0xff] %v286
                %v288 = vld [vmem:[%s200 + $0x2b0] sm:$0xff]
                %289 = vst [vmem:[%s201 + $0x158] sm:$0xff] %v288
                %v290 = vld [vmem:[%s200 + $0x2c0] sm:$0xff]
                %291 = vst [vmem:[%s201 + $0x160] sm:$0xff] %v290
                %v292 = vld [vmem:[%s200 + $0x2d0] sm:$0xff]
                %293 = vst [vmem:[%s201 + $0x168] sm:$0xff] %v292
                %v294 = vld [vmem:[%s200 + $0x2e0] sm:$0xff]
                %295 = vst [vmem:[%s201 + $0x170] sm:$0xff] %v294
                %v296 = vld [vmem:[%s200 + $0x2f0] sm:$0xff]
                %297 = vst [vmem:[%s201 + $0x178] sm:$0xff] %v296
                %v298 = vld [vmem:[%s200 + $0x300] sm:$0xff]
                %299 = vst [vmem:[%s201 + $0x180] sm:$0xff] %v298
                %v300 = vld [vmem:[%s200 + $0x310] sm:$0xff]
                %301 = vst [vmem:[%s201 + $0x188] sm:$0xff] %v300
                %v302 = vld [vmem:[%s200 + $0x320] sm:$0xff]
                %303 = vst [vmem:[%s201 + $0x190] sm:$0xff] %v302
                %v304 = vld [vmem:[%s200 + $0x330] sm:$0xff]
                %305 = vst [vmem:[%s201 + $0x198] sm:$0xff] %v304
                %v306 = vld [vmem:[%s200 + $0x340] sm:$0xff]
                %307 = vst [vmem:[%s201 + $0x1a0] sm:$0xff] %v306
                %v308 = vld [vmem:[%s200 + $0x350] sm:$0xff]
                %309 = vst [vmem:[%s201 + $0x1a8] sm:$0xff] %v308
                %v310 = vld [vmem:[%s200 + $0x360] sm:$0xff]
                %311 = vst [vmem:[%s201 + $0x1b0] sm:$0xff] %v310
                %v312 = vld [vmem:[%s200 + $0x370] sm:$0xff]
                %313 = vst [vmem:[%s201 + $0x1b8] sm:$0xff] %v312
                %v314 = vld [vmem:[%s200 + $0x380] sm:$0xff]
                %315 = vst [vmem:[%s201 + $0x1c0] sm:$0xff] %v314
                %v316 = vld [vmem:[%s200 + $0x390] sm:$0xff]
                %317 = vst [vmem:[%s201 + $0x1c8] sm:$0xff] %v316
                %v318 = vld [vmem:[%s200 + $0x3a0] sm:$0xff]
                %319 = vst [vmem:[%s201 + $0x1d0] sm:$0xff] %v318
                %v320 = vld [vmem:[%s200 + $0x3b0] sm:$0xff]
                %321 = vst [vmem:[%s201 + $0x1d8] sm:$0xff] %v320
                %v322 = vld [vmem:[%s200 + $0x3c0] sm:$0xff]
                %323 = vst [vmem:[%s201 + $0x1e0] sm:$0xff] %v322
                %v324 = vld [vmem:[%s200 + $0x3d0] sm:$0xff]
                %325 = vst [vmem:[%s201 + $0x1e8] sm:$0xff] %v324
                %v326 = vld [vmem:[%s200 + $0x3e0] sm:$0xff]
                %327 = vst [vmem:[%s201 + $0x1f0] sm:$0xff] %v326
                %v328 = vld [vmem:[%s200 + $0x3f0] sm:$0xff]
                %329 = vst [vmem:[%s201 + $0x1f8] sm:$0xff] %v328
              $region60: #{discriminator_forward.8} parent=54 // loop_footer
                %s199 = sadd.s32 1, %s195
              $region61: #{discriminator_forward.8} parent=54 // loop_footer_branch
                %194 = sbr.rel target = $region57
              $region62: #{discriminator_forward.8} parent=54 // loop_exit
                _
            $region55: #{discriminator_forward.8} parent=46 // pred_fallthru
              _
          $region47: #{discriminator_forward.8} parent=42 // pred_fallthru
            _
          %470 = vnop
        $region43: #{discriminator_forward.8} parent=15 // pred_fallthru
          _
      $region16: #{discriminator_forward.8} parent=5 // pred_fallthru
        _
      %p471 = scmp.le.s32.totalorder 1, %s8
      %p472 = scmp.lt.s32.totalorder %s8, 17
      %p473 = pnand %p471, %p472
      %p474 = pneg %p473
      // Predicated region
      $region78: #{discriminator_forward.8} parent=5 // pred_check
        _
      $region79: #{discriminator_forward.8} parent=5 // pred_check_branch
        %476 = sbr.rel (%p473) target = $region81
      $region80: #{discriminator_forward.8} parent=5 // pred_region
        %s477 = ssub.s32 %s8, 1
        %s478 = sand.u32 %s42, 1
        %s479 = sand.u32 %s42, 1
        %s480 = smul.addr %s479, 64
        %s481 = scalar_lea.vmem [#allocation3], %s480
        // Predicated region
        $region82: #{discriminator_forward.8} parent=80 // pred_check
          %p482 = pneg %p55
        $region83: #{discriminator_forward.8} parent=80 // pred_check_branch
          %484 = sbr.rel (%p482) target = $region85
        $region84: #{discriminator_forward.8} parent=80 // pred_region
          _
        $region85: #{discriminator_forward.8} parent=80 // pred_fallthru
          _
        %s485 = sand.u32 %s70, 1
        %s486 = sand.u32 %s70, 1
        %s487 = smul.addr %s486, 512
        %s488 = scalar_lea.vmem [#allocation4], %s487
        // Predicated region
        $region86: #{discriminator_forward.8} parent=80 // pred_check
          %p489 = pneg %p83
        $region87: #{discriminator_forward.8} parent=80 // pred_check_branch
          %491 = sbr.rel (%p489) target = $region89
        $region88: #{discriminator_forward.8} parent=80 // pred_region
          _
        $region89: #{discriminator_forward.8} parent=80 // pred_fallthru
          _
        %s492 = sand.u32 %s42, 1
        %s493 = sand.u32 %s42, 1
        %s494 = smul.addr %s493, 64
        %s495 = scalar_lea.vmem [#allocation3], %s494
        %p496 = pneg %p55
        %p497 = pneg %p52
        %s498 = sand.u32 %s70, 1
        %s499 = sand.u32 %s70, 1
        %s500 = smul.addr %s499, 512
        %s501 = scalar_lea.vmem [#allocation4], %s500
        %p502 = pneg %p83
        %p503 = pneg %p80
        %p504 = pneg %p111
        %p505 = pneg %p108
        %s506 = sand.u32 %s98, 1
        %s507 = sand.u32 %s98, 1
        %s508 = smul.addr %s507, 64
        %s509 = scalar_lea.vmem [#allocation5], %s508
        %s510 = smul.u32 4, %s18
        %s511 = smul.u32 4, %s20
        %s512 = smul.u32 64, %s20
        %s513 = smul.u32 2, %s19
        %s514 = smul.u32 4, %s18
        %s515 = smul.u32 2, %s19
        %p516 = scmp.eq.s32.totalorder %s20, 0
        // Predicated region
        $region90: #{discriminator_forward.8} parent=80 // pred_check
          %p517 = pneg %p516
        $region91: #{discriminator_forward.8} parent=80 // pred_check_branch
          %519 = sbr.rel (%p517) target = $region93
        $region92: #{discriminator_forward.8} parent=80 // pred_region
          %520 = vst [vmem:[#allocation2] sm:$0xff] 0.0
          %521 = vst [vmem:[#allocation2 + $0x8] sm:$0xff] 0.0
          %522 = vst [vmem:[#allocation2 + $0x10] sm:$0xff] 0.0
          %523 = vst [vmem:[#allocation2 + $0x18] sm:$0xff] 0.0
          %524 = vst [vmem:[#allocation2 + $0x20] sm:$0xff] 0.0
          %525 = vst [vmem:[#allocation2 + $0x28] sm:$0xff] 0.0
          %526 = vst [vmem:[#allocation2 + $0x30] sm:$0xff] 0.0
          %527 = vst [vmem:[#allocation2 + $0x38] sm:$0xff] 0.0
        $region93: #{discriminator_forward.8} parent=80 // pred_fallthru
          _
        %v528 = vld [vmem:[#allocation2] sm:$0xff]
        %v529 = vld [vmem:[#allocation2 + $0x8] sm:$0xff]
        %v530 = vld [vmem:[#allocation2 + $0x10] sm:$0xff]
        %v531 = vld [vmem:[#allocation2 + $0x18] sm:$0xff]
        %v532 = vld [vmem:[#allocation2 + $0x20] sm:$0xff]
        %v533 = vld [vmem:[#allocation2 + $0x28] sm:$0xff]
        %v534 = vld [vmem:[#allocation2 + $0x30] sm:$0xff]
        %v535 = vld [vmem:[#allocation2 + $0x38] sm:$0xff]
        %v536 = vld [vmem:[%s481] sm:$0xff]
        %v537 = vld [vmem:[%s481 + $0x8] sm:$0xff]
        %v538 = vld [vmem:[%s481 + $0x10] sm:$0xff]
        %v539 = vld [vmem:[%s481 + $0x18] sm:$0xff]
        %v540 = vld [vmem:[%s481 + $0x20] sm:$0xff]
        %v541 = vld [vmem:[%s481 + $0x28] sm:$0xff]
        %v542 = vld [vmem:[%s481 + $0x30] sm:$0xff]
        %v543 = vld [vmem:[%s481 + $0x38] sm:$0xff]
        %v544 = vld [vmem:[%s488] sm:$0xff]
        %v545 = vld [vmem:[%s488 + $0x8] sm:$0xff]
        %v546 = vld [vmem:[%s488 + $0x10] sm:$0xff]
        %v547 = vld [vmem:[%s488 + $0x18] sm:$0xff]
        %v548 = vld [vmem:[%s488 + $0x20] sm:$0xff]
        %v549 = vld [vmem:[%s488 + $0x28] sm:$0xff]
        %v550 = vld [vmem:[%s488 + $0x30] sm:$0xff]
        %v551 = vld [vmem:[%s488 + $0x38] sm:$0xff]
        %v552 = vld [vmem:[%s488 + $0x40] sm:$0xff]
        %v553 = vld [vmem:[%s488 + $0x48] sm:$0xff]
        %v554 = vld [vmem:[%s488 + $0x50] sm:$0xff]
        %v555 = vld [vmem:[%s488 + $0x58] sm:$0xff]
        %v556 = vld [vmem:[%s488 + $0x60] sm:$0xff]
        %v557 = vld [vmem:[%s488 + $0x68] sm:$0xff]
        %v558 = vld [vmem:[%s488 + $0x70] sm:$0xff]
        %v559 = vld [vmem:[%s488 + $0x78] sm:$0xff]
        %v560 = vld [vmem:[%s488 + $0x80] sm:$0xff]
        %v561 = vld [vmem:[%s488 + $0x88] sm:$0xff]
        %v562 = vld [vmem:[%s488 + $0x90] sm:$0xff]
        %v563 = vld [vmem:[%s488 + $0x98] sm:$0xff]
        %v564 = vld [vmem:[%s488 + $0xa0] sm:$0xff]
        %v565 = vld [vmem:[%s488 + $0xa8] sm:$0xff]
        %v566 = vld [vmem:[%s488 + $0xb0] sm:$0xff]
        %v567 = vld [vmem:[%s488 + $0xb8] sm:$0xff]
        %v568 = vld [vmem:[%s488 + $0xc0] sm:$0xff]
        %v569 = vld [vmem:[%s488 + $0xc8] sm:$0xff]
        %v570 = vld [vmem:[%s488 + $0xd0] sm:$0xff]
        %v571 = vld [vmem:[%s488 + $0xd8] sm:$0xff]
        %v572 = vld [vmem:[%s488 + $0xe0] sm:$0xff]
        %v573 = vld [vmem:[%s488 + $0xe8] sm:$0xff]
        %v574 = vld [vmem:[%s488 + $0xf0] sm:$0xff]
        %v575 = vld [vmem:[%s488 + $0xf8] sm:$0xff]
        %v576 = vld [vmem:[%s488 + $0x100] sm:$0xff]
        %v577 = vld [vmem:[%s488 + $0x108] sm:$0xff]
        %v578 = vld [vmem:[%s488 + $0x110] sm:$0xff]
        %v579 = vld [vmem:[%s488 + $0x118] sm:$0xff]
        %v580 = vld [vmem:[%s488 + $0x120] sm:$0xff]
        %v581 = vld [vmem:[%s488 + $0x128] sm:$0xff]
        %v582 = vld [vmem:[%s488 + $0x130] sm:$0xff]
        %v583 = vld [vmem:[%s488 + $0x138] sm:$0xff]
        %v584 = vld [vmem:[%s488 + $0x140] sm:$0xff]
        %v585 = vld [vmem:[%s488 + $0x148] sm:$0xff]
        %v586 = vld [vmem:[%s488 + $0x150] sm:$0xff]
        %v587 = vld [vmem:[%s488 + $0x158] sm:$0xff]
        %v588 = vld [vmem:[%s488 + $0x160] sm:$0xff]
        %v589 = vld [vmem:[%s488 + $0x168] sm:$0xff]
        %v590 = vld [vmem:[%s488 + $0x170] sm:$0xff]
        %v591 = vld [vmem:[%s488 + $0x178] sm:$0xff]
        %v592 = vld [vmem:[%s488 + $0x180] sm:$0xff]
        %v593 = vld [vmem:[%s488 + $0x188] sm:$0xff]
        %v594 = vld [vmem:[%s488 + $0x190] sm:$0xff]
        %v595 = vld [vmem:[%s488 + $0x198] sm:$0xff]
        %v596 = vld [vmem:[%s488 + $0x1a0] sm:$0xff]
        %v597 = vld [vmem:[%s488 + $0x1a8] sm:$0xff]
        %v598 = vld [vmem:[%s488 + $0x1b0] sm:$0xff]
        %v599 = vld [vmem:[%s488 + $0x1b8] sm:$0xff]
        %v600 = vld [vmem:[%s488 + $0x1c0] sm:$0xff]
        %v601 = vld [vmem:[%s488 + $0x1c8] sm:$0xff]
        %v602 = vld [vmem:[%s488 + $0x1d0] sm:$0xff]
        %v603 = vld [vmem:[%s488 + $0x1d8] sm:$0xff]
        %v604 = vld [vmem:[%s488 + $0x1e0] sm:$0xff]
        %v605 = vld [vmem:[%s488 + $0x1e8] sm:$0xff]
        %v606 = vld [vmem:[%s488 + $0x1f0] sm:$0xff]
        %v607 = vld [vmem:[%s488 + $0x1f8] sm:$0xff]
        %v616 = vunpack.c.l.b16 %v536
        %v617 = vunpack.c.h.b16 %v536
        %v618 = vunpack.c.l.b16 %v537
        %v619 = vunpack.c.h.b16 %v537
        %v620 = vunpack.c.l.b16 %v538
        %v621 = vunpack.c.h.b16 %v538
        %v622 = vunpack.c.l.b16 %v539
        %v623 = vunpack.c.h.b16 %v539
        %v624 = vunpack.c.l.b16 %v540
        %v625 = vunpack.c.h.b16 %v540
        %v626 = vunpack.c.l.b16 %v541
        %v627 = vunpack.c.h.b16 %v541
        %v628 = vunpack.c.l.b16 %v542
        %v629 = vunpack.c.h.b16 %v542
        %v630 = vunpack.c.l.b16 %v543
        %v631 = vunpack.c.h.b16 %v543
        %v632 = vpack.c.b16 %v620, %v616
        %v633 = vpack.c.b16 %v621, %v617
        %v634 = vpack.c.b16 %v622, %v618
        %v635 = vpack.c.b16 %v623, %v619
        %v636 = vpack.c.b16 %v628, %v624
        %v637 = vpack.c.b16 %v629, %v625
        %v638 = vpack.c.b16 %v630, %v626
        %v639 = vpack.c.b16 %v631, %v627
        %v712 = vunpack.c.l.b16 %v544
        %v713 = vunpack.c.h.b16 %v544
        %v714 = vunpack.c.l.b16 %v545
        %v715 = vunpack.c.h.b16 %v545
        %v716 = vunpack.c.l.b16 %v546
        %v717 = vunpack.c.h.b16 %v546
        %v718 = vunpack.c.l.b16 %v547
        %v719 = vunpack.c.h.b16 %v547
        %v720 = vunpack.c.l.b16 %v548
        %v721 = vunpack.c.h.b16 %v548
        %v722 = vunpack.c.l.b16 %v549
        %v723 = vunpack.c.h.b16 %v549
        %v724 = vunpack.c.l.b16 %v550
        %v725 = vunpack.c.h.b16 %v550
        %v726 = vunpack.c.l.b16 %v551
        %v727 = vunpack.c.h.b16 %v551
        %v728 = vunpack.c.l.b16 %v552
        %v729 = vunpack.c.h.b16 %v552
        %v730 = vunpack.c.l.b16 %v553
        %v731 = vunpack.c.h.b16 %v553
        %v732 = vunpack.c.l.b16 %v554
        %v733 = vunpack.c.h.b16 %v554
        %v734 = vunpack.c.l.b16 %v555
        %v735 = vunpack.c.h.b16 %v555
        %v736 = vunpack.c.l.b16 %v556
        %v737 = vunpack.c.h.b16 %v556
        %v738 = vunpack.c.l.b16 %v557
        %v739 = vunpack.c.h.b16 %v557
        %v740 = vunpack.c.l.b16 %v558
        %v741 = vunpack.c.h.b16 %v558
        %v742 = vunpack.c.l.b16 %v559
        %v743 = vunpack.c.h.b16 %v559
        %v744 = vunpack.c.l.b16 %v560
        %v745 = vunpack.c.h.b16 %v560
        %v746 = vunpack.c.l.b16 %v561
        %v747 = vunpack.c.h.b16 %v561
        %v748 = vunpack.c.l.b16 %v562
        %v749 = vunpack.c.h.b16 %v562
        %v750 = vunpack.c.l.b16 %v563
        %v751 = vunpack.c.h.b16 %v563
        %v752 = vunpack.c.l.b16 %v564
        %v753 = vunpack.c.h.b16 %v564
        %v754 = vunpack.c.l.b16 %v565
        %v755 = vunpack.c.h.b16 %v565
        %v756 = vunpack.c.l.b16 %v566
        %v757 = vunpack.c.h.b16 %v566
        %v758 = vunpack.c.l.b16 %v567
        %v759 = vunpack.c.h.b16 %v567
        %v760 = vunpack.c.l.b16 %v568
        %v761 = vunpack.c.h.b16 %v568
        %v762 = vunpack.c.l.b16 %v569
        %v763 = vunpack.c.h.b16 %v569
        %v764 = vunpack.c.l.b16 %v570
        %v765 = vunpack.c.h.b16 %v570
        %v766 = vunpack.c.l.b16 %v571
        %v767 = vunpack.c.h.b16 %v571
        %v768 = vunpack.c.l.b16 %v572
        %v769 = vunpack.c.h.b16 %v572
        %v770 = vunpack.c.l.b16 %v573
        %v771 = vunpack.c.h.b16 %v573
        %v772 = vunpack.c.l.b16 %v574
        %v773 = vunpack.c.h.b16 %v574
        %v774 = vunpack.c.l.b16 %v575
        %v775 = vunpack.c.h.b16 %v575
        %v776 = vunpack.c.l.b16 %v576
        %v777 = vunpack.c.h.b16 %v576
        %v778 = vunpack.c.l.b16 %v577
        %v779 = vunpack.c.h.b16 %v577
        %v780 = vunpack.c.l.b16 %v578
        %v781 = vunpack.c.h.b16 %v578
        %v782 = vunpack.c.l.b16 %v579
        %v783 = vunpack.c.h.b16 %v579
        %v784 = vunpack.c.l.b16 %v580
        %v785 = vunpack.c.h.b16 %v580
        %v786 = vunpack.c.l.b16 %v581
        %v787 = vunpack.c.h.b16 %v581
        %v788 = vunpack.c.l.b16 %v582
        %v789 = vunpack.c.h.b16 %v582
        %v790 = vunpack.c.l.b16 %v583
        %v791 = vunpack.c.h.b16 %v583
        %v792 = vunpack.c.l.b16 %v584
        %v793 = vunpack.c.h.b16 %v584
        %v794 = vunpack.c.l.b16 %v585
        %v795 = vunpack.c.h.b16 %v585
        %v796 = vunpack.c.l.b16 %v586
        %v797 = vunpack.c.h.b16 %v586
        %v798 = vunpack.c.l.b16 %v587
        %v799 = vunpack.c.h.b16 %v587
        %v800 = vunpack.c.l.b16 %v588
        %v801 = vunpack.c.h.b16 %v588
        %v802 = vunpack.c.l.b16 %v589
        %v803 = vunpack.c.h.b16 %v589
        %v804 = vunpack.c.l.b16 %v590
        %v805 = vunpack.c.h.b16 %v590
        %v806 = vunpack.c.l.b16 %v591
        %v807 = vunpack.c.h.b16 %v591
        %v808 = vunpack.c.l.b16 %v592
        %v809 = vunpack.c.h.b16 %v592
        %v810 = vunpack.c.l.b16 %v593
        %v811 = vunpack.c.h.b16 %v593
        %v812 = vunpack.c.l.b16 %v594
        %v813 = vunpack.c.h.b16 %v594
        %v814 = vunpack.c.l.b16 %v595
        %v815 = vunpack.c.h.b16 %v595
        %v816 = vunpack.c.l.b16 %v596
        %v817 = vunpack.c.h.b16 %v596
        %v818 = vunpack.c.l.b16 %v597
        %v819 = vunpack.c.h.b16 %v597
        %v820 = vunpack.c.l.b16 %v598
        %v821 = vunpack.c.h.b16 %v598
        %v822 = vunpack.c.l.b16 %v599
        %v823 = vunpack.c.h.b16 %v599
        %v824 = vunpack.c.l.b16 %v600
        %v825 = vunpack.c.h.b16 %v600
        %v826 = vunpack.c.l.b16 %v601
        %v827 = vunpack.c.h.b16 %v601
        %v828 = vunpack.c.l.b16 %v602
        %v829 = vunpack.c.h.b16 %v602
        %v830 = vunpack.c.l.b16 %v603
        %v831 = vunpack.c.h.b16 %v603
        %v832 = vunpack.c.l.b16 %v604
        %v833 = vunpack.c.h.b16 %v604
        %v834 = vunpack.c.l.b16 %v605
        %v835 = vunpack.c.h.b16 %v605
        %v836 = vunpack.c.l.b16 %v606
        %v837 = vunpack.c.h.b16 %v606
        %v838 = vunpack.c.l.b16 %v607
        %v839 = vunpack.c.h.b16 %v607
        %v840 = vpack.c.b16 %v714, %v712
        %v841 = vpack.c.b16 %v715, %v713
        %v842 = vpack.c.b16 %v718, %v716
        %v843 = vpack.c.b16 %v719, %v717
        %v844 = vpack.c.b16 %v722, %v720
        %v845 = vpack.c.b16 %v723, %v721
        %v846 = vpack.c.b16 %v726, %v724
        %v847 = vpack.c.b16 %v727, %v725
        %v848 = vpack.c.b16 %v730, %v728
        %v849 = vpack.c.b16 %v731, %v729
        %v850 = vpack.c.b16 %v734, %v732
        %v851 = vpack.c.b16 %v735, %v733
        %v852 = vpack.c.b16 %v738, %v736
        %v853 = vpack.c.b16 %v739, %v737
        %v854 = vpack.c.b16 %v742, %v740
        %v855 = vpack.c.b16 %v743, %v741
        %v856 = vpack.c.b16 %v746, %v744
        %v857 = vpack.c.b16 %v747, %v745
        %v858 = vpack.c.b16 %v750, %v748
        %v859 = vpack.c.b16 %v751, %v749
        %v860 = vpack.c.b16 %v754, %v752
        %v861 = vpack.c.b16 %v755, %v753
        %v862 = vpack.c.b16 %v758, %v756
        %v863 = vpack.c.b16 %v759, %v757
        %v864 = vpack.c.b16 %v762, %v760
        %v865 = vpack.c.b16 %v763, %v761
        %v866 = vpack.c.b16 %v766, %v764
        %v867 = vpack.c.b16 %v767, %v765
        %v868 = vpack.c.b16 %v770, %v768
        %v869 = vpack.c.b16 %v771, %v769
        %v870 = vpack.c.b16 %v774, %v772
        %v871 = vpack.c.b16 %v775, %v773
        %v872 = vpack.c.b16 %v778, %v776
        %v873 = vpack.c.b16 %v779, %v777
        %v874 = vpack.c.b16 %v782, %v780
        %v875 = vpack.c.b16 %v783, %v781
        %v876 = vpack.c.b16 %v786, %v784
        %v877 = vpack.c.b16 %v787, %v785
        %v878 = vpack.c.b16 %v790, %v788
        %v879 = vpack.c.b16 %v791, %v789
        %v880 = vpack.c.b16 %v794, %v792
        %v881 = vpack.c.b16 %v795, %v793
        %v882 = vpack.c.b16 %v798, %v796
        %v883 = vpack.c.b16 %v799, %v797
        %v884 = vpack.c.b16 %v802, %v800
        %v885 = vpack.c.b16 %v803, %v801
        %v886 = vpack.c.b16 %v806, %v804
        %v887 = vpack.c.b16 %v807, %v805
        %v888 = vpack.c.b16 %v810, %v808
        %v889 = vpack.c.b16 %v811, %v809
        %v890 = vpack.c.b16 %v814, %v812
        %v891 = vpack.c.b16 %v815, %v813
        %v892 = vpack.c.b16 %v818, %v816
        %v893 = vpack.c.b16 %v819, %v817
        %v894 = vpack.c.b16 %v822, %v820
        %v895 = vpack.c.b16 %v823, %v821
        %v896 = vpack.c.b16 %v826, %v824
        %v897 = vpack.c.b16 %v827, %v825
        %v898 = vpack.c.b16 %v830, %v828
        %v899 = vpack.c.b16 %v831, %v829
        %v900 = vpack.c.b16 %v834, %v832
        %v901 = vpack.c.b16 %v835, %v833
        %v902 = vpack.c.b16 %v838, %v836
        %v903 = vpack.c.b16 %v839, %v837
        %968 = vmatprep.subr.bf16.mxu0 %v841
        %969 = vmatpush1.bf16.msra.mxu0 %v840
        %970 = vmatprep.subr.bf16.mxu0 %v843
        %971 = vmatpush1.bf16.msra.mxu0 %v842
        %972 = vmatprep.subr.bf16.mxu0 %v845
        %973 = vmatpush1.bf16.msra.mxu0 %v844
        %974 = vmatprep.subr.bf16.mxu0 %v847
        %975 = vmatpush1.bf16.msra.mxu0 %v846
        %976 = vmatprep.subr.bf16.mxu0 %v849
        %977 = vmatpush1.bf16.msra.mxu0 %v848
        %978 = vmatprep.subr.bf16.mxu0 %v851
        %979 = vmatpush1.bf16.msra.mxu0 %v850
        %980 = vmatprep.subr.bf16.mxu0 %v853
        %981 = vmatpush1.bf16.msra.mxu0 %v852
        %982 = vmatprep.subr.bf16.mxu0 %v855
        %983 = vmatpush1.bf16.msra.mxu0 %v854
        %984 = vmatprep.subr.bf16.mxu0 %v857
        %985 = vmatpush1.bf16.msra.mxu0 %v856
        %986 = vmatprep.subr.bf16.mxu0 %v859
        %987 = vmatpush1.bf16.msra.mxu0 %v858
        %988 = vmatprep.subr.bf16.mxu0 %v861
        %989 = vmatpush1.bf16.msra.mxu0 %v860
        %990 = vmatprep.subr.bf16.mxu0 %v863
        %991 = vmatpush1.bf16.msra.mxu0 %v862
        %992 = vmatprep.subr.bf16.mxu0 %v865
        %993 = vmatpush1.bf16.msra.mxu0 %v864
        %994 = vmatprep.subr.bf16.mxu0 %v867
        %995 = vmatpush1.bf16.msra.mxu0 %v866
        %996 = vmatprep.subr.bf16.mxu0 %v869
        %997 = vmatpush1.bf16.msra.mxu0 %v868
        %998 = vmatprep.subr.bf16.mxu0 %v871
        %999 = vmatpush1.bf16.msra.mxu0 %v870
        %1000 = vmatprep.mubr.bf16.mxu0 %v633
        %1001 = vmatmul.mubr.bf16.gmra.mrb[0].mxu0 %v632
        %v1002 = vpop.f32.mrb[0].mxu0
        %v1003 = vadd.f32 0.0, %v1002
        %v1004 = vpop.f32.mrb[0].mxu0
        %v1005 = vadd.f32 0.0, %v1004
        %v1006 = vpop.f32.mrb[0].mxu0
        %v1007 = vadd.f32 0.0, %v1006
        %v1008 = vpop.f32.mrb[0].mxu0
        %v1009 = vadd.f32 0.0, %v1008
        %1010 = vmatprep.mubr.bf16.mxu0 %v637
        %1011 = vmatmul.mubr.bf16.gmra.mrb[0].mxu0 %v636
        %v1012 = vpop.f32.mrb[0].mxu0
        %v1013 = vadd.f32 0.0, %v1012
        %v1014 = vpop.f32.mrb[0].mxu0
        %v1015 = vadd.f32 0.0, %v1014
        %v1016 = vpop.f32.mrb[0].mxu0
        %v1017 = vadd.f32 0.0, %v1016
        %v1018 = vpop.f32.mrb[0].mxu0
        %v1019 = vadd.f32 0.0, %v1018
        %1020 = vdwg.mxu0
        %1021 = vmatprep.subr.bf16.mxu0 %v873
        %1022 = vmatpush1.bf16.msra.mxu0 %v872
        %1023 = vmatprep.subr.bf16.mxu0 %v875
        %1024 = vmatpush1.bf16.msra.mxu0 %v874
        %1025 = vmatprep.subr.bf16.mxu0 %v877
        %1026 = vmatpush1.bf16.msra.mxu0 %v876
        %1027 = vmatprep.subr.bf16.mxu0 %v879
        %1028 = vmatpush1.bf16.msra.mxu0 %v878
        %1029 = vmatprep.subr.bf16.mxu0 %v881
        %1030 = vmatpush1.bf16.msra.mxu0 %v880
        %1031 = vmatprep.subr.bf16.mxu0 %v883
        %1032 = vmatpush1.bf16.msra.mxu0 %v882
        %1033 = vmatprep.subr.bf16.mxu0 %v885
        %1034 = vmatpush1.bf16.msra.mxu0 %v884
        %1035 = vmatprep.subr.bf16.mxu0 %v887
        %1036 = vmatpush1.bf16.msra.mxu0 %v886
        %1037 = vmatprep.subr.bf16.mxu0 %v889
        %1038 = vmatpush1.bf16.msra.mxu0 %v888
        %1039 = vmatprep.subr.bf16.mxu0 %v891
        %1040 = vmatpush1.bf16.msra.mxu0 %v890
        %1041 = vmatprep.subr.bf16.mxu0 %v893
        %1042 = vmatpush1.bf16.msra.mxu0 %v892
        %1043 = vmatprep.subr.bf16.mxu0 %v895
        %1044 = vmatpush1.bf16.msra.mxu0 %v894
        %1045 = vmatprep.subr.bf16.mxu0 %v897
        %1046 = vmatpush1.bf16.msra.mxu0 %v896
        %1047 = vmatprep.subr.bf16.mxu0 %v899
        %1048 = vmatpush1.bf16.msra.mxu0 %v898
        %1049 = vmatprep.subr.bf16.mxu0 %v901
        %1050 = vmatpush1.bf16.msra.mxu0 %v900
        %1051 = vmatprep.subr.bf16.mxu0 %v903
        %1052 = vmatpush1.bf16.msra.mxu0 %v902
        %1053 = vmatprep.mubr.bf16.mxu0 %v635
        %1054 = vmatmul.mubr.bf16.gmra.mrb[0].mxu0 %v634
        %v1055 = vpop.f32.mrb[0].mxu0
        %v1056 = vadd.f32 %v1003, %v1055
        %v1057 = vpop.f32.mrb[0].mxu0
        %v1058 = vadd.f32 %v1005, %v1057
        %v1059 = vpop.f32.mrb[0].mxu0
        %v1060 = vadd.f32 %v1007, %v1059
        %v1061 = vpop.f32.mrb[0].mxu0
        %v1062 = vadd.f32 %v1009, %v1061
        %1063 = vmatprep.mubr.bf16.mxu0 %v639
        %1064 = vmatmul.mubr.bf16.gmra.mrb[0].mxu0 %v638
        %v1065 = vpop.f32.mrb[0].mxu0
        %v1066 = vadd.f32 %v1013, %v1065
        %v1067 = vpop.f32.mrb[0].mxu0
        %v1068 = vadd.f32 %v1015, %v1067
        %v1069 = vpop.f32.mrb[0].mxu0
        %v1070 = vadd.f32 %v1017, %v1069
        %v1071 = vpop.f32.mrb[0].mxu0
        %v1072 = vadd.f32 %v1019, %v1071
        %1073 = vdwg.mxu0
        %v1074 = vadd.f32 %v528, %v1056
        %v1075 = vadd.f32 %v529, %v1058
        %v1076 = vadd.f32 %v530, %v1060
        %v1077 = vadd.f32 %v531, %v1062
        %v1078 = vadd.f32 %v532, %v1066
        %v1079 = vadd.f32 %v533, %v1068
        %v1080 = vadd.f32 %v534, %v1070
        %v1081 = vadd.f32 %v535, %v1072
        %1082 = vst [vmem:[#allocation2] sm:$0xff] %v1074
        %1083 = vst [vmem:[#allocation2 + $0x8] sm:$0xff] %v1075
        %1084 = vst [vmem:[#allocation2 + $0x10] sm:$0xff] %v1076
        %1085 = vst [vmem:[#allocation2 + $0x18] sm:$0xff] %v1077
        %1086 = vst [vmem:[#allocation2 + $0x20] sm:$0xff] %v1078
        %1087 = vst [vmem:[#allocation2 + $0x28] sm:$0xff] %v1079
        %1088 = vst [vmem:[#allocation2 + $0x30] sm:$0xff] %v1080
        %1089 = vst [vmem:[#allocation2 + $0x38] sm:$0xff] %v1081
        %p1090 = scmp.eq.s32.totalorder %s20, 7
        // Predicated region
        $region94: #{discriminator_forward.8} parent=80 // pred_check
          %p1091 = pneg %p1090
        $region95: #{discriminator_forward.8} parent=80 // pred_check_branch
          %1093 = sbr.rel (%p1091) target = $region97
        $region96: #{discriminator_forward.8} parent=80 // pred_region
          %v1094 = vld [vmem:[#allocation2] sm:$0xff]
          %v1095 = vld [vmem:[#allocation2 + $0x8] sm:$0xff]
          %v1096 = vld [vmem:[#allocation2 + $0x10] sm:$0xff]
          %v1097 = vld [vmem:[#allocation2 + $0x18] sm:$0xff]
          %v1098 = vld [vmem:[#allocation2 + $0x20] sm:$0xff]
          %v1099 = vld [vmem:[#allocation2 + $0x28] sm:$0xff]
          %v1100 = vld [vmem:[#allocation2 + $0x30] sm:$0xff]
          %v1101 = vld [vmem:[#allocation2 + $0x38] sm:$0xff]
          %vm1102 = vcmp.ge.f32.partialorder %v1094, 0.0
          %vm1103 = vcmp.ge.f32.partialorder %v1095, 0.0
          %vm1104 = vcmp.ge.f32.partialorder %v1096, 0.0
          %vm1105 = vcmp.ge.f32.partialorder %v1097, 0.0
          %vm1106 = vcmp.ge.f32.partialorder %v1098, 0.0
          %vm1107 = vcmp.ge.f32.partialorder %v1099, 0.0
          %vm1108 = vcmp.ge.f32.partialorder %v1100, 0.0
          %vm1109 = vcmp.ge.f32.partialorder %v1101, 0.0
          %v1110 = vmul.f32 %v1094, 0.2
          %v1111 = vmul.f32 %v1095, 0.2
          %v1112 = vmul.f32 %v1096, 0.2
          %v1113 = vmul.f32 %v1097, 0.2
          %v1114 = vmul.f32 %v1098, 0.2
          %v1115 = vmul.f32 %v1099, 0.2
          %v1116 = vmul.f32 %v1100, 0.2
          %v1117 = vmul.f32 %v1101, 0.2
          %v1118 = vsel %vm1102, %v1094, %v1110
          %v1119 = vsel %vm1103, %v1095, %v1111
          %v1120 = vsel %vm1104, %v1096, %v1112
          %v1121 = vsel %vm1105, %v1097, %v1113
          %v1122 = vsel %vm1106, %v1098, %v1114
          %v1123 = vsel %vm1107, %v1099, %v1115
          %v1124 = vsel %vm1108, %v1100, %v1116
          %v1125 = vsel %vm1109, %v1101, %v1117
          %1126 = vst [vmem:[%s509] sm:$0xff] %v1118
          %1127 = vst [vmem:[%s509 + $0x8] sm:$0xff] %v1119
          %1128 = vst [vmem:[%s509 + $0x10] sm:$0xff] %v1120
          %1129 = vst [vmem:[%s509 + $0x18] sm:$0xff] %v1121
          %1130 = vst [vmem:[%s509 + $0x20] sm:$0xff] %v1122
          %1131 = vst [vmem:[%s509 + $0x28] sm:$0xff] %v1123
          %1132 = vst [vmem:[%s509 + $0x30] sm:$0xff] %v1124
          %1133 = vst [vmem:[%s509 + $0x38] sm:$0xff] %v1125
        $region97: #{discriminator_forward.8} parent=80 // pred_fallthru
          _
        %s1134 = sand.u32 %s98, 1
        %s1135 = sand.u32 %s98, 1
        %s1136 = smul.addr %s1135, 64
        %s1137 = scalar_lea.vmem [#allocation5], %s1136
        // Predicated region
        $region98: #{discriminator_forward.8} parent=80 // pred_check
          %p1138 = pneg %p108
        $region99: #{discriminator_forward.8} parent=80 // pred_check_branch
          %1140 = sbr.rel (%p1138) target = $region101
        $region100: #{discriminator_forward.8} parent=80 // pred_region
          %s1141 = smul.u32 4, %s18
          %s1142 = smul.u32 2, %s19
          %s1143 = smul.addr %s1141, 4
          %s1144 = sadd.s32 %s1142, %s1143
          %s1145 = smul.addr %s1144, 8
          %s1146 = scalar_lea.vmem %s2, %s1145
          // Predicated region
          $region102: #{discriminator_forward.8} parent=100 // pred_check
            _
          $region103: #{discriminator_forward.8} parent=100 // pred_check_branch
            %1148 = sbr.rel (0) target = $region105
          $region104: #{discriminator_forward.8} parent=100 // pred_region
            // Predicated region
            $region106: #{discriminator_forward.8} parent=104 // pred_check
              _
            $region107: #{discriminator_forward.8} parent=104 // pred_check_branch
              %1150 = sbr.rel (0) target = $region109
            $region108: #{discriminator_forward.8} parent=104 // pred_region
              loop: start=0, step=1, limit=1
              $region110: #{discriminator_forward.8} parent=108 // loop_pre_header
                _
              $region111: #{discriminator_forward.8} parent=108 // loop_header
                %s1152 = sphi 0, %s1156
                %p1153 = scmp.ge.s32.totalorder %s1152, 1
                %s1157 = sphi %s1137, %s1137
                %s1158 = sphi %s1146, %s1146
              $region112: #{discriminator_forward.8} parent=108 // loop_header_branch
                %1155 = sbr.rel (%p1153) target = $region116
              $region113: #{discriminator_forward.8} parent=108 // loop_body
                %v1159 = vld [vmem:[%s1157] sm:$0xff]
                %1160 = vst [vmem:[%s1158] sm:$0xff] %v1159
                %v1161 = vld [vmem:[%s1157 + $0x8] sm:$0xff]
                %1162 = vst [vmem:[%s1158 + $0x8] sm:$0xff] %v1161
                %v1163 = vld [vmem:[%s1157 + $0x10] sm:$0xff]
                %1164 = vst [vmem:[%s1158 + $0x20] sm:$0xff] %v1163
                %v1165 = vld [vmem:[%s1157 + $0x18] sm:$0xff]
                %1166 = vst [vmem:[%s1158 + $0x28] sm:$0xff] %v1165
                %v1167 = vld [vmem:[%s1157 + $0x20] sm:$0xff]
                %1168 = vst [vmem:[%s1158 + $0x40] sm:$0xff] %v1167
                %v1169 = vld [vmem:[%s1157 + $0x28] sm:$0xff]
                %1170 = vst [vmem:[%s1158 + $0x48] sm:$0xff] %v1169
                %v1171 = vld [vmem:[%s1157 + $0x30] sm:$0xff]
                %1172 = vst [vmem:[%s1158 + $0x60] sm:$0xff] %v1171
                %v1173 = vld [vmem:[%s1157 + $0x38] sm:$0xff]
                %1174 = vst [vmem:[%s1158 + $0x68] sm:$0xff] %v1173
              $region114: #{discriminator_forward.8} parent=108 // loop_footer
                %s1156 = sadd.s32 1, %s1152
              $region115: #{discriminator_forward.8} parent=108 // loop_footer_branch
                %1151 = sbr.rel target = $region111
              $region116: #{discriminator_forward.8} parent=108 // loop_exit
                _
            $region109: #{discriminator_forward.8} parent=104 // pred_fallthru
              _
            // Predicated region
            $region117: #{discriminator_forward.8} parent=104 // pred_check
              _
            $region118: #{discriminator_forward.8} parent=104 // pred_check_branch
              %1176 = sbr.rel target = $region120
            $region119: #{discriminator_forward.8} parent=104 // pred_region
              _
            $region120: #{discriminator_forward.8} parent=104 // pred_fallthru
              _
          $region105: #{discriminator_forward.8} parent=100 // pred_fallthru
            _
          %1177 = vnop
        $region101: #{discriminator_forward.8} parent=80 // pred_fallthru
          _
      $region81: #{discriminator_forward.8} parent=5 // pred_fallthru
        _
      %p1178 = scmp.le.s32.totalorder 2, %s8
      // Predicated region
      $region121: #{discriminator_forward.8} parent=5 // pred_check
        %p1179 = pneg %p1178
      $region122: #{discriminator_forward.8} parent=5 // pred_check_branch
        %1181 = sbr.rel (%p1179) target = $region124
      $region123: #{discriminator_forward.8} parent=5 // pred_region
        %s1182 = ssub.s32 %s8, 2
        // Predicated region
        $region125: #{discriminator_forward.8} parent=123 // pred_check
          %p1183 = pneg %p114
        $region126: #{discriminator_forward.8} parent=123 // pred_check_branch
          %1185 = sbr.rel (%p1183) target = $region128
        $region127: #{discriminator_forward.8} parent=123 // pred_region
          %s1186 = sand.u32 %s99, 1
          %s1187 = sand.u32 %s99, 1
          %s1188 = smul.addr %s1187, 64
          %s1189 = scalar_lea.vmem [#allocation5], %s1188
        $region128: #{discriminator_forward.8} parent=123 // pred_fallthru
          _
      $region124: #{discriminator_forward.8} parent=5 // pred_fallthru
        _
    $region6: #{discriminator_forward.8} parent=1 // loop_footer
      %s12 = sadd.s32 1, %s8
    $region7: #{discriminator_forward.8} parent=1 // loop_footer_branch
      %7 = sbr.rel target = $region3
    $region8: #{discriminator_forward.8} parent=1 // loop_exit
      _

// kernel: discriminator_forward.9
$region0: #{discriminator_forward.9}
  #allocation0 [shape = 'u32[]', space=smem, size = 0x4, offset = 0x4, fixed_abs, tag = 'smem constant byte address 0x4 - core index']
  #allocation1 [shape = 'u32[144,128]{1,0:T(1,128)}', space=vmem, size = 0x12000, scoped, tag = 'internal scratch']
  #allocation2 [shape = 'f32[16,128]{1,0:T(8,128)}', space=vmem, size = 0x2000, scoped, tag = 'scratch operand']
  %s0 = inlined_call_operand.vmem [shape: bf16[16,8192], index: 0, kind: input, shape index: {}]
  %s1 = inlined_call_operand.vmem [shape: bf16[8192,128], index: 1, kind: input, shape index: {}]
  %s2 = inlined_call_operand.vmem [shape: f32[16,128], index: 2, kind: output, shape index: {0}]
  %s3 = inlined_call_operand.vmem [shape: f32[16,128], index: 3, kind: output, shape index: {1}]
  %4 = xla_tuple %s2, %s3
  %s5 = sld [smem:[#allocation0]]
  $region80: #{discriminator_forward.9} parent=0
    _
  %s7 = ssub.s32 1, %s5
  %s8 = scalar_select 0, %s7, %s5
  $region1: #{discriminator_forward.9} parent=0
    #allocation3 [shape = 'u8[32768]{0}', space=vmem, size = 0x8000, scoped, tag = 'input window, operand 0']
    loop: start=0, step=1, limit=18
    $region2: #{discriminator_forward.9} parent=1 // loop_pre_header
      _
    $region3: #{discriminator_forward.9} parent=1 // loop_header
      %s10 = sphi 0, %s14
      %p11 = scmp.ge.s32.totalorder %s10, 18
      %s17 = sphi 0, %s36
      %s18 = sphi 0, %s32
      %s19 = sphi 0, %s28
      %s20 = sphi 0, %s17
      %s21 = sphi 0, %s18
      %s22 = sphi 0, %s19
      %s23 = sphi 0, %s20
      %s24 = sphi 0, %s21
      %s25 = sphi 0, %s22
      %s41 = sphi 0, %s43
      %s44 = sphi 0, %s41
      %s45 = sphi 0, %s44
      %s61 = sphi 0, %s45
      %s69 = sphi 0, %s71
      %s72 = sphi 0, %s69
      %s73 = sphi 0, %s72
      %s89 = sphi 0, %s73
      %s97 = sphi 0, %s99
      %s100 = sphi 0, %s97
      %s101 = sphi 0, %s100
      %s117 = sphi 0, %s101
      %s125 = sphi 0, %s127
      %s128 = sphi 0, %s125
      %s129 = sphi 0, %s128
      %s145 = sphi 0, %s129
    $region4: #{discriminator_forward.9} parent=1 // loop_header_branch
      %13 = sbr.rel (%p11) target = $region8
    $region5: #{discriminator_forward.9} parent=1 // loop_body
      %s15 = ssub.s32 %s10, 1
      %s16 = ssub.s32 %s10, 2
      %s26 = sadd.s32 1, %s19
      %p27 = scmp.ge.s32.totalorder %s26, 16
      %s28 = scalar_select %p27, 0, %s26
      %s29 = sadd.s32 1, %s18
      %s30 = scalar_select %p27, %s29, %s18
      %p31 = scmp.ge.s32.totalorder %s30, 1
      %s32 = scalar_select %p31, 0, %s30
      %s33 = sadd.s32 1, %s17
      %s34 = scalar_select %p31, %s33, %s17
      %p35 = scmp.ge.s32.totalorder %s34, 1
      %s36 = scalar_select %p35, 0, %s34
      %s37 = ssub.s32 %s17, %s36
      %s38 = ssub.s32 %s19, %s28
      %s39 = sor.u32 %s37, %s38
      %p40 = scmp.eq.s32.totalorder %s39, 0
      %s42 = sadd.s32 %s41, 1
      %s43 = scalar_select %p40, %s41, %s42
      %p46 = pneg %p40
      %p47 = scmp.eq.s32.totalorder %s10, 15
      %p48 = por %p46, %p47
      %p49 = scmp.ne.s32.totalorder %s41, %s44
      %p50 = scmp.eq.s32.totalorder %s10, 0
      %p51 = por %p49, %p50
      %p52 = scmp.ne.s32.totalorder %s41, %s44
      %p53 = scmp.eq.s32.totalorder %s15, 15
      %p54 = por %p52, %p53
      %p55 = scmp.ne.s32.totalorder %s44, %s45
      %p56 = scmp.eq.s32.totalorder %s15, 0
      %p57 = por %p55, %p56
      %p58 = scmp.ne.s32.totalorder %s44, %s45
      %p59 = scmp.eq.s32.totalorder %s16, 15
      %p60 = por %p58, %p59
      %p62 = scmp.ne.s32.totalorder %s45, %s61
      %p63 = scmp.eq.s32.totalorder %s16, 0
      %p64 = por %p62, %p63
      %s65 = ssub.s32 %s19, %s28
      %s66 = ssub.s32 %s18, %s32
      %s67 = sor.u32 %s65, %s66
      %p68 = scmp.eq.s32.totalorder %s67, 0
      %s70 = sadd.s32 %s69, 1
      %s71 = scalar_select %p68, %s69, %s70
      %p74 = pneg %p68
      %p75 = scmp.eq.s32.totalorder %s10, 15
      %p76 = por %p74, %p75
      %p77 = scmp.ne.s32.totalorder %s69, %s72
      %p78 = scmp.eq.s32.totalorder %s10, 0
      %p79 = por %p77, %p78
      %p80 = scmp.ne.s32.totalorder %s69, %s72
      %p81 = scmp.eq.s32.totalorder %s15, 15
      %p82 = por %p80, %p81
      %p83 = scmp.ne.s32.totalorder %s72, %s73
      %p84 = scmp.eq.s32.totalorder %s15, 0
      %p85 = por %p83, %p84
      %p86 = scmp.ne.s32.totalorder %s72, %s73
      %p87 = scmp.eq.s32.totalorder %s16, 15
      %p88 = por %p86, %p87
      %p90 = scmp.ne.s32.totalorder %s73, %s89
      %p91 = scmp.eq.s32.totalorder %s16, 0
      %p92 = por %p90, %p91
      %s93 = ssub.s32 %s17, %s36
      %s94 = ssub.s32 %s18, %s32
      %s95 = sor.u32 %s93, %s94
      %p96 = scmp.eq.s32.totalorder %s95, 0
      %s98 = sadd.s32 %s97, 1
      %s99 = scalar_select %p96, %s97, %s98
      %p102 = pneg %p96
      %p103 = scmp.eq.s32.totalorder %s10, 15
      %p104 = por %p102, %p103
      %p105 = scmp.ne.s32.totalorder %s97, %s100
      %p106 = scmp.eq.s32.totalorder %s10, 0
      %p107 = por %p105, %p106
      %p108 = scmp.ne.s32.totalorder %s97, %s100
      %p109 = scmp.eq.s32.totalorder %s15, 15
      %p110 = por %p108, %p109
      %p111 = scmp.ne.s32.totalorder %s100, %s101
      %p112 = scmp.eq.s32.totalorder %s15, 0
      %p113 = por %p111, %p112
      %p114 = scmp.ne.s32.totalorder %s100, %s101
      %p115 = scmp.eq.s32.totalorder %s16, 15
      %p116 = por %p114, %p115
      %p118 = scmp.ne.s32.totalorder %s101, %s117
      %p119 = scmp.eq.s32.totalorder %s16, 0
      %p120 = por %p118, %p119
      %s121 = ssub.s32 %s17, %s36
      %s122 = ssub.s32 %s18, %s32
      %s123 = sor.u32 %s121, %s122
      %p124 = scmp.eq.s32.totalorder %s123, 0
      %s126 = sadd.s32 %s125, 1
      %s127 = scalar_select %p124, %s125, %s126
      %p130 = pneg %p124
      %p131 = scmp.eq.s32.totalorder %s10, 15
      %p132 = por %p130, %p131
      %p133 = scmp.ne.s32.totalorder %s125, %s128
      %p134 = scmp.eq.s32.totalorder %s10, 0
      %p135 = por %p133, %p134
      %p136 = scmp.ne.s32.totalorder %s125, %s128
      %p137 = scmp.eq.s32.totalorder %s15, 15
      %p138 = por %p136, %p137
      %p139 = scmp.ne.s32.totalorder %s128, %s129
      %p140 = scmp.eq.s32.totalorder %s15, 0
      %p141 = por %p139, %p140
      %p142 = scmp.ne.s32.totalorder %s128, %s129
      %p143 = scmp.eq.s32.totalorder %s16, 15
      %p144 = por %p142, %p143
      %p146 = scmp.ne.s32.totalorder %s129, %s145
      %p147 = scmp.eq.s32.totalorder %s16, 0
      %p148 = por %p146, %p147
      %p149 = scmp.le.s32.totalorder 1, %s10
      %p150 = scmp.lt.s32.totalorder %s10, 17
      %p151 = pnand %p149, %p150
      %p152 = pneg %p151
      // Predicated region
      $region9: #{discriminator_forward.9} parent=5 // pred_check
        _
      $region10: #{discriminator_forward.9} parent=5 // pred_check_branch
        %154 = sbr.rel (%p151) target = $region12
      $region11: #{discriminator_forward.9} parent=5 // pred_region
        %s155 = ssub.s32 %s10, 1
      $region12: #{discriminator_forward.9} parent=5 // pred_fallthru
        _
      %p156 = scmp.lt.s32.totalorder %s10, 16
      // Predicated region
      $region13: #{discriminator_forward.9} parent=5 // pred_check
        %p157 = pneg %p156
      $region14: #{discriminator_forward.9} parent=5 // pred_check_branch
        %159 = sbr.rel (%p157) target = $region16
      $region15: #{discriminator_forward.9} parent=5 // pred_region
        // Predicated region
        $region17: #{discriminator_forward.9} parent=15 // pred_check
          %p160 = pneg %p51
        $region18: #{discriminator_forward.9} parent=15 // pred_check_branch
          %162 = sbr.rel (%p160) target = $region20
        $region19: #{discriminator_forward.9} parent=15 // pred_region
          %s163 = sand.u32 %s41, 1
          %s164 = sand.u32 %s41, 1
          %s165 = smul.addr %s164, 32
          %s166 = scalar_lea.vmem [#allocation3], %s165
          %s167 = smul.u32 2, %s17
          %s168 = smul.u32 4, %s19
          %s169 = smul.addr %s167, 64
          %s170 = sadd.s32 %s168, %s169
          %s171 = smul.addr %s170, 4
          %s172 = scalar_lea.vmem %s0, %s171
          // Predicated region
          $region21: #{discriminator_forward.9} parent=19 // pred_check
            _
          $region22: #{discriminator_forward.9} parent=19 // pred_check_branch
            %174 = sbr.rel (0) target = $region24
          $region23: #{discriminator_forward.9} parent=19 // pred_region
            // Predicated region
            $region25: #{discriminator_forward.9} parent=23 // pred_check
              _
            $region26: #{discriminator_forward.9} parent=23 // pred_check_branch
              %176 = sbr.rel (0) target = $region28
            $region27: #{discriminator_forward.9} parent=23 // pred_region
              loop: start=0, step=1, limit=1
              $region29: #{discriminator_forward.9} parent=27 // loop_pre_header
                _
              $region30: #{discriminator_forward.9} parent=27 // loop_header
                %s178 = sphi 0, %s182
                %p179 = scmp.ge.s32.totalorder %s178, 1
                %s183 = sphi %s172, %s172
                %s184 = sphi %s166, %s166
              $region31: #{discriminator_forward.9} parent=27 // loop_header_branch
                %181 = sbr.rel (%p179) target = $region35
              $region32: #{discriminator_forward.9} parent=27 // loop_body
                %v185 = vld [vmem:[%s183] sm:$0xff]
                %186 = vst [vmem:[%s184] sm:$0xff] %v185
                %v187 = vld [vmem:[%s183 + $0x8] sm:$0xff]
                %188 = vst [vmem:[%s184 + $0x8] sm:$0xff] %v187
                %v189 = vld [vmem:[%s183 + $0x100] sm:$0xff]
                %190 = vst [vmem:[%s184 + $0x10] sm:$0xff] %v189
                %v191 = vld [vmem:[%s183 + $0x108] sm:$0xff]
                %192 = vst [vmem:[%s184 + $0x18] sm:$0xff] %v191
              $region33: #{discriminator_forward.9} parent=27 // loop_footer
                %s182 = sadd.s32 1, %s178
              $region34: #{discriminator_forward.9} parent=27 // loop_footer_branch
                %177 = sbr.rel target = $region30
              $region35: #{discriminator_forward.9} parent=27 // loop_exit
                _
            $region28: #{discriminator_forward.9} parent=23 // pred_fallthru
              _
            // Predicated region
            $region36: #{discriminator_forward.9} parent=23 // pred_check
              _
            $region37: #{discriminator_forward.9} parent=23 // pred_check_branch
              %194 = sbr.rel target = $region39
            $region38: #{discriminator_forward.9} parent=23 // pred_region
              _
            $region39: #{discriminator_forward.9} parent=23 // pred_fallthru
              _
          $region24: #{discriminator_forward.9} parent=19 // pred_fallthru
            _
          %195 = vnop
        $region20: #{discriminator_forward.9} parent=15 // pred_fallthru
          _
        // Predicated region
        $region40: #{discriminator_forward.9} parent=15 // pred_check
          %p196 = pneg %p79
        $region41: #{discriminator_forward.9} parent=15 // pred_check_branch
          %198 = sbr.rel (%p196) target = $region43
        $region42: #{discriminator_forward.9} parent=15 // pred_region
          %s199 = smul.u32 64, %s19
          %p200 = scmp.lt.s32.totalorder %s199, 1023
          %s201 = scalar_select %p200, %s199, 1023
          %p202 = scmp.lt.s32.totalorder %s18, 0
          %s203 = scalar_select %p202, %s18, 0
          %s204 = sadd.s32 %s203, %s201
          %s205 = smul.addr %s204, 4
          %s206 = scalar_lea.vmem %s1, %s205
          %s207 = smul.u32 64, %s19
        $region43: #{discriminator_forward.9} parent=15 // pred_fallthru
          _
      $region16: #{discriminator_forward.9} parent=5 // pred_fallthru
        _
      %p208 = scmp.le.s32.totalorder 1, %s10
      %p209 = scmp.lt.s32.totalorder %s10, 17
      %p210 = pnand %p208, %p209
      %p211 = pneg %p210
      // Predicated region
      $region44: #{discriminator_forward.9} parent=5 // pred_check
        _
      $region45: #{discriminator_forward.9} parent=5 // pred_check_branch
        %213 = sbr.rel (%p210) target = $region47
      $region46: #{discriminator_forward.9} parent=5 // pred_region
        %s214 = ssub.s32 %s10, 1
        %s215 = sand.u32 %s44, 1
        %s216 = sand.u32 %s44, 1
        %s217 = smul.addr %s216, 32
        %s218 = scalar_lea.vmem [#allocation3], %s217
        // Predicated region
        $region48: #{discriminator_forward.9} parent=46 // pred_check
          %p219 = pneg %p57
        $region49: #{discriminator_forward.9} parent=46 // pred_check_branch
          %221 = sbr.rel (%p219) target = $region51
        $region50: #{discriminator_forward.9} parent=46 // pred_region
          _
        $region51: #{discriminator_forward.9} parent=46 // pred_fallthru
          _
        %s222 = sand.u32 %s44, 1
        %s223 = sand.u32 %s44, 1
        %s224 = smul.addr %s223, 32
        %s225 = scalar_lea.vmem [#allocation3], %s224
        %p226 = pneg %p57
        %p227 = pneg %p54
        %s228 = smul.u32 64, %s22
        %p229 = scmp.lt.s32.totalorder %s228, 1023
        %s230 = scalar_select %p229, %s228, 1023
        %p231 = scmp.lt.s32.totalorder %s21, 0
        %s232 = scalar_select %p231, %s21, 0
        %s233 = sadd.s32 %s232, %s230
        %s234 = smul.addr %s233, 4
        %s235 = scalar_lea.vmem %s1, %s234
        %p236 = pneg %p85
        %p237 = pneg %p82
        %p238 = pneg %p113
        %p239 = pneg %p110
        %s240 = smul.u32 2, %s20
        %p241 = scmp.lt.s32.totalorder %s240, 1
        %s242 = scalar_select %p241, %s240, 1
        %p243 = scmp.lt.s32.totalorder %s21, 0
        %s244 = scalar_select %p243, %s21, 0
        %s245 = sadd.s32 %s244, %s242
        %s246 = smul.addr %s245, 8
        %s247 = scalar_lea.vmem %s2, %s246
        %p248 = pneg %p141
        %p249 = pneg %p138
        %s250 = smul.u32 2, %s20
        %p251 = scmp.lt.s32.totalorder %s250, 1
        %s252 = scalar_select %p251, %s250, 1
        %p253 = scmp.lt.s32.totalorder %s21, 0
        %s254 = scalar_select %p253, %s21, 0
        %s255 = sadd.s32 %s254, %s252
        %s256 = smul.addr %s255, 8
        %s257 = scalar_lea.vmem %s3, %s256
        %s258 = smul.u32 2, %s20
        %s259 = smul.u32 4, %s22
        %s260 = smul.u32 64, %s22
        %p261 = scmp.lt.s32.totalorder %s260, 1023
        %s262 = scalar_select %p261, %s260, 1023
        %p263 = scmp.lt.s32.totalorder %s21, 0
        %s264 = scalar_select %p263, %s21, 0
        %s265 = sadd.s32 %s264, %s262
        %s266 = smul.addr %s265, 4
        %s267 = scalar_lea.vmem %s1, %s266
        %s268 = smul.u32 64, %s22
        %s269 = smul.u32 2, %s20
        %p270 = scmp.lt.s32.totalorder %s269, 1
        %s271 = scalar_select %p270, %s269, 1
        %p272 = scmp.lt.s32.totalorder %s21, 0
        %s273 = scalar_select %p272, %s21, 0
        %s274 = sadd.s32 %s273, %s271
        %s275 = smul.addr %s274, 8
        %s276 = scalar_lea.vmem %s2, %s275
        %s277 = smul.u32 2, %s20
        %s278 = smul.u32 2, %s20
        %p279 = scmp.lt.s32.totalorder %s278, 1
        %s280 = scalar_select %p279, %s278, 1
        %p281 = scmp.lt.s32.totalorder %s21, 0
        %s282 = scalar_select %p281, %s21, 0
        %s283 = sadd.s32 %s282, %s280
        %s284 = smul.addr %s283, 8
        %s285 = scalar_lea.vmem %s3, %s284
        %s286 = smul.u32 2, %s20
        %p288 = scmp.eq.s32.totalorder %s22, 0
        // Predicated region
        $region52: #{discriminator_forward.9} parent=46 // pred_check
          %p289 = pneg %p288
        $region53: #{discriminator_forward.9} parent=46 // pred_check_branch
          %291 = sbr.rel (%p289) target = $region55
        $region54: #{discriminator_forward.9} parent=46 // pred_region
          %292 = vst [vmem:[#allocation2] sm:$0xff] 0.0
          %293 = vst [vmem:[#allocation2 + $0x8] sm:$0xff] 0.0
        $region55: #{discriminator_forward.9} parent=46 // pred_fallthru
          _
        %v294 = vld [vmem:[#allocation2] sm:$0xff]
        %v295 = vld [vmem:[#allocation2 + $0x8] sm:$0xff]
        %v296 = vld [vmem:[%s218] sm:$0xff]
        %v297 = vld [vmem:[%s218 + $0x8] sm:$0xff]
        %v298 = vld [vmem:[%s218 + $0x10] sm:$0xff]
        %v299 = vld [vmem:[%s218 + $0x18] sm:$0xff]
        %v300 = vld [vmem:[%s267] sm:$0xf]
        %v301 = vld [vmem:[%s267 + $0x4] sm:$0xf]
        %v302 = vld [vmem:[%s267 + $0x8] sm:$0xf]
        %v303 = vld [vmem:[%s267 + $0xc] sm:$0xf]
        %v304 = vld [vmem:[%s267 + $0x10] sm:$0xf]
        %v305 = vld [vmem:[%s267 + $0x14] sm:$0xf]
        %v306 = vld [vmem:[%s267 + $0x18] sm:$0xf]
        %v307 = vld [vmem:[%s267 + $0x1c] sm:$0xf]
        %v308 = vld [vmem:[%s267 + $0x20] sm:$0xf]
        %v309 = vld [vmem:[%s267 + $0x24] sm:$0xf]
        %v310 = vld [vmem:[%s267 + $0x28] sm:$0xf]
        %v311 = vld [vmem:[%s267 + $0x2c] sm:$0xf]
        %v312 = vld [vmem:[%s267 + $0x30] sm:$0xf]
        %v313 = vld [vmem:[%s267 + $0x34] sm:$0xf]
        %v314 = vld [vmem:[%s267 + $0x38] sm:$0xf]
        %v315 = vld [vmem:[%s267 + $0x3c] sm:$0xf]
        %v316 = vld [vmem:[%s267 + $0x40] sm:$0xf]
        %v317 = vld [vmem:[%s267 + $0x44] sm:$0xf]
        %v318 = vld [vmem:[%s267 + $0x48] sm:$0xf]
        %v319 = vld [vmem:[%s267 + $0x4c] sm:$0xf]
        %v320 = vld [vmem:[%s267 + $0x50] sm:$0xf]
        %v321 = vld [vmem:[%s267 + $0x54] sm:$0xf]
        %v322 = vld [vmem:[%s267 + $0x58] sm:$0xf]
        %v323 = vld [vmem:[%s267 + $0x5c] sm:$0xf]
        %v324 = vld [vmem:[%s267 + $0x60] sm:$0xf]
        %v325 = vld [vmem:[%s267 + $0x64] sm:$0xf]
        %v326 = vld [vmem:[%s267 + $0x68] sm:$0xf]
        %v327 = vld [vmem:[%s267 + $0x6c] sm:$0xf]
        %v328 = vld [vmem:[%s267 + $0x70] sm:$0xf]
        %v329 = vld [vmem:[%s267 + $0x74] sm:$0xf]
        %v330 = vld [vmem:[%s267 + $0x78] sm:$0xf]
        %v331 = vld [vmem:[%s267 + $0x7c] sm:$0xf]
        %v332 = vld [vmem:[%s267 + $0x80] sm:$0xf]
        %v333 = vld [vmem:[%s267 + $0x84] sm:$0xf]
        %v334 = vld [vmem:[%s267 + $0x88] sm:$0xf]
        %v335 = vld [vmem:[%s267 + $0x8c] sm:$0xf]
        %v336 = vld [vmem:[%s267 + $0x90] sm:$0xf]
        %v337 = vld [vmem:[%s267 + $0x94] sm:$0xf]
        %v338 = vld [vmem:[%s267 + $0x98] sm:$0xf]
        %v339 = vld [vmem:[%s267 + $0x9c] sm:$0xf]
        %v340 = vld [vmem:[%s267 + $0xa0] sm:$0xf]
        %v341 = vld [vmem:[%s267 + $0xa4] sm:$0xf]
        %v342 = vld [vmem:[%s267 + $0xa8] sm:$0xf]
        %v343 = vld [vmem:[%s267 + $0xac] sm:$0xf]
        %v344 = vld [vmem:[%s267 + $0xb0] sm:$0xf]
        %v345 = vld [vmem:[%s267 + $0xb4] sm:$0xf]
        %v346 = vld [vmem:[%s267 + $0xb8] sm:$0xf]
        %v347 = vld [vmem:[%s267 + $0xbc] sm:$0xf]
        %v348 = vld [vmem:[%s267 + $0xc0] sm:$0xf]
        %v349 = vld [vmem:[%s267 + $0xc4] sm:$0xf]
        %v350 = vld [vmem:[%s267 + $0xc8] sm:$0xf]
        %v351 = vld [vmem:[%s267 + $0xcc] sm:$0xf]
        %v352 = vld [vmem:[%s267 + $0xd0] sm:$0xf]
        %v353 = vld [vmem:[%s267 + $0xd4] sm:$0xf]
        %v354 = vld [vmem:[%s267 + $0xd8] sm:$0xf]
        %v355 = vld [vmem:[%s267 + $0xdc] sm:$0xf]
        %v356 = vld [vmem:[%s267 + $0xe0] sm:$0xf]
        %v357 = vld [vmem:[%s267 + $0xe4] sm:$0xf]
        %v358 = vld [vmem:[%s267 + $0xe8] sm:$0xf]
        %v359 = vld [vmem:[%s267 + $0xec] sm:$0xf]
        %v360 = vld [vmem:[%s267 + $0xf0] sm:$0xf]
        %v361 = vld [vmem:[%s267 + $0xf4] sm:$0xf]
        %v362 = vld [vmem:[%s267 + $0xf8] sm:$0xf]
        %v363 = vld [vmem:[%s267 + $0xfc] sm:$0xf]
        %v368 = vunpack.c.l.b16 %v296
        %v369 = vunpack.c.h.b16 %v296
        %v370 = vunpack.c.l.b16 %v297
        %v371 = vunpack.c.h.b16 %v297
        %v372 = vunpack.c.l.b16 %v298
        %v373 = vunpack.c.h.b16 %v298
        %v374 = vunpack.c.l.b16 %v299
        %v375 = vunpack.c.h.b16 %v299
        %v376 = vpack.c.b16 %v372, %v368
        %v377 = vpack.c.b16 %v373, %v369
        %v378 = vpack.c.b16 %v374, %v370
        %v379 = vpack.c.b16 %v375, %v371
        %v448 = vunpack.c.l.b16 %v300
        %v449 = vunpack.c.l.b16 %v301
        %v450 = vunpack.c.l.b16 %v302
        %v451 = vunpack.c.l.b16 %v303
        %v452 = vunpack.c.l.b16 %v304
        %v453 = vunpack.c.l.b16 %v305
        %v454 = vunpack.c.l.b16 %v306
        %v455 = vunpack.c.l.b16 %v307
        %v456 = vunpack.c.l.b16 %v308
        %v457 = vunpack.c.l.b16 %v309
        %v458 = vunpack.c.l.b16 %v310
        %v459 = vunpack.c.l.b16 %v311
        %v460 = vunpack.c.l.b16 %v312
        %v461 = vunpack.c.l.b16 %v313
        %v462 = vunpack.c.l.b16 %v314
        %v463 = vunpack.c.l.b16 %v315
        %v464 = vunpack.c.l.b16 %v316
        %v465 = vunpack.c.l.b16 %v317
        %v466 = vunpack.c.l.b16 %v318
        %v467 = vunpack.c.l.b16 %v319
        %v468 = vunpack.c.l.b16 %v320
        %v469 = vunpack.c.l.b16 %v321
        %v470 = vunpack.c.l.b16 %v322
        %v471 = vunpack.c.l.b16 %v323
        %v472 = vunpack.c.l.b16 %v324
        %v473 = vunpack.c.l.b16 %v325
        %v474 = vunpack.c.l.b16 %v326
        %v475 = vunpack.c.l.b16 %v327
        %v476 = vunpack.c.l.b16 %v328
        %v477 = vunpack.c.l.b16 %v329
        %v478 = vunpack.c.l.b16 %v330
        %v479 = vunpack.c.l.b16 %v331
        %v480 = vunpack.c.l.b16 %v332
        %v481 = vunpack.c.l.b16 %v333
        %v482 = vunpack.c.l.b16 %v334
        %v483 = vunpack.c.l.b16 %v335
        %v484 = vunpack.c.l.b16 %v336
        %v485 = vunpack.c.l.b16 %v337
        %v486 = vunpack.c.l.b16 %v338
        %v487 = vunpack.c.l.b16 %v339
        %v488 = vunpack.c.l.b16 %v340
        %v489 = vunpack.c.l.b16 %v341
        %v490 = vunpack.c.l.b16 %v342
        %v491 = vunpack.c.l.b16 %v343
        %v492 = vunpack.c.l.b16 %v344
        %v493 = vunpack.c.l.b16 %v345
        %v494 = vunpack.c.l.b16 %v346
        %v495 = vunpack.c.l.b16 %v347
        %v496 = vunpack.c.l.b16 %v348
        %v497 = vunpack.c.l.b16 %v349
        %v498 = vunpack.c.l.b16 %v350
        %v499 = vunpack.c.l.b16 %v351
        %v500 = vunpack.c.l.b16 %v352
        %v501 = vunpack.c.l.b16 %v353
        %v502 = vunpack.c.l.b16 %v354
        %v503 = vunpack.c.l.b16 %v355
        %v504 = vunpack.c.l.b16 %v356
        %v505 = vunpack.c.l.b16 %v357
        %v506 = vunpack.c.l.b16 %v358
        %v507 = vunpack.c.l.b16 %v359
        %v508 = vunpack.c.l.b16 %v360
        %v509 = vunpack.c.l.b16 %v361
        %v510 = vunpack.c.l.b16 %v362
        %v511 = vunpack.c.l.b16 %v363
        %v512 = vpack.c.b16 %v449, %v448
        %v513 = vpack.c.b16 %v451, %v450
        %v514 = vpack.c.b16 %v453, %v452
        %v515 = vpack.c.b16 %v455, %v454
        %v516 = vpack.c.b16 %v457, %v456
        %v517 = vpack.c.b16 %v459, %v458
        %v518 = vpack.c.b16 %v461, %v460
        %v519 = vpack.c.b16 %v463, %v462
        %v520 = vpack.c.b16 %v465, %v464
        %v521 = vpack.c.b16 %v467, %v466
        %v522 = vpack.c.b16 %v469, %v468
        %v523 = vpack.c.b16 %v471, %v470
        %v524 = vpack.c.b16 %v473, %v472
        %v525 = vpack.c.b16 %v475, %v474
        %v526 = vpack.c.b16 %v477, %v476
        %v527 = vpack.c.b16 %v479, %v478
        %v528 = vpack.c.b16 %v481, %v480
        %v529 = vpack.c.b16 %v483, %v482
        %v530 = vpack.c.b16 %v485, %v484
        %v531 = vpack.c.b16 %v487, %v486
        %v532 = vpack.c.b16 %v489, %v488
        %v533 = vpack.c.b16 %v491, %v490
        %v534 = vpack.c.b16 %v493, %v492
        %v535 = vpack.c.b16 %v495, %v494
        %v536 = vpack.c.b16 %v497, %v496
        %v537 = vpack.c.b16 %v499, %v498
        %v538 = vpack.c.b16 %v501, %v500
        %v539 = vpack.c.b16 %v503, %v502
        %v540 = vpack.c.b16 %v505, %v504
        %v541 = vpack.c.b16 %v507, %v506
        %v542 = vpack.c.b16 %v509, %v508
        %v543 = vpack.c.b16 %v511, %v510
        %576 = vmatprep.subr.bf16.mxu0 0
        %577 = vmatpush1.bf16.msra.mxu0 %v512
        %578 = vmatprep.subr.bf16.mxu0 0
        %579 = vmatpush1.bf16.msra.mxu0 %v513
        %580 = vmatprep.subr.bf16.mxu0 0
        %581 = vmatpush1.bf16.msra.mxu0 %v514
        %582 = vmatprep.subr.bf16.mxu0 0
        %583 = vmatpush1.bf16.msra.mxu0 %v515
        %584 = vmatprep.subr.bf16.mxu0 0
        %585 = vmatpush1.bf16.msra.mxu0 %v516
        %586 = vmatprep.subr.bf16.mxu0 0
        %587 = vmatpush1.bf16.msra.mxu0 %v517
        %588 = vmatprep.subr.bf16.mxu0 0
        %589 = vmatpush1.bf16.msra.mxu0 %v518
        %590 = vmatprep.subr.bf16.mxu0 0
        %591 = vmatpush1.bf16.msra.mxu0 %v519
        %592 = vmatprep.subr.bf16.mxu0 0
        %593 = vmatpush1.bf16.msra.mxu0 %v520
        %594 = vmatprep.subr.bf16.mxu0 0
        %595 = vmatpush1.bf16.msra.mxu0 %v521
        %596 = vmatprep.subr.bf16.mxu0 0
        %597 = vmatpush1.bf16.msra.mxu0 %v522
        %598 = vmatprep.subr.bf16.mxu0 0
        %599 = vmatpush1.bf16.msra.mxu0 %v523
        %600 = vmatprep.subr.bf16.mxu0 0
        %601 = vmatpush1.bf16.msra.mxu0 %v524
        %602 = vmatprep.subr.bf16.mxu0 0
        %603 = vmatpush1.bf16.msra.mxu0 %v525
        %604 = vmatprep.subr.bf16.mxu0 0
        %605 = vmatpush1.bf16.msra.mxu0 %v526
        %606 = vmatprep.subr.bf16.mxu0 0
        %607 = vmatpush1.bf16.msra.mxu0 %v527
        %608 = vmatprep.mubr.bf16.mxu0 %v377
        %609 = vmatmul.mubr.bf16.gmra.mrb[0].mxu0 %v376
        %v610 = vpop.f32.mrb[0].mxu0
        %v611 = vadd.f32 0.0, %v610
        %v612 = vpop.f32.mrb[0].mxu0
        %v613 = vpop.f32.mrb[0].mxu0
        %v614 = vadd.f32 0.0, %v613
        %v615 = vpop.f32.mrb[0].mxu0
        %616 = vdwg.mxu0
        %617 = vmatprep.subr.bf16.mxu0 0
        %618 = vmatpush1.bf16.msra.mxu0 %v528
        %619 = vmatprep.subr.bf16.mxu0 0
        %620 = vmatpush1.bf16.msra.mxu0 %v529
        %621 = vmatprep.subr.bf16.mxu0 0
        %622 = vmatpush1.bf16.msra.mxu0 %v530
        %623 = vmatprep.subr.bf16.mxu0 0
        %624 = vmatpush1.bf16.msra.mxu0 %v531
        %625 = vmatprep.subr.bf16.mxu0 0
        %626 = vmatpush1.bf16.msra.mxu0 %v532
        %627 = vmatprep.subr.bf16.mxu0 0
        %628 = vmatpush1.bf16.msra.mxu0 %v533
        %629 = vmatprep.subr.bf16.mxu0 0
        %630 = vmatpush1.bf16.msra.mxu0 %v534
        %631 = vmatprep.subr.bf16.mxu0 0
        %632 = vmatpush1.bf16.msra.mxu0 %v535
        %633 = vmatprep.subr.bf16.mxu0 0
        %634 = vmatpush1.bf16.msra.mxu0 %v536
        %635 = vmatprep.subr.bf16.mxu0 0
        %636 = vmatpush1.bf16.msra.mxu0 %v537
        %637 = vmatprep.subr.bf16.mxu0 0
        %638 = vmatpush1.bf16.msra.mxu0 %v538
        %639 = vmatprep.subr.bf16.mxu0 0
        %640 = vmatpush1.bf16.msra.mxu0 %v539
        %641 = vmatprep.subr.bf16.mxu0 0
        %642 = vmatpush1.bf16.msra.mxu0 %v540
        %643 = vmatprep.subr.bf16.mxu0 0
        %644 = vmatpush1.bf16.msra.mxu0 %v541
        %645 = vmatprep.subr.bf16.mxu0 0
        %646 = vmatpush1.bf16.msra.mxu0 %v542
        %647 = vmatprep.subr.bf16.mxu0 0
        %648 = vmatpush1.bf16.msra.mxu0 %v543
        %649 = vmatprep.mubr.bf16.mxu0 %v379
        %650 = vmatmul.mubr.bf16.gmra.mrb[0].mxu0 %v378
        %v651 = vpop.f32.mrb[0].mxu0
        %v652 = vadd.f32 %v611, %v651
        %v653 = vpop.f32.mrb[0].mxu0
        %v654 = vpop.f32.mrb[0].mxu0
        %v655 = vadd.f32 %v614, %v654
        %v656 = vpop.f32.mrb[0].mxu0
        %657 = vdwg.mxu0
        %v658 = vadd.f32 %v294, %v652
        %v659 = vadd.f32 %v295, %v655
        %660 = vst [vmem:[#allocation2] sm:$0xff] %v658
        %661 = vst [vmem:[#allocation2 + $0x8] sm:$0xff] %v659
        %p662 = scmp.eq.s32.totalorder %s22, 15
        // Predicated region
        $region56: #{discriminator_forward.9} parent=46 // pred_check
          %p663 = pneg %p662
        $region57: #{discriminator_forward.9} parent=46 // pred_check_branch
          %665 = sbr.rel (%p663) target = $region59
        $region58: #{discriminator_forward.9} parent=46 // pred_region
          %v666 = vld [vmem:[#allocation2] sm:$0xff]
          %v667 = vld [vmem:[#allocation2 + $0x8] sm:$0xff]
          %668 = vst [vmem:[%s276] sm:$0xff] %v666
          %669 = vst [vmem:[%s276 + $0x8] sm:$0xff] %v667
          %v670 = vsub.f32 0.0, %v666
          %v671 = vsub.f32 0.0, %v667
          %v672 = vmul.f32 %v670, 1.442695
          %v673 = vpow.pop %v672
          %v674 = vmul.f32 %v671, 1.442695
          %v675 = vpow.pop %v674
          %v676 = vadd.f32 %v673, 1.0
          %v677 = vadd.f32 %v675, 1.0
          %v678 = vrcp.pop %v676
          %v679 = vmul.f32 1.0, %v678
          %v680 = vrcp.pop %v677
          %v681 = vmul.f32 1.0, %v680
          %682 = vst [vmem:[%s285] sm:$0xff] %v679
          %683 = vst [vmem:[%s285 + $0x8] sm:$0xff] %v681
        $region59: #{discriminator_forward.9} parent=46 // pred_fallthru
          _
        %s684 = smul.u32 2, %s20
        %p685 = scmp.lt.s32.totalorder %s684, 1
        %s686 = scalar_select %p685, %s684, 1
        %p687 = scmp.lt.s32.totalorder %s21, 0
        %s688 = scalar_select %p687, %s21, 0
        %s689 = sadd.s32 %s688, %s686
        %s690 = smul.addr %s689, 8
        %s691 = scalar_lea.vmem %s2, %s690
        %s692 = smul.u32 2, %s20
        %p693 = scmp.lt.s32.totalorder %s692, 1
        %s694 = scalar_select %p693, %s692, 1
        %p695 = scmp.lt.s32.totalorder %s21, 0
        %s696 = scalar_select %p695, %s21, 0
        %s697 = sadd.s32 %s696, %s694
        %s698 = smul.addr %s697, 8
        %s699 = scalar_lea.vmem %s3, %s698
        // Predicated region
        $region60: #{discriminator_forward.9} parent=46 // pred_check
          %p700 = pneg %p110
        $region61: #{discriminator_forward.9} parent=46 // pred_check_branch
          %702 = sbr.rel (%p700) target = $region63
        $region62: #{discriminator_forward.9} parent=46 // pred_region
          %s703 = smul.u32 2, %s20
        $region63: #{discriminator_forward.9} parent=46 // pred_fallthru
          _
        // Predicated region
        $region64: #{discriminator_forward.9} parent=46 // pred_check
          %p704 = pneg %p138
        $region65: #{discriminator_forward.9} parent=46 // pred_check_branch
          %706 = sbr.rel (%p704) target = $region67
        $region66: #{discriminator_forward.9} parent=46 // pred_region
          %s707 = smul.u32 2, %s20
        $region67: #{discriminator_forward.9} parent=46 // pred_fallthru
          _
        // Predicated region
        $region68: #{discriminator_forward.9} parent=46 // pred_check
          %p708 = pneg %p110
        $region69: #{discriminator_forward.9} parent=46 // pred_check_branch
          %710 = sbr.rel (%p708) target = $region71
        $region70: #{discriminator_forward.9} parent=46 // pred_region
          %s711 = smul.u32 2, %s20
          %p712 = scmp.lt.s32.totalorder %s711, 1
          %s713 = scalar_select %p712, %s711, 1
          %p714 = scmp.lt.s32.totalorder %s21, 0
          %s715 = scalar_select %p714, %s21, 0
          %s716 = sadd.s32 %s715, %s713
          %s717 = smul.addr %s716, 8
          %s718 = scalar_lea.vmem %s2, %s717
        $region71: #{discriminator_forward.9} parent=46 // pred_fallthru
          _
        // Predicated region
        $region72: #{discriminator_forward.9} parent=46 // pred_check
          %p719 = pneg %p138
        $region73: #{discriminator_forward.9} parent=46 // pred_check_branch
          %721 = sbr.rel (%p719) target = $region75
        $region74: #{discriminator_forward.9} parent=46 // pred_region
          %s722 = smul.u32 2, %s20
          %p723 = scmp.lt.s32.totalorder %s722, 1
          %s724 = scalar_select %p723, %s722, 1
          %p725 = scmp.lt.s32.totalorder %s21, 0
          %s726 = scalar_select %p725, %s21, 0
          %s727 = sadd.s32 %s726, %s724
          %s728 = smul.addr %s727, 8
          %s729 = scalar_lea.vmem %s3, %s728
        $region75: #{discriminator_forward.9} parent=46 // pred_fallthru
          _
      $region47: #{discriminator_forward.9} parent=5 // pred_fallthru
        _
      %p730 = scmp.le.s32.totalorder 2, %s10
      // Predicated region
      $region76: #{discriminator_forward.9} parent=5 // pred_check
        %p731 = pneg %p730
      $region77: #{discriminator_forward.9} parent=5 // pred_check_branch
        %733 = sbr.rel (%p731) target = $region79
      $region78: #{discriminator_forward.9} parent=5 // pred_region
        %s734 = ssub.s32 %s10, 2
      $region79: #{discriminator_forward.9} parent=5 // pred_fallthru
        _
    $region6: #{discriminator_forward.9} parent=1 // loop_footer
      %s14 = sadd.s32 1, %s10
    $region7: #{discriminator_forward.9} parent=1 // loop_footer_branch
      %9 = sbr.rel target = $region3
    $region8: #{discriminator_forward.9} parent=1 // loop_exit
      _

</llo_original>
